<compile_context>
chip_gen: v7x
topology: tpu7x:2x2x1
jax: 0.10.0
libtpu: 0.0.40
codegen_flags: <defaults>
</compile_context>

<pallas_src>
import jax
import jax.numpy as jnp
from jax.experimental import pallas as pl
from jax.experimental.pallas import tpu as pltpu


def _round_up(x, m):
    return (x + m - 1) // m * m


_CPAD = 128          # lane-dense channel padding for conv outputs
_CONV3_OUT = 64      # real output channels of the third conv (module spec)


# ----------------------------------------------------------------------------
# Pallas kernel 1: out = ReLU(x @ w + b) for the conv GEMMs (M-tiled grid).
# x: bf16 (tm, K), w: bf16 (K, N), b: f32 (1, N), out: bf16 (tm, N).
# ----------------------------------------------------------------------------
def _matmul_bias_relu_kernel(x_ref, w_ref, b_ref, o_ref):
    acc = jnp.dot(x_ref[...], w_ref[...], preferred_element_type=jnp.float32)
    acc = jnp.maximum(acc + b_ref[...], 0.0)            # f32 epilogue (v5e-safe)
    o_ref[...] = acc.astype(o_ref.dtype)


def matmul_bias_relu(x, w, b_row, *, tm=256, out_dtype=jnp.bfloat16):
    """x: (M, K) bf16, w: (K, N) bf16 with N % 128 == 0, b_row: (1, N) f32.

    M is NOT padded: grid = cdiv(M, tm) and Pallas clips the boundary block
    (garbage rows stay row-independent; their writes are discarded)."""
    M, K = x.shape
    Kw, N = w.shape
    assert K == Kw and N % 128 == 0
    tm_eff = min(tm, M)
    tm_eff = max(8, (tm_eff // 8) * 8)      # sublane-aligned block rows
    grid_m = pl.cdiv(M, tm_eff)
    cost = pl.CostEstimate(
        flops=2 * M * K * N,
        transcendentals=0,
        bytes_accessed=M * K * 2 + K * N * 2 + N * 4 + M * N * 2)
    return pl.pallas_call(
        _matmul_bias_relu_kernel,
        out_shape=jax.ShapeDtypeStruct((M, N), out_dtype),
        grid=(grid_m,),
        in_specs=[pl.BlockSpec((tm_eff, K), lambda i: (i, 0)),
                  pl.BlockSpec((K, N), lambda i: (0, 0)),
                  pl.BlockSpec((1, N), lambda i: (0, 0))],
        out_specs=pl.BlockSpec((tm_eff, N), lambda i: (i, 0)),
        compiler_params=pltpu.CompilerParams(
            dimension_semantics=("parallel",),
            vmem_limit_bytes=32 << 20),
        cost_estimate=cost,
    )(x, w, b_row)


# ----------------------------------------------------------------------------
# Pallas kernel 2: fused FC head  q = ReLU(h @ w1 + b1) @ w2 + b2
# K-tiled over w1's rows with an f32 VMEM accumulator; w2 stays VMEM-resident.
# ----------------------------------------------------------------------------
def _fc_head_kernel(h_ref, w1_ref, b1_ref, w2_ref, b2_ref, o_ref, acc_ref):
    k = pl.program_id(0)

    @pl.when(k == 0)
    def _():
        acc_ref[...] = jnp.zeros_like(acc_ref)

    acc_ref[...] += jnp.dot(h_ref[...], w1_ref[...],
                            preferred_element_type=jnp.float32)

    @pl.when(k == pl.num_programs(0) - 1)
    def _():
        hid = jnp.maximum(acc_ref[...] + b1_ref[...], 0.0)           # f32
        out = jnp.dot(hid.astype(jnp.bfloat16), w2_ref[...],
                      preferred_element_type=jnp.float32) + b2_ref[...]
        o_ref[...] = out.astype(o_ref.dtype)


def fc_head(h, w1, b1_row, w2, b2_row):
    """h: (B, K1) bf16, w1: (K1, 512) bf16, w2: (512, Np) bf16, biases f32.

    The pad-to-8 of h is kept deliberately: it is <40 KB at small batch and
    gives a known-good sublane count for the M dim of the accumulator.
    # TODO(synk): add an M-parallel grid axis (K innermost) for large batches.
    """
    B, K1 = h.shape
    H1 = w1.shape[1]
    Np = w2.shape[1]
    m_pad = _round_up(B, 8)
    if m_pad != B:
        h = jnp.pad(h, ((0, m_pad - B), (0, 0)))
    tk = next((t for t in (768, 512, 384, 256, 128) if K1 % t == 0), K1)
    cost = pl.CostEstimate(
        flops=2 * m_pad * (K1 * H1 + H1 * Np),
        transcendentals=0,
        bytes_accessed=(m_pad * K1 * 2 + K1 * H1 * 2 + H1 * Np * 2
                        + (H1 + Np) * 4 + m_pad * Np * 4))
    out = pl.pallas_call(
        _fc_head_kernel,
        out_shape=jax.ShapeDtypeStruct((m_pad, Np), jnp.float32),
        grid=(K1 // tk,),
        in_specs=[pl.BlockSpec((m_pad, tk), lambda k: (0, k)),
                  pl.BlockSpec((tk, H1), lambda k: (k, 0)),
                  pl.BlockSpec((1, H1), lambda k: (0, 0)),
                  pl.BlockSpec((H1, Np), lambda k: (0, 0)),
                  pl.BlockSpec((1, Np), lambda k: (0, 0))],
        out_specs=pl.BlockSpec((m_pad, Np), lambda k: (0, 0)),
        scratch_shapes=[pltpu.VMEM((m_pad, H1), jnp.float32)],
        compiler_params=pltpu.CompilerParams(
            dimension_semantics=("arbitrary",),
            vmem_limit_bytes=32 << 20),
        cost_estimate=cost,
    )(h, w1, b1_row, w2, b2_row)
    return out[:B]


# ----------------------------------------------------------------------------
# im2col glue (NHWC, minor-axis concat -> already in the kernel's layout).
# Only the REAL `cin` channels of the (possibly lane-padded) input are used,
# so the 128-lane output padding never inflates the next layer's K.
# ----------------------------------------------------------------------------
def conv2d_relu_nhwc(x, w_mat, b_row, *, k, stride, cin, tm=256):
    """x: (B,H,W,C>=cin) bf16; w_mat: (k*k*cin, Np) bf16 in (kh,kw,c) row order;
    b_row: (1, Np) f32.  Returns ReLU(conv) as (B, OH, OW, Np) bf16."""
    B, H, W, _ = x.shape
    x = x[..., :cin]                                      # drop lane padding
    OH = (H - k) // stride + 1
    OW = (W - k) // stride + 1
    slabs = [x[:, i:i + stride * OH:stride, j:j + stride * OW:stride, :]
             for i in range(k) for j in range(k)]
    patches = jnp.concatenate(slabs, axis=-1)             # (B, OH, OW, k*k*cin)
    patches = patches.reshape(B * OH * OW, k * k * cin)
    out = matmul_bias_relu(patches, w_mat, b_row, tm=tm)  # (B*OH*OW, Np) bf16
    return out.reshape(B, OH, OW, w_mat.shape[1])
    # TODO(synk): move im2col inside the pallas_call (grid over (batch, out-row
    # tile), build patches in VMEM) to remove the remaining XLA slice/concat.


# ----------------------------------------------------------------------------
# Parameters: PyTorch-layout init + one-time repack for the Pallas path.
# ----------------------------------------------------------------------------
def _uniform(key, shape, fan_in):
    bound = 1.0 / jnp.sqrt(jnp.float32(fan_in))
    return jax.random.uniform(key, shape, jnp.float32, -bound, bound)


def _conv_out_size(s, k, st):
    return (s - k) // st + 1


def init_params(key, input_shape=(4, 80, 80), output_shape=2):
    C, H, W = input_shape
    ks = jax.random.split(key, 10)

    def conv_p(kw, kb, cout, cin, k):
        fan = cin * k * k
        return _uniform(kw, (cout, cin, k, k), fan), _uniform(kb, (cout,), fan)

    w1, b1 = conv_p(ks[0], ks[1], 32, C, 8)
    w2, b2 = conv_p(ks[2], ks[3], 64, 32, 4)
    w3, b3 = conv_p(ks[4], ks[5], 64, 64, 3)

    oh = _conv_out_size(_conv_out_size(_conv_out_size(H, 8, 4), 4, 2), 3, 1)
    ow = _conv_out_size(_conv_out_size(_conv_out_size(W, 8, 4), 4, 2), 3, 1)
    conv_out = 64 * oh * ow

    fw1 = _uniform(ks[6], (conv_out, 512), conv_out)
    fb1 = _uniform(ks[7], (512,), conv_out)
    fw2 = _uniform(ks[8], (512, output_shape), 512)
    fb2 = _uniform(ks[9], (output_shape,), 512)
    return dict(w1=w1, b1=b1, w2=w2, b2=b2, w3=w3, b3=b3,
                fw1=fw1, fb1=fb1, fw2=fw2, fb2=fb2)


def prepare_params(params, input_shape=(4, 80, 80), output_shape=2):
    """One-time repack: bf16 GEMM weights with REAL cin (no K inflation),
    conv1 rows permuted for the 4x4 space-to-depth input, cout padded to 128,
    and fw1 rows permuted from (c,h,w) to (h,w,c) flatten order."""
    C, H, W = input_shape

    def conv_prep(w, b):
        cout, cin, k, _ = w.shape
        wm = jnp.transpose(w, (2, 3, 1, 0))              # (kh, kw, cin, cout)
        wm = jnp.pad(wm, ((0, 0), (0, 0), (0, 0), (0, _CPAD - cout)))
        wm = wm.reshape(k * k * cin, _CPAD).astype(jnp.bfloat16)
        bm = jnp.pad(b, (0, _CPAD - cout)).reshape(1, _CPAD).astype(jnp.float32)
        return wm, bm

    def conv1_prep_s2d(w, b):
        # conv1 (k=8, s=4) is run on the 4x4 space-to-depth input as a
        # k=2, s=1 conv.  Patch row order is (bh, bw, dh, dw, cin) with
        # kh = 4*bh + dh, kw = 4*bw + dw.
        cout, cin, k, _ = w.shape                         # k == 8
        wt = jnp.transpose(w, (2, 3, 1, 0))               # (kh, kw, cin, cout)
        wt = wt.reshape(2, 4, 2, 4, cin, cout)            # (bh, dh, bw, dw, ..)
        wt = jnp.transpose(wt, (0, 2, 1, 3, 4, 5))        # (bh, bw, dh, dw, ..)
        wt = wt.reshape(k * k * cin, cout)
        wm = jnp.pad(wt, ((0, 0), (0, _CPAD - cout))).astype(jnp.bfloat16)
        bm = jnp.pad(b, (0, _CPAD - cout)).reshape(1, _CPAD).astype(jnp.float32)
        return wm, bm

    w1m, b1m = conv1_prep_s2d(params["w1"], params["b1"])
    w2m, b2m = conv_prep(params["w2"], params["b2"])      # cin = 32 (real)
    w3m, b3m = conv_prep(params["w3"], params["b3"])      # cin = 64 (real)

    oh = _conv_out_size(_conv_out_size(_conv_out_size(H, 8, 4), 4, 2), 3, 1)
    ow = _conv_out_size(_conv_out_size(_conv_out_size(W, 8, 4), 4, 2), 3, 1)

    # torch .view flattens (c, h, w)-major; kernel activations are (h, w, c).
    fw1p = (params["fw1"].reshape(_CONV3_OUT, oh, ow, 512)
            .transpose(1, 2, 0, 3)
            .reshape(oh * ow * _CONV3_OUT, 512).astype(jnp.bfloat16))
    fb1p = params["fb1"].reshape(1, 512).astype(jnp.float32)

    n_pad = _round_up(output_shape, 128)
    fw2p = jnp.pad(params["fw2"],
                   ((0, 0), (0, n_pad - output_shape))).astype(jnp.bfloat16)
    fb2p = jnp.pad(params["fb2"],
                   (0, n_pad - output_shape)).reshape(1, n_pad).astype(jnp.float32)

    return dict(w1m=w1m, b1m=b1m, w2m=w2m, b2m=b2m, w3m=w3m, b3m=b3m,
                fw1p=fw1p, fb1p=fb1p, fw2p=fw2p, fb2p=fb2p)


# ----------------------------------------------------------------------------
# Forward pass (dueling=False branch of DQN_q).
# ----------------------------------------------------------------------------
def dqn_q_forward(prep, x, *, n_actions=2):
    """x: (B, C, H, W) f32 (PyTorch NCHW). Returns (B, n_actions) f32."""
    B, C, H, W = x.shape
    assert H % 4 == 0 and W % 4 == 0, "space-to-depth path needs H, W % 4 == 0"
    # One fused NCHW->NHWC transpose + 4x4 space-to-depth: (B,C,H,W)->(B,H/4,W/4,16C)
    h = x.reshape(B, C, H // 4, 4, W // 4, 4)
    h = jnp.transpose(h, (0, 2, 4, 3, 5, 1)).reshape(B, H // 4, W // 4, 16 * C)
    h = h.astype(jnp.bfloat16)    # NOTE: deliberate f32->bf16 activation cast
    # conv1 (k=8, s=4) == (k=2, s=1) on the space-to-depth tensor.
    h = conv2d_relu_nhwc(h, prep["w1m"], prep["b1m"], k=2, stride=1,
                         cin=16 * C, tm=512)              # (B,19,19,128)
    h = conv2d_relu_nhwc(h, prep["w2m"], prep["b2m"], k=4, stride=2,
                         cin=32, tm=256)                  # (B, 8, 8,128)
    h = conv2d_relu_nhwc(h, prep["w3m"], prep["b3m"], k=3, stride=1,
                         cin=64, tm=256)                  # (B, 6, 6,128)
    # TODO(synk): fuse conv3's GEMM into the FC head pallas_call (the in-kernel
    # (36,64)->(1,2304) relayout is the blocker for a clean lowering).
    h = h[..., :_CONV3_OUT].reshape(B, -1)     # drop lane pad; (h,w,c) flatten
    q = fc_head(h, prep["fw1p"], prep["fb1p"], prep["fw2p"], prep["fb2p"])
    return q[:, :n_actions]


# ----------------------------------------------------------------------------
# Plain-JAX reference mirroring the kernel's bf16 storage / f32 accumulation.
# ----------------------------------------------------------------------------
def dqn_q_reference(params, x):
    def conv(h, w, b, s):
        o = jax.lax.conv_general_dilated(
            h.astype(jnp.bfloat16), w.astype(jnp.bfloat16),
            window_strides=(s, s), padding="VALID",
            dimension_numbers=("NCHW", "OIHW", "NCHW"),
            preferred_element_type=jnp.float32)
        return jax.nn.relu(o + b.reshape(1, -1, 1, 1)).astype(jnp.bfloat16)

    h = conv(x, params["w1"], params["b1"], 4)
    h = conv(h, params["w2"], params["b2"], 2)
    h = conv(h, params["w3"], params["b3"], 1)
    h = h.reshape(h.shape[0], -1)                        # NCHW (c-major) flatten
    hid = jax.nn.relu(
        jnp.dot(h, params["fw1"].astype(jnp.bfloat16),
                preferred_element_type=jnp.float32) + params["fb1"])
    return (jnp.dot(hid.astype(jnp.bfloat16), params["fw2"].astype(jnp.bfloat16),
                    preferred_element_type=jnp.float32) + params["fb2"])


if __name__ == "__main__":
    key = jax.random.PRNGKey(0)
    pkey, xkey = jax.random.split(key)

    input_shape = (4, 80, 80)       # module default
    batch, n_actions = 2, 2
    params = init_params(pkey, input_shape=input_shape, output_shape=n_actions)
    prep = prepare_params(params, input_shape=input_shape, output_shape=n_actions)
    x = jax.random.normal(xkey, (batch,) + input_shape, dtype=jnp.float32)

    fwd = jax.jit(lambda p, xx: dqn_q_forward(p, xx, n_actions=n_actions))
    q = jax.block_until_ready(fwd(prep, x))
    q_ref = jax.block_until_ready(dqn_q_reference(params, x))

    assert q.shape == (batch, n_actions), q.shape
    assert jnp.allclose(q, q_ref, atol=1e-2, rtol=1e-2), (q, q_ref)
    print("KERNEL_OK")
</pallas_src>

<mosaic_0001>
module attributes {stable_mosaic.version = 11 : i64} {
  func.func @_matmul_bias_relu_kernel(%arg0: i32, %arg1: memref<512x256xbf16, #tpu.memory_space<vmem>>, %arg2: memref<256x128xbf16, #tpu.memory_space<vmem>>, %arg3: memref<1x128xf32, #tpu.memory_space<vmem>>, %arg4: memref<512x128xbf16, #tpu.memory_space<vmem>>) attributes {dimension_semantics = [#tpu.dimension_semantics<parallel>], iteration_bounds = array<i64: 2>, scalar_prefetch = 0 : i64, scratch_operands = 0 : i64, tpu.core_type = #tpu.core_type<tc>, window_params = [{transform_indices = @transform_0, window_bounds = array<i64: 512, 256>}, {pipeline_mode = #tpu.pipeline_mode<synchronous>, transform_indices = @transform_1, window_bounds = array<i64: 256, 128>}, {pipeline_mode = #tpu.pipeline_mode<synchronous>, transform_indices = @transform_2, window_bounds = array<i64: 1, 128>}, {transform_indices = @transform_3, window_bounds = array<i64: 512, 128>}]} {
    %c0 = arith.constant 0 : index
    %c0_0 = arith.constant 0 : index
    %0 = vector.load %arg1[%c0, %c0_0] : memref<512x256xbf16, #tpu.memory_space<vmem>>, vector<512x256xbf16>
    %c0_1 = arith.constant 0 : index
    %c0_2 = arith.constant 0 : index
    %1 = vector.load %arg2[%c0_1, %c0_2] : memref<256x128xbf16, #tpu.memory_space<vmem>>, vector<256x128xbf16>
    %cst = arith.constant dense<0.000000e+00> : vector<512x128xf32>
    %2 = tpu.matmul %0, %1, %cst {dimension_numbers = #tpu.dot_dimension_numbers<[1], [0], [0], [1], [0, 0, 1, 1], [], []>} : vector<512x256xbf16>, vector<256x128xbf16>, vector<512x128xf32> -> vector<512x128xf32>
    %c0_3 = arith.constant 0 : index
    %c0_4 = arith.constant 0 : index
    %3 = vector.load %arg3[%c0_3, %c0_4] : memref<1x128xf32, #tpu.memory_space<vmem>>, vector<1x128xf32>
    %4 = vector.broadcast %3 : vector<1x128xf32> to vector<512x128xf32>
    %5 = arith.addf %2, %4 : vector<512x128xf32>
    %cst_5 = arith.constant 0.000000e+00 : f32
    %6 = vector.broadcast %cst_5 : f32 to vector<512x128xf32>
    %7 = arith.maximumf %5, %6 : vector<512x128xf32>
    %8 = arith.truncf %7 : vector<512x128xf32> to vector<512x128xbf16>
    %c0_6 = arith.constant 0 : index
    %c0_7 = arith.constant 0 : index
    %9 = vector.load %arg4[%c0_6, %c0_7] : memref<512x128xbf16, #tpu.memory_space<vmem>>, vector<512x128xbf16>
    tpu.vector_store %arg4[%c0_6, %c0_7], %8 {strides = array<i32>} : memref<512x128xbf16, #tpu.memory_space<vmem>>, vector<512x128xbf16>,
    return
  }
  func.func @transform_0(%arg0: i32) -> (i32, i32) {
    %c0_i32 = arith.constant 0 : i32
    %c0_i32_0 = arith.constant 0 : i32
    return %arg0, %c0_i32 : i32, i32
  }
  func.func @transform_1(%arg0: i32) -> (i32, i32) {
    %c0_i32 = arith.constant 0 : i32
    %c0_i32_0 = arith.constant 0 : i32
    %c0_i32_1 = arith.constant 0 : i32
    return %c0_i32, %c0_i32_0 : i32, i32
  }
  func.func @transform_2(%arg0: i32) -> (i32, i32) {
    %c0_i32 = arith.constant 0 : i32
    %c0_i32_0 = arith.constant 0 : i32
    %c0_i32_1 = arith.constant 0 : i32
    return %c0_i32, %c0_i32_0 : i32, i32
  }
  func.func @transform_3(%arg0: i32) -> (i32, i32) {
    %c0_i32 = arith.constant 0 : i32
    %c0_i32_0 = arith.constant 0 : i32
    return %arg0, %c0_i32 : i32, i32
  }
}

module attributes {stable_mosaic.version = 11 : i64} {
  func.func @_matmul_bias_relu_kernel(%arg0: i32, %arg1: memref<128x512xbf16, #tpu.memory_space<vmem>>, %arg2: memref<512x128xbf16, #tpu.memory_space<vmem>>, %arg3: memref<1x128xf32, #tpu.memory_space<vmem>>, %arg4: memref<128x128xbf16, #tpu.memory_space<vmem>>) attributes {dimension_semantics = [#tpu.dimension_semantics<parallel>], iteration_bounds = array<i64: 1>, scalar_prefetch = 0 : i64, scratch_operands = 0 : i64, tpu.core_type = #tpu.core_type<tc>, window_params = [{transform_indices = @transform_0, window_bounds = array<i64: 128, 512>}, {pipeline_mode = #tpu.pipeline_mode<synchronous>, transform_indices = @transform_1, window_bounds = array<i64: 512, 128>}, {pipeline_mode = #tpu.pipeline_mode<synchronous>, transform_indices = @transform_2, window_bounds = array<i64: 1, 128>}, {transform_indices = @transform_3, window_bounds = array<i64: 128, 128>}]} {
    %c0 = arith.constant 0 : index
    %c0_0 = arith.constant 0 : index
    %0 = vector.load %arg1[%c0, %c0_0] : memref<128x512xbf16, #tpu.memory_space<vmem>>, vector<128x512xbf16>
    %c0_1 = arith.constant 0 : index
    %c0_2 = arith.constant 0 : index
    %1 = vector.load %arg2[%c0_1, %c0_2] : memref<512x128xbf16, #tpu.memory_space<vmem>>, vector<512x128xbf16>
    %cst = arith.constant dense<0.000000e+00> : vector<128x128xf32>
    %2 = tpu.matmul %0, %1, %cst {dimension_numbers = #tpu.dot_dimension_numbers<[1], [0], [0], [1], [0, 0, 1, 1], [], []>} : vector<128x512xbf16>, vector<512x128xbf16>, vector<128x128xf32> -> vector<128x128xf32>
    %c0_3 = arith.constant 0 : index
    %c0_4 = arith.constant 0 : index
    %3 = vector.load %arg3[%c0_3, %c0_4] : memref<1x128xf32, #tpu.memory_space<vmem>>, vector<1x128xf32>
    %4 = vector.broadcast %3 : vector<1x128xf32> to vector<128x128xf32>
    %5 = arith.addf %2, %4 : vector<128x128xf32>
    %cst_5 = arith.constant 0.000000e+00 : f32
    %6 = vector.broadcast %cst_5 : f32 to vector<128x128xf32>
    %7 = arith.maximumf %5, %6 : vector<128x128xf32>
    %8 = arith.truncf %7 : vector<128x128xf32> to vector<128x128xbf16>
    %c0_6 = arith.constant 0 : index
    %c0_7 = arith.constant 0 : index
    %9 = vector.load %arg4[%c0_6, %c0_7] : memref<128x128xbf16, #tpu.memory_space<vmem>>, vector<128x128xbf16>
    tpu.vector_store %arg4[%c0_6, %c0_7], %8 {strides = array<i32>} : memref<128x128xbf16, #tpu.memory_space<vmem>>, vector<128x128xbf16>,
    return
  }
  func.func @transform_0(%arg0: i32) -> (i32, i32) {
    %c0_i32 = arith.constant 0 : i32
    %c0_i32_0 = arith.constant 0 : i32
    return %arg0, %c0_i32 : i32, i32
  }
  func.func @transform_1(%arg0: i32) -> (i32, i32) {
    %c0_i32 = arith.constant 0 : i32
    %c0_i32_0 = arith.constant 0 : i32
    %c0_i32_1 = arith.constant 0 : i32
    return %c0_i32, %c0_i32_0 : i32, i32
  }
  func.func @transform_2(%arg0: i32) -> (i32, i32) {
    %c0_i32 = arith.constant 0 : i32
    %c0_i32_0 = arith.constant 0 : i32
    %c0_i32_1 = arith.constant 0 : i32
    return %c0_i32, %c0_i32_0 : i32, i32
  }
  func.func @transform_3(%arg0: i32) -> (i32, i32) {
    %c0_i32 = arith.constant 0 : i32
    %c0_i32_0 = arith.constant 0 : i32
    return %arg0, %c0_i32 : i32, i32
  }
}

module attributes {stable_mosaic.version = 11 : i64} {
  func.func @_matmul_bias_relu_kernel(%arg0: i32, %arg1: memref<72x576xbf16, #tpu.memory_space<vmem>>, %arg2: memref<576x128xbf16, #tpu.memory_space<vmem>>, %arg3: memref<1x128xf32, #tpu.memory_space<vmem>>, %arg4: memref<72x128xbf16, #tpu.memory_space<vmem>>) attributes {dimension_semantics = [#tpu.dimension_semantics<parallel>], iteration_bounds = array<i64: 1>, scalar_prefetch = 0 : i64, scratch_operands = 0 : i64, tpu.core_type = #tpu.core_type<tc>, window_params = [{transform_indices = @transform_0, window_bounds = array<i64: 72, 576>}, {pipeline_mode = #tpu.pipeline_mode<synchronous>, transform_indices = @transform_1, window_bounds = array<i64: 576, 128>}, {pipeline_mode = #tpu.pipeline_mode<synchronous>, transform_indices = @transform_2, window_bounds = array<i64: 1, 128>}, {transform_indices = @transform_3, window_bounds = array<i64: 72, 128>}]} {
    %c0 = arith.constant 0 : index
    %c0_0 = arith.constant 0 : index
    %0 = vector.load %arg1[%c0, %c0_0] : memref<72x576xbf16, #tpu.memory_space<vmem>>, vector<72x576xbf16>
    %c0_1 = arith.constant 0 : index
    %c0_2 = arith.constant 0 : index
    %1 = vector.load %arg2[%c0_1, %c0_2] : memref<576x128xbf16, #tpu.memory_space<vmem>>, vector<576x128xbf16>
    %cst = arith.constant dense<0.000000e+00> : vector<72x128xf32>
    %2 = tpu.matmul %0, %1, %cst {dimension_numbers = #tpu.dot_dimension_numbers<[1], [0], [0], [1], [0, 0, 1, 1], [], []>} : vector<72x576xbf16>, vector<576x128xbf16>, vector<72x128xf32> -> vector<72x128xf32>
    %c0_3 = arith.constant 0 : index
    %c0_4 = arith.constant 0 : index
    %3 = vector.load %arg3[%c0_3, %c0_4] : memref<1x128xf32, #tpu.memory_space<vmem>>, vector<1x128xf32>
    %4 = vector.broadcast %3 : vector<1x128xf32> to vector<72x128xf32>
    %5 = arith.addf %2, %4 : vector<72x128xf32>
    %cst_5 = arith.constant 0.000000e+00 : f32
    %6 = vector.broadcast %cst_5 : f32 to vector<72x128xf32>
    %7 = arith.maximumf %5, %6 : vector<72x128xf32>
    %8 = arith.truncf %7 : vector<72x128xf32> to vector<72x128xbf16>
    %c0_6 = arith.constant 0 : index
    %c0_7 = arith.constant 0 : index
    %9 = vector.load %arg4[%c0_6, %c0_7] : memref<72x128xbf16, #tpu.memory_space<vmem>>, vector<72x128xbf16>
    tpu.vector_store %arg4[%c0_6, %c0_7], %8 {strides = array<i32>} : memref<72x128xbf16, #tpu.memory_space<vmem>>, vector<72x128xbf16>,
    return
  }
  func.func @transform_0(%arg0: i32) -> (i32, i32) {
    %c0_i32 = arith.constant 0 : i32
    %c0_i32_0 = arith.constant 0 : i32
    return %arg0, %c0_i32 : i32, i32
  }
  func.func @transform_1(%arg0: i32) -> (i32, i32) {
    %c0_i32 = arith.constant 0 : i32
    %c0_i32_0 = arith.constant 0 : i32
    %c0_i32_1 = arith.constant 0 : i32
    return %c0_i32, %c0_i32_0 : i32, i32
  }
  func.func @transform_2(%arg0: i32) -> (i32, i32) {
    %c0_i32 = arith.constant 0 : i32
    %c0_i32_0 = arith.constant 0 : i32
    %c0_i32_1 = arith.constant 0 : i32
    return %c0_i32, %c0_i32_0 : i32, i32
  }
  func.func @transform_3(%arg0: i32) -> (i32, i32) {
    %c0_i32 = arith.constant 0 : i32
    %c0_i32_0 = arith.constant 0 : i32
    return %arg0, %c0_i32 : i32, i32
  }
}

module attributes {stable_mosaic.version = 11 : i64} {
  func.func @_fc_head_kernel(%arg0: i32, %arg1: memref<8x768xbf16, #tpu.memory_space<vmem>>, %arg2: memref<768x512xbf16, #tpu.memory_space<vmem>>, %arg3: memref<1x512xf32, #tpu.memory_space<vmem>>, %arg4: memref<512x128xbf16, #tpu.memory_space<vmem>>, %arg5: memref<1x128xf32, #tpu.memory_space<vmem>>, %arg6: memref<8x128xf32, #tpu.memory_space<vmem>>, %arg7: memref<8x512xf32, #tpu.memory_space<vmem>>) attributes {dimension_semantics = [#tpu.dimension_semantics<arbitrary>], iteration_bounds = array<i64: 3>, scalar_prefetch = 0 : i64, scratch_operands = 1 : i64, tpu.core_type = #tpu.core_type<tc>, window_params = [{transform_indices = @transform_0, window_bounds = array<i64: 8, 768>}, {transform_indices = @transform_1, window_bounds = array<i64: 768, 512>}, {pipeline_mode = #tpu.pipeline_mode<synchronous>, transform_indices = @transform_2, window_bounds = array<i64: 1, 512>}, {pipeline_mode = #tpu.pipeline_mode<synchronous>, transform_indices = @transform_3, window_bounds = array<i64: 512, 128>}, {pipeline_mode = #tpu.pipeline_mode<synchronous>, transform_indices = @transform_4, window_bounds = array<i64: 1, 128>}, {pipeline_mode = #tpu.pipeline_mode<synchronous>, transform_indices = @transform_5, window_bounds = array<i64: 8, 128>}]} {
    %c0_i32 = arith.constant 0 : i32
    %0 = arith.cmpi eq, %arg0, %c0_i32 : i32
    %1 = arith.extui %0 : i1 to i32
    %c0_i32_0 = arith.constant 0 : i32
    %2 = arith.cmpi ne, %1, %c0_i32_0 : i32
    scf.if %2 {
      %cst_9 = arith.constant 0.000000e+00 : f32
      %12 = vector.broadcast %cst_9 : f32 to vector<8x512xf32>
      %c0_10 = arith.constant 0 : index
      %c0_11 = arith.constant 0 : index
      %13 = vector.load %arg7[%c0_10, %c0_11] : memref<8x512xf32, #tpu.memory_space<vmem>>, vector<8x512xf32>
      tpu.vector_store %arg7[%c0_10, %c0_11], %12 {strides = array<i32>} : memref<8x512xf32, #tpu.memory_space<vmem>>, vector<8x512xf32>,
    } else {
    }
    %c0 = arith.constant 0 : index
    %c0_1 = arith.constant 0 : index
    %3 = vector.load %arg7[%c0, %c0_1] : memref<8x512xf32, #tpu.memory_space<vmem>>, vector<8x512xf32>
    %c0_2 = arith.constant 0 : index
    %c0_3 = arith.constant 0 : index
    %4 = vector.load %arg1[%c0_2, %c0_3] : memref<8x768xbf16, #tpu.memory_space<vmem>>, vector<8x768xbf16>
    %c0_4 = arith.constant 0 : index
    %c0_5 = arith.constant 0 : index
    %5 = vector.load %arg2[%c0_4, %c0_5] : memref<768x512xbf16, #tpu.memory_space<vmem>>, vector<768x512xbf16>
    %cst = arith.constant dense<0.000000e+00> : vector<8x512xf32>
    %6 = tpu.matmul %4, %5, %cst {dimension_numbers = #tpu.dot_dimension_numbers<[1], [0], [0], [1], [0, 0, 1, 1], [], []>} : vector<8x768xbf16>, vector<768x512xbf16>, vector<8x512xf32> -> vector<8x512xf32>
    %7 = arith.addf %3, %6 : vector<8x512xf32>
    %c0_6 = arith.constant 0 : index
    %c0_7 = arith.constant 0 : index
    %8 = vector.load %arg7[%c0_6, %c0_7] : memref<8x512xf32, #tpu.memory_space<vmem>>, vector<8x512xf32>
    tpu.vector_store %arg7[%c0_6, %c0_7], %7 {strides = array<i32>} : memref<8x512xf32, #tpu.memory_space<vmem>>, vector<8x512xf32>,
    %c2_i32 = arith.constant 2 : i32
    %9 = arith.cmpi eq, %arg0, %c2_i32 : i32
    %10 = arith.extui %9 : i1 to i32
    %c0_i32_8 = arith.constant 0 : i32
    %11 = arith.cmpi ne, %10, %c0_i32_8 : i32
    scf.if %11 {
      %c0_9 = arith.constant 0 : index
      %c0_10 = arith.constant 0 : index
      %12 = vector.load %arg7[%c0_9, %c0_10] : memref<8x512xf32, #tpu.memory_space<vmem>>, vector<8x512xf32>
      %c0_11 = arith.constant 0 : index
      %c0_12 = arith.constant 0 : index
      %13 = vector.load %arg3[%c0_11, %c0_12] : memref<1x512xf32, #tpu.memory_space<vmem>>, vector<1x512xf32>
      %14 = vector.broadcast %13 : vector<1x512xf32> to vector<8x512xf32>
      %15 = arith.addf %12, %14 : vector<8x512xf32>
      %cst_13 = arith.constant 0.000000e+00 : f32
      %16 = vector.broadcast %cst_13 : f32 to vector<8x512xf32>
      %17 = arith.maximumf %15, %16 : vector<8x512xf32>
      %18 = arith.truncf %17 : vector<8x512xf32> to vector<8x512xbf16>
      %c0_14 = arith.constant 0 : index
      %c0_15 = arith.constant 0 : index
      %19 = vector.load %arg4[%c0_14, %c0_15] : memref<512x128xbf16, #tpu.memory_space<vmem>>, vector<512x128xbf16>
      %cst_16 = arith.constant dense<0.000000e+00> : vector<8x128xf32>
      %20 = tpu.matmul %18, %19, %cst_16 {dimension_numbers = #tpu.dot_dimension_numbers<[1], [0], [0], [1], [0, 0, 1, 1], [], []>} : vector<8x512xbf16>, vector<512x128xbf16>, vector<8x128xf32> -> vector<8x128xf32>
      %c0_17 = arith.constant 0 : index
      %c0_18 = arith.constant 0 : index
      %21 = vector.load %arg5[%c0_17, %c0_18] : memref<1x128xf32, #tpu.memory_space<vmem>>, vector<1x128xf32>
      %22 = vector.broadcast %21 : vector<1x128xf32> to vector<8x128xf32>
      %23 = arith.addf %20, %22 : vector<8x128xf32>
      %c0_19 = arith.constant 0 : index
      %c0_20 = arith.constant 0 : index
      %24 = vector.load %arg6[%c0_19, %c0_20] : memref<8x128xf32, #tpu.memory_space<vmem>>, vector<8x128xf32>
      tpu.vector_store %arg6[%c0_19, %c0_20], %23 {strides = array<i32>} : memref<8x128xf32, #tpu.memory_space<vmem>>, vector<8x128xf32>,
    } else {
    }
    return
  }
  func.func @transform_0(%arg0: i32) -> (i32, i32) {
    %c0_i32 = arith.constant 0 : i32
    %c0_i32_0 = arith.constant 0 : i32
    return %c0_i32, %arg0 : i32, i32
  }
  func.func @transform_1(%arg0: i32) -> (i32, i32) {
    %c0_i32 = arith.constant 0 : i32
    %c0_i32_0 = arith.constant 0 : i32
    return %arg0, %c0_i32 : i32, i32
  }
  func.func @transform_2(%arg0: i32) -> (i32, i32) {
    %c0_i32 = arith.constant 0 : i32
    %c0_i32_0 = arith.constant 0 : i32
    %c0_i32_1 = arith.constant 0 : i32
    return %c0_i32, %c0_i32_0 : i32, i32
  }
  func.func @transform_3(%arg0: i32) -> (i32, i32) {
    %c0_i32 = arith.constant 0 : i32
    %c0_i32_0 = arith.constant 0 : i32
    %c0_i32_1 = arith.constant 0 : i32
    return %c0_i32, %c0_i32_0 : i32, i32
  }
  func.func @transform_4(%arg0: i32) -> (i32, i32) {
    %c0_i32 = arith.constant 0 : i32
    %c0_i32_0 = arith.constant 0 : i32
    %c0_i32_1 = arith.constant 0 : i32
    return %c0_i32, %c0_i32_0 : i32, i32
  }
  func.func @transform_5(%arg0: i32) -> (i32, i32) {
    %c0_i32 = arith.constant 0 : i32
    %c0_i32_0 = arith.constant 0 : i32
    %c0_i32_1 = arith.constant 0 : i32
    return %c0_i32, %c0_i32_0 : i32, i32
  }
}

</mosaic_0001>

<llo_original>
// kernel: _lambda_.4
$region0: #{_lambda_.4}
  #allocation0 [shape = 'u32[]', space=smem, size = 0x4, offset = 0x4, fixed_abs, tag = 'smem constant byte address 0x4 - core index']
  #allocation1 [shape = 'u32[144,128]{1,0:T(1,128)}', space=vmem, size = 0x12000, scoped, tag = 'internal scratch']
  %s0 = inlined_call_operand.vmem [shape: bf16[722,256], index: 0, kind: input, shape index: {}]
  %s1 = inlined_call_operand.vmem [shape: bf16[256,128], index: 1, kind: input, shape index: {}]
  %s2 = inlined_call_operand.vmem [shape: f32[1,128], index: 2, kind: input, shape index: {}]
  %s3 = inlined_call_operand.vmem [shape: bf16[722,128], index: 3, kind: output, shape index: {}]
  %s4 = sld [smem:[#allocation0]]
  $region89: #{_lambda_.4} parent=0
    _
  %s6 = ssub.s32 1, %s4
  %s7 = scalar_select 0, %s6, %s4
  $region1: #{_lambda_.4} parent=0
    #allocation2 [shape = 'u8[262144]{0}', space=vmem, size = 0x40000, scoped, tag = 'output window, operand 0']
    loop: start=0, step=1, limit=4
    $region2: #{_lambda_.4} parent=1 // loop_pre_header
      _
    $region3: #{_lambda_.4} parent=1 // loop_header
      %s9 = sphi 0, %s13
      %p10 = scmp.ge.s32.totalorder %s9, 4
      %s19 = sphi 0, %s21
      %s22 = sphi 0, %s19
      %s23 = sphi 0, %s22
      %s39 = sphi 0, %s23
      %s43 = sphi 0, %s43
      %s45 = sphi 0, %s43
      %s46 = sphi 0, %s45
      %s60 = sphi 0, %s46
      %s64 = sphi 0, %s64
      %s66 = sphi 0, %s64
      %s67 = sphi 0, %s66
      %s81 = sphi 0, %s67
      %s87 = sphi 0, %s89
      %s90 = sphi 0, %s87
      %s91 = sphi 0, %s90
      %s107 = sphi 0, %s91
    $region4: #{_lambda_.4} parent=1 // loop_header_branch
      %12 = sbr.rel (%p10) target = $region8
    $region5: #{_lambda_.4} parent=1 // loop_body
      %s14 = ssub.s32 %s9, 1
      %s15 = ssub.s32 %s9, 2
      %s16 = sadd.s32 %s9, 1
      %s17 = ssub.s32 %s9, %s16
      %p18 = scmp.eq.s32.totalorder %s17, 0
      %s20 = sadd.s32 %s19, 1
      %s21 = scalar_select %p18, %s19, %s20
      %p24 = pneg %p18
      %p25 = scmp.eq.s32.totalorder %s9, 1
      %p26 = por %p24, %p25
      %p27 = scmp.ne.s32.totalorder %s19, %s22
      %p28 = scmp.eq.s32.totalorder %s9, 0
      %p29 = por %p27, %p28
      %p30 = scmp.ne.s32.totalorder %s19, %s22
      %p31 = scmp.eq.s32.totalorder %s14, 1
      %p32 = por %p30, %p31
      %p33 = scmp.ne.s32.totalorder %s22, %s23
      %p34 = scmp.eq.s32.totalorder %s14, 0
      %p35 = por %p33, %p34
      %p36 = scmp.ne.s32.totalorder %s22, %s23
      %p37 = scmp.eq.s32.totalorder %s15, 1
      %p38 = por %p36, %p37
      %p40 = scmp.ne.s32.totalorder %s23, %s39
      %p41 = scmp.eq.s32.totalorder %s15, 0
      %p42 = por %p40, %p41
      %s44 = sadd.s32 %s43, 1
      %p47 = scmp.eq.s32.totalorder %s9, 1
      %p48 = scmp.ne.s32.totalorder %s43, %s45
      %p49 = scmp.eq.s32.totalorder %s9, 0
      %p50 = por %p48, %p49
      %p51 = scmp.ne.s32.totalorder %s43, %s45
      %p52 = scmp.eq.s32.totalorder %s14, 1
      %p53 = por %p51, %p52
      %p54 = scmp.ne.s32.totalorder %s45, %s46
      %p55 = scmp.eq.s32.totalorder %s14, 0
      %p56 = por %p54, %p55
      %p57 = scmp.ne.s32.totalorder %s45, %s46
      %p58 = scmp.eq.s32.totalorder %s15, 1
      %p59 = por %p57, %p58
      %p61 = scmp.ne.s32.totalorder %s46, %s60
      %p62 = scmp.eq.s32.totalorder %s15, 0
      %p63 = por %p61, %p62
      %s65 = sadd.s32 %s64, 1
      %p68 = scmp.eq.s32.totalorder %s9, 1
      %p69 = scmp.ne.s32.totalorder %s64, %s66
      %p70 = scmp.eq.s32.totalorder %s9, 0
      %p71 = por %p69, %p70
      %p72 = scmp.ne.s32.totalorder %s64, %s66
      %p73 = scmp.eq.s32.totalorder %s14, 1
      %p74 = por %p72, %p73
      %p75 = scmp.ne.s32.totalorder %s66, %s67
      %p76 = scmp.eq.s32.totalorder %s14, 0
      %p77 = por %p75, %p76
      %p78 = scmp.ne.s32.totalorder %s66, %s67
      %p79 = scmp.eq.s32.totalorder %s15, 1
      %p80 = por %p78, %p79
      %p82 = scmp.ne.s32.totalorder %s67, %s81
      %p83 = scmp.eq.s32.totalorder %s15, 0
      %p84 = por %p82, %p83
      %s85 = ssub.s32 %s9, %s16
      %p86 = scmp.eq.s32.totalorder %s85, 0
      %s88 = sadd.s32 %s87, 1
      %s89 = scalar_select %p86, %s87, %s88
      %p92 = pneg %p86
      %p93 = scmp.eq.s32.totalorder %s9, 1
      %p94 = por %p92, %p93
      %p95 = scmp.ne.s32.totalorder %s87, %s90
      %p96 = scmp.eq.s32.totalorder %s9, 0
      %p97 = por %p95, %p96
      %p98 = scmp.ne.s32.totalorder %s87, %s90
      %p99 = scmp.eq.s32.totalorder %s14, 1
      %p100 = por %p98, %p99
      %p101 = scmp.ne.s32.totalorder %s90, %s91
      %p102 = scmp.eq.s32.totalorder %s14, 0
      %p103 = por %p101, %p102
      %p104 = scmp.ne.s32.totalorder %s90, %s91
      %p105 = scmp.eq.s32.totalorder %s15, 1
      %p106 = por %p104, %p105
      %p108 = scmp.ne.s32.totalorder %s91, %s107
      %p109 = scmp.eq.s32.totalorder %s15, 0
      %p110 = por %p108, %p109
      %p111 = scmp.le.s32.totalorder 1, %s9
      %p112 = scmp.lt.s32.totalorder %s9, 3
      %p113 = pnand %p111, %p112
      %p114 = pneg %p113
      // Predicated region
      $region9: #{_lambda_.4} parent=5 // pred_check
        _
      $region10: #{_lambda_.4} parent=5 // pred_check_branch
        %116 = sbr.rel (%p113) target = $region12
      $region11: #{_lambda_.4} parent=5 // pred_region
        %s117 = ssub.s32 %s9, 1
        // Predicated region
        $region13: #{_lambda_.4} parent=11 // pred_check
          %p118 = pneg %p56
        $region14: #{_lambda_.4} parent=11 // pred_check_branch
          %120 = sbr.rel (%p118) target = $region16
        $region15: #{_lambda_.4} parent=11 // pred_region
          _
        $region16: #{_lambda_.4} parent=11 // pred_fallthru
          _
        // Predicated region
        $region17: #{_lambda_.4} parent=11 // pred_check
          %p121 = pneg %p77
        $region18: #{_lambda_.4} parent=11 // pred_check_branch
          %123 = sbr.rel (%p121) target = $region20
        $region19: #{_lambda_.4} parent=11 // pred_region
          _
        $region20: #{_lambda_.4} parent=11 // pred_fallthru
          _
      $region12: #{_lambda_.4} parent=5 // pred_fallthru
        _
      %p124 = scmp.lt.s32.totalorder %s9, 2
      // Predicated region
      $region21: #{_lambda_.4} parent=5 // pred_check
        %p125 = pneg %p124
      $region22: #{_lambda_.4} parent=5 // pred_check_branch
        %127 = sbr.rel (%p125) target = $region24
      $region23: #{_lambda_.4} parent=5 // pred_region
        // Predicated region
        $region25: #{_lambda_.4} parent=23 // pred_check
          %p128 = pneg %p29
        $region26: #{_lambda_.4} parent=23 // pred_check_branch
          %130 = sbr.rel (%p128) target = $region28
        $region27: #{_lambda_.4} parent=23 // pred_region
          %s131 = smul.u32 64, %s9
          %s132 = ssub.s32 91, %s131
          %p133 = scmp.lt.s32.totalorder %s132, 64
          %s134 = scalar_select %p133, %s132, 64
          %s135 = smul.u32 64, %s134
          %s136 = smul.u32 %s135, 2
          %p137 = scmp.lt.s32.totalorder %s131, 90
          %s138 = scalar_select %p137, %s131, 90
          %s139 = smul.addr %s138, 2
          %s140 = smul.addr %s139, 4
          %s141 = scalar_lea.vmem %s0, %s140
          %s142 = smul.u32 64, %s9
          %s143 = ssub.s32 91, %s142
          %p144 = scmp.lt.s32.totalorder %s143, 64
          %s145 = scalar_select %p144, %s143, 64
          %s146 = smul.u32 64, %s145
          %s147 = smul.u32 %s146, 2
        $region28: #{_lambda_.4} parent=23 // pred_fallthru
          _
      $region24: #{_lambda_.4} parent=5 // pred_fallthru
        _
      %p148 = scmp.le.s32.totalorder 1, %s9
      %p149 = scmp.lt.s32.totalorder %s9, 3
      %p150 = pnand %p148, %p149
      %p151 = pneg %p150
      // Predicated region
      $region29: #{_lambda_.4} parent=5 // pred_check
        _
      $region30: #{_lambda_.4} parent=5 // pred_check_branch
        %153 = sbr.rel (%p150) target = $region32
      $region31: #{_lambda_.4} parent=5 // pred_region
        %s154 = ssub.s32 %s9, 1
        %s155 = smul.u32 64, %s14
        %s156 = ssub.s32 91, %s155
        %p157 = scmp.lt.s32.totalorder %s156, 64
        %s158 = scalar_select %p157, %s156, 64
        %s159 = smul.u32 64, %s158
        %s160 = smul.u32 %s159, 2
        %p161 = scmp.lt.s32.totalorder %s155, 90
        %s162 = scalar_select %p161, %s155, 90
        %s163 = smul.addr %s162, 2
        %s164 = smul.addr %s163, 4
        %s165 = scalar_lea.vmem %s0, %s164
        %p166 = pneg %p35
        %p167 = pneg %p32
        %p168 = pneg %p56
        %p169 = pneg %p53
        %p170 = pneg %p77
        %p171 = pneg %p74
        %p172 = pneg %p103
        %p173 = pneg %p100
        %s174 = sand.u32 %s90, 1
        %s175 = sand.u32 %s90, 1
        %s176 = smul.addr %s175, 256
        %s177 = scalar_lea.vmem [#allocation2], %s176
        %s178 = smul.u32 64, %s14
        %s179 = ssub.s32 91, %s178
        %p180 = scmp.lt.s32.totalorder %s179, 64
        %s181 = scalar_select %p180, %s179, 64
        %s182 = smul.u32 64, %s181
        %s183 = smul.u32 %s182, 2
        %p184 = scmp.lt.s32.totalorder %s178, 90
        %s185 = scalar_select %p184, %s178, 90
        %s186 = smul.addr %s185, 2
        %s187 = smul.addr %s186, 4
        %s188 = scalar_lea.vmem %s0, %s187
        %s189 = smul.u32 64, %s14
        %s190 = ssub.s32 91, %s189
        %p191 = scmp.lt.s32.totalorder %s190, 64
        %s192 = scalar_select %p191, %s190, 64
        %s193 = smul.u32 64, %s192
        %s194 = smul.u32 %s193, 2
        %s195 = smul.u32 64, %s14
        %s196 = ssub.s32 91, %s195
        %p197 = scmp.lt.s32.totalorder %s196, 64
        %s198 = scalar_select %p197, %s196, 64
        %s199 = smul.u32 64, %s198
        %v201 = vld [vmem:[%s188] sm:$0xff]
        %v202 = vld [vmem:[%s188 + $0x8] sm:$0xff]
        %v203 = vld [vmem:[%s188 + $0x10] sm:$0xff]
        %v204 = vld [vmem:[%s188 + $0x18] sm:$0xff]
        %v205 = vld [vmem:[%s188 + $0x20] sm:$0xff]
        %v206 = vld [vmem:[%s188 + $0x28] sm:$0xff]
        %v207 = vld [vmem:[%s188 + $0x30] sm:$0xff]
        %v208 = vld [vmem:[%s188 + $0x38] sm:$0xff]
        %v209 = vld [vmem:[%s188 + $0x40] sm:$0xff]
        %v210 = vld [vmem:[%s188 + $0x48] sm:$0xff]
        %v211 = vld [vmem:[%s188 + $0x50] sm:$0xff]
        %v212 = vld [vmem:[%s188 + $0x58] sm:$0xff]
        %v213 = vld [vmem:[%s188 + $0x60] sm:$0xff]
        %v214 = vld [vmem:[%s188 + $0x68] sm:$0xff]
        %v215 = vld [vmem:[%s188 + $0x70] sm:$0xff]
        %v216 = vld [vmem:[%s188 + $0x78] sm:$0xff]
        %v217 = vld [vmem:[%s188 + $0x80] sm:$0xff]
        %v218 = vld [vmem:[%s188 + $0x88] sm:$0xff]
        %v219 = vld [vmem:[%s188 + $0x90] sm:$0xff]
        %v220 = vld [vmem:[%s188 + $0x98] sm:$0xff]
        %v221 = vld [vmem:[%s188 + $0xa0] sm:$0xff]
        %v222 = vld [vmem:[%s188 + $0xa8] sm:$0xff]
        %v223 = vld [vmem:[%s188 + $0xb0] sm:$0xff]
        %v224 = vld [vmem:[%s188 + $0xb8] sm:$0xff]
        %v225 = vld [vmem:[%s188 + $0xc0] sm:$0xff]
        %v226 = vld [vmem:[%s188 + $0xc8] sm:$0xff]
        %v227 = vld [vmem:[%s188 + $0xd0] sm:$0xff]
        %v228 = vld [vmem:[%s188 + $0xd8] sm:$0xff]
        %v229 = vld [vmem:[%s188 + $0xe0] sm:$0xff]
        %v230 = vld [vmem:[%s188 + $0xe8] sm:$0xff]
        %v231 = vld [vmem:[%s188 + $0xf0] sm:$0xff]
        %v232 = vld [vmem:[%s188 + $0xf8] sm:$0xff]
        %v233 = vld [vmem:[%s188 + $0x100] sm:$0xff]
        %v234 = vld [vmem:[%s188 + $0x108] sm:$0xff]
        %v235 = vld [vmem:[%s188 + $0x110] sm:$0xff]
        %v236 = vld [vmem:[%s188 + $0x118] sm:$0xff]
        %v237 = vld [vmem:[%s188 + $0x120] sm:$0xff]
        %v238 = vld [vmem:[%s188 + $0x128] sm:$0xff]
        %v239 = vld [vmem:[%s188 + $0x130] sm:$0xff]
        %v240 = vld [vmem:[%s188 + $0x138] sm:$0xff]
        %v241 = vld [vmem:[%s188 + $0x140] sm:$0xff]
        %v242 = vld [vmem:[%s188 + $0x148] sm:$0xff]
        %v243 = vld [vmem:[%s188 + $0x150] sm:$0xff]
        %v244 = vld [vmem:[%s188 + $0x158] sm:$0xff]
        %v245 = vld [vmem:[%s188 + $0x160] sm:$0xff]
        %v246 = vld [vmem:[%s188 + $0x168] sm:$0xff]
        %v247 = vld [vmem:[%s188 + $0x170] sm:$0xff]
        %v248 = vld [vmem:[%s188 + $0x178] sm:$0xff]
        %v249 = vld [vmem:[%s188 + $0x180] sm:$0xff]
        %v250 = vld [vmem:[%s188 + $0x188] sm:$0xff]
        %v251 = vld [vmem:[%s188 + $0x190] sm:$0xff]
        %v252 = vld [vmem:[%s188 + $0x198] sm:$0xff]
        %v253 = vld [vmem:[%s188 + $0x1a0] sm:$0xff]
        %v254 = vld [vmem:[%s188 + $0x1a8] sm:$0xff]
        %v255 = vld [vmem:[%s188 + $0x1b0] sm:$0xff]
        %v256 = vld [vmem:[%s188 + $0x1b8] sm:$0xff]
        %v257 = vld [vmem:[%s188 + $0x1c0] sm:$0xff]
        %v258 = vld [vmem:[%s188 + $0x1c8] sm:$0xff]
        %v259 = vld [vmem:[%s188 + $0x1d0] sm:$0xff]
        %v260 = vld [vmem:[%s188 + $0x1d8] sm:$0xff]
        %v261 = vld [vmem:[%s188 + $0x1e0] sm:$0xff]
        %v262 = vld [vmem:[%s188 + $0x1e8] sm:$0xff]
        %v263 = vld [vmem:[%s188 + $0x1f0] sm:$0xff]
        %v264 = vld [vmem:[%s188 + $0x1f8] sm:$0xff]
        %v265 = vld [vmem:[%s1] sm:$0xf]
        %v266 = vld [vmem:[%s1 + $0x4] sm:$0xf]
        %v267 = vld [vmem:[%s1 + $0x8] sm:$0xf]
        %v268 = vld [vmem:[%s1 + $0xc] sm:$0xf]
        %v269 = vld [vmem:[%s1 + $0x10] sm:$0xf]
        %v270 = vld [vmem:[%s1 + $0x14] sm:$0xf]
        %v271 = vld [vmem:[%s1 + $0x18] sm:$0xf]
        %v272 = vld [vmem:[%s1 + $0x1c] sm:$0xf]
        %v273 = vld [vmem:[%s1 + $0x20] sm:$0xf]
        %v274 = vld [vmem:[%s1 + $0x24] sm:$0xf]
        %v275 = vld [vmem:[%s1 + $0x28] sm:$0xf]
        %v276 = vld [vmem:[%s1 + $0x2c] sm:$0xf]
        %v277 = vld [vmem:[%s1 + $0x30] sm:$0xf]
        %v278 = vld [vmem:[%s1 + $0x34] sm:$0xf]
        %v279 = vld [vmem:[%s1 + $0x38] sm:$0xf]
        %v280 = vld [vmem:[%s1 + $0x3c] sm:$0xf]
        %v281 = vld [vmem:[%s1 + $0x40] sm:$0xf]
        %v282 = vld [vmem:[%s1 + $0x44] sm:$0xf]
        %v283 = vld [vmem:[%s1 + $0x48] sm:$0xf]
        %v284 = vld [vmem:[%s1 + $0x4c] sm:$0xf]
        %v285 = vld [vmem:[%s1 + $0x50] sm:$0xf]
        %v286 = vld [vmem:[%s1 + $0x54] sm:$0xf]
        %v287 = vld [vmem:[%s1 + $0x58] sm:$0xf]
        %v288 = vld [vmem:[%s1 + $0x5c] sm:$0xf]
        %v289 = vld [vmem:[%s1 + $0x60] sm:$0xf]
        %v290 = vld [vmem:[%s1 + $0x64] sm:$0xf]
        %v291 = vld [vmem:[%s1 + $0x68] sm:$0xf]
        %v292 = vld [vmem:[%s1 + $0x6c] sm:$0xf]
        %v293 = vld [vmem:[%s1 + $0x70] sm:$0xf]
        %v294 = vld [vmem:[%s1 + $0x74] sm:$0xf]
        %v295 = vld [vmem:[%s1 + $0x78] sm:$0xf]
        %v296 = vld [vmem:[%s1 + $0x7c] sm:$0xf]
        %v297 = vld [vmem:[%s2] sm:$0x1]
        %v299 = vlaneseq
        %v300 = vshrl.u32 %v299, 7
        %v301 = vsub.s32 0, %v300
        %v302 = vrot.slane %v297, %v301
        %v368 = vunpack.c.l.b16 %v201
        %v369 = vunpack.c.h.b16 %v201
        %v370 = vunpack.c.l.b16 %v202
        %v371 = vunpack.c.h.b16 %v202
        %v372 = vunpack.c.l.b16 %v203
        %v373 = vunpack.c.h.b16 %v203
        %v374 = vunpack.c.l.b16 %v204
        %v375 = vunpack.c.h.b16 %v204
        %v376 = vunpack.c.l.b16 %v205
        %v377 = vunpack.c.h.b16 %v205
        %v378 = vunpack.c.l.b16 %v206
        %v379 = vunpack.c.h.b16 %v206
        %v380 = vunpack.c.l.b16 %v207
        %v381 = vunpack.c.h.b16 %v207
        %v382 = vunpack.c.l.b16 %v208
        %v383 = vunpack.c.h.b16 %v208
        %v384 = vunpack.c.l.b16 %v209
        %v385 = vunpack.c.h.b16 %v209
        %v386 = vunpack.c.l.b16 %v210
        %v387 = vunpack.c.h.b16 %v210
        %v388 = vunpack.c.l.b16 %v211
        %v389 = vunpack.c.h.b16 %v211
        %v390 = vunpack.c.l.b16 %v212
        %v391 = vunpack.c.h.b16 %v212
        %v392 = vunpack.c.l.b16 %v213
        %v393 = vunpack.c.h.b16 %v213
        %v394 = vunpack.c.l.b16 %v214
        %v395 = vunpack.c.h.b16 %v214
        %v396 = vunpack.c.l.b16 %v215
        %v397 = vunpack.c.h.b16 %v215
        %v398 = vunpack.c.l.b16 %v216
        %v399 = vunpack.c.h.b16 %v216
        %v400 = vunpack.c.l.b16 %v217
        %v401 = vunpack.c.h.b16 %v217
        %v402 = vunpack.c.l.b16 %v218
        %v403 = vunpack.c.h.b16 %v218
        %v404 = vunpack.c.l.b16 %v219
        %v405 = vunpack.c.h.b16 %v219
        %v406 = vunpack.c.l.b16 %v220
        %v407 = vunpack.c.h.b16 %v220
        %v408 = vunpack.c.l.b16 %v221
        %v409 = vunpack.c.h.b16 %v221
        %v410 = vunpack.c.l.b16 %v222
        %v411 = vunpack.c.h.b16 %v222
        %v412 = vunpack.c.l.b16 %v223
        %v413 = vunpack.c.h.b16 %v223
        %v414 = vunpack.c.l.b16 %v224
        %v415 = vunpack.c.h.b16 %v224
        %v416 = vunpack.c.l.b16 %v225
        %v417 = vunpack.c.h.b16 %v225
        %v418 = vunpack.c.l.b16 %v226
        %v419 = vunpack.c.h.b16 %v226
        %v420 = vunpack.c.l.b16 %v227
        %v421 = vunpack.c.h.b16 %v227
        %v422 = vunpack.c.l.b16 %v228
        %v423 = vunpack.c.h.b16 %v228
        %v424 = vunpack.c.l.b16 %v229
        %v425 = vunpack.c.h.b16 %v229
        %v426 = vunpack.c.l.b16 %v230
        %v427 = vunpack.c.h.b16 %v230
        %v428 = vunpack.c.l.b16 %v231
        %v429 = vunpack.c.h.b16 %v231
        %v430 = vunpack.c.l.b16 %v232
        %v431 = vunpack.c.h.b16 %v232
        %v432 = vunpack.c.l.b16 %v233
        %v433 = vunpack.c.h.b16 %v233
        %v434 = vunpack.c.l.b16 %v234
        %v435 = vunpack.c.h.b16 %v234
        %v436 = vunpack.c.l.b16 %v235
        %v437 = vunpack.c.h.b16 %v235
        %v438 = vunpack.c.l.b16 %v236
        %v439 = vunpack.c.h.b16 %v236
        %v440 = vunpack.c.l.b16 %v237
        %v441 = vunpack.c.h.b16 %v237
        %v442 = vunpack.c.l.b16 %v238
        %v443 = vunpack.c.h.b16 %v238
        %v444 = vunpack.c.l.b16 %v239
        %v445 = vunpack.c.h.b16 %v239
        %v446 = vunpack.c.l.b16 %v240
        %v447 = vunpack.c.h.b16 %v240
        %v448 = vunpack.c.l.b16 %v241
        %v449 = vunpack.c.h.b16 %v241
        %v450 = vunpack.c.l.b16 %v242
        %v451 = vunpack.c.h.b16 %v242
        %v452 = vunpack.c.l.b16 %v243
        %v453 = vunpack.c.h.b16 %v243
        %v454 = vunpack.c.l.b16 %v244
        %v455 = vunpack.c.h.b16 %v244
        %v456 = vunpack.c.l.b16 %v245
        %v457 = vunpack.c.h.b16 %v245
        %v458 = vunpack.c.l.b16 %v246
        %v459 = vunpack.c.h.b16 %v246
        %v460 = vunpack.c.l.b16 %v247
        %v461 = vunpack.c.h.b16 %v247
        %v462 = vunpack.c.l.b16 %v248
        %v463 = vunpack.c.h.b16 %v248
        %v464 = vunpack.c.l.b16 %v249
        %v465 = vunpack.c.h.b16 %v249
        %v466 = vunpack.c.l.b16 %v250
        %v467 = vunpack.c.h.b16 %v250
        %v468 = vunpack.c.l.b16 %v251
        %v469 = vunpack.c.h.b16 %v251
        %v470 = vunpack.c.l.b16 %v252
        %v471 = vunpack.c.h.b16 %v252
        %v472 = vunpack.c.l.b16 %v253
        %v473 = vunpack.c.h.b16 %v253
        %v474 = vunpack.c.l.b16 %v254
        %v475 = vunpack.c.h.b16 %v254
        %v476 = vunpack.c.l.b16 %v255
        %v477 = vunpack.c.h.b16 %v255
        %v478 = vunpack.c.l.b16 %v256
        %v479 = vunpack.c.h.b16 %v256
        %v480 = vunpack.c.l.b16 %v257
        %v481 = vunpack.c.h.b16 %v257
        %v482 = vunpack.c.l.b16 %v258
        %v483 = vunpack.c.h.b16 %v258
        %v484 = vunpack.c.l.b16 %v259
        %v485 = vunpack.c.h.b16 %v259
        %v486 = vunpack.c.l.b16 %v260
        %v487 = vunpack.c.h.b16 %v260
        %v488 = vunpack.c.l.b16 %v261
        %v489 = vunpack.c.h.b16 %v261
        %v490 = vunpack.c.l.b16 %v262
        %v491 = vunpack.c.h.b16 %v262
        %v492 = vunpack.c.l.b16 %v263
        %v493 = vunpack.c.h.b16 %v263
        %v494 = vunpack.c.l.b16 %v264
        %v495 = vunpack.c.h.b16 %v264
        %v496 = vpack.c.b16 %v370, %v368
        %v497 = vpack.c.b16 %v371, %v369
        %v498 = vpack.c.b16 %v374, %v372
        %v499 = vpack.c.b16 %v375, %v373
        %v500 = vpack.c.b16 %v378, %v376
        %v501 = vpack.c.b16 %v379, %v377
        %v502 = vpack.c.b16 %v382, %v380
        %v503 = vpack.c.b16 %v383, %v381
        %v504 = vpack.c.b16 %v386, %v384
        %v505 = vpack.c.b16 %v387, %v385
        %v506 = vpack.c.b16 %v390, %v388
        %v507 = vpack.c.b16 %v391, %v389
        %v508 = vpack.c.b16 %v394, %v392
        %v509 = vpack.c.b16 %v395, %v393
        %v510 = vpack.c.b16 %v398, %v396
        %v511 = vpack.c.b16 %v399, %v397
        %v512 = vpack.c.b16 %v402, %v400
        %v513 = vpack.c.b16 %v403, %v401
        %v514 = vpack.c.b16 %v406, %v404
        %v515 = vpack.c.b16 %v407, %v405
        %v516 = vpack.c.b16 %v410, %v408
        %v517 = vpack.c.b16 %v411, %v409
        %v518 = vpack.c.b16 %v414, %v412
        %v519 = vpack.c.b16 %v415, %v413
        %v520 = vpack.c.b16 %v418, %v416
        %v521 = vpack.c.b16 %v419, %v417
        %v522 = vpack.c.b16 %v422, %v420
        %v523 = vpack.c.b16 %v423, %v421
        %v524 = vpack.c.b16 %v426, %v424
        %v525 = vpack.c.b16 %v427, %v425
        %v526 = vpack.c.b16 %v430, %v428
        %v527 = vpack.c.b16 %v431, %v429
        %v528 = vpack.c.b16 %v434, %v432
        %v529 = vpack.c.b16 %v435, %v433
        %v530 = vpack.c.b16 %v438, %v436
        %v531 = vpack.c.b16 %v439, %v437
        %v532 = vpack.c.b16 %v442, %v440
        %v533 = vpack.c.b16 %v443, %v441
        %v534 = vpack.c.b16 %v446, %v444
        %v535 = vpack.c.b16 %v447, %v445
        %v536 = vpack.c.b16 %v450, %v448
        %v537 = vpack.c.b16 %v451, %v449
        %v538 = vpack.c.b16 %v454, %v452
        %v539 = vpack.c.b16 %v455, %v453
        %v540 = vpack.c.b16 %v458, %v456
        %v541 = vpack.c.b16 %v459, %v457
        %v542 = vpack.c.b16 %v462, %v460
        %v543 = vpack.c.b16 %v463, %v461
        %v544 = vpack.c.b16 %v466, %v464
        %v545 = vpack.c.b16 %v467, %v465
        %v546 = vpack.c.b16 %v470, %v468
        %v547 = vpack.c.b16 %v471, %v469
        %v548 = vpack.c.b16 %v474, %v472
        %v549 = vpack.c.b16 %v475, %v473
        %v550 = vpack.c.b16 %v478, %v476
        %v551 = vpack.c.b16 %v479, %v477
        %v552 = vpack.c.b16 %v482, %v480
        %v553 = vpack.c.b16 %v483, %v481
        %v554 = vpack.c.b16 %v486, %v484
        %v555 = vpack.c.b16 %v487, %v485
        %v556 = vpack.c.b16 %v490, %v488
        %v557 = vpack.c.b16 %v491, %v489
        %v558 = vpack.c.b16 %v494, %v492
        %v559 = vpack.c.b16 %v495, %v493
        %v656 = vunpack.c.l.b16 %v265
        %v657 = vunpack.c.l.b16 %v266
        %v658 = vunpack.c.l.b16 %v267
        %v659 = vunpack.c.l.b16 %v268
        %v660 = vunpack.c.l.b16 %v269
        %v661 = vunpack.c.l.b16 %v270
        %v662 = vunpack.c.l.b16 %v271
        %v663 = vunpack.c.l.b16 %v272
        %v664 = vunpack.c.l.b16 %v273
        %v665 = vunpack.c.l.b16 %v274
        %v666 = vunpack.c.l.b16 %v275
        %v667 = vunpack.c.l.b16 %v276
        %v668 = vunpack.c.l.b16 %v277
        %v669 = vunpack.c.l.b16 %v278
        %v670 = vunpack.c.l.b16 %v279
        %v671 = vunpack.c.l.b16 %v280
        %v672 = vunpack.c.l.b16 %v281
        %v673 = vunpack.c.l.b16 %v282
        %v674 = vunpack.c.l.b16 %v283
        %v675 = vunpack.c.l.b16 %v284
        %v676 = vunpack.c.l.b16 %v285
        %v677 = vunpack.c.l.b16 %v286
        %v678 = vunpack.c.l.b16 %v287
        %v679 = vunpack.c.l.b16 %v288
        %v680 = vunpack.c.l.b16 %v289
        %v681 = vunpack.c.l.b16 %v290
        %v682 = vunpack.c.l.b16 %v291
        %v683 = vunpack.c.l.b16 %v292
        %v684 = vunpack.c.l.b16 %v293
        %v685 = vunpack.c.l.b16 %v294
        %v686 = vunpack.c.l.b16 %v295
        %v687 = vunpack.c.l.b16 %v296
        %v688 = vpack.c.b16 %v657, %v656
        %v689 = vpack.c.b16 %v659, %v658
        %v690 = vpack.c.b16 %v661, %v660
        %v691 = vpack.c.b16 %v663, %v662
        %v692 = vpack.c.b16 %v665, %v664
        %v693 = vpack.c.b16 %v667, %v666
        %v694 = vpack.c.b16 %v669, %v668
        %v695 = vpack.c.b16 %v671, %v670
        %v696 = vpack.c.b16 %v673, %v672
        %v697 = vpack.c.b16 %v675, %v674
        %v698 = vpack.c.b16 %v677, %v676
        %v699 = vpack.c.b16 %v679, %v678
        %v700 = vpack.c.b16 %v681, %v680
        %v701 = vpack.c.b16 %v683, %v682
        %v702 = vpack.c.b16 %v685, %v684
        %v703 = vpack.c.b16 %v687, %v686
        %720 = vmatprep.subr.bf16.mxu0 0
        %721 = vmatpush1.bf16.msra.mxu0 %v688
        %722 = vmatprep.subr.bf16.mxu0 0
        %723 = vmatpush1.bf16.msra.mxu0 %v689
        %724 = vmatprep.subr.bf16.mxu0 0
        %725 = vmatpush1.bf16.msra.mxu0 %v690
        %726 = vmatprep.subr.bf16.mxu0 0
        %727 = vmatpush1.bf16.msra.mxu0 %v691
        %728 = vmatprep.subr.bf16.mxu0 0
        %729 = vmatpush1.bf16.msra.mxu0 %v692
        %730 = vmatprep.subr.bf16.mxu0 0
        %731 = vmatpush1.bf16.msra.mxu0 %v693
        %732 = vmatprep.subr.bf16.mxu0 0
        %733 = vmatpush1.bf16.msra.mxu0 %v694
        %734 = vmatprep.subr.bf16.mxu0 0
        %735 = vmatpush1.bf16.msra.mxu0 %v695
        %736 = vmatprep.subr.bf16.mxu0 0
        %737 = vmatpush1.bf16.msra.mxu0 %v696
        %738 = vmatprep.subr.bf16.mxu0 0
        %739 = vmatpush1.bf16.msra.mxu0 %v697
        %740 = vmatprep.subr.bf16.mxu0 0
        %741 = vmatpush1.bf16.msra.mxu0 %v698
        %742 = vmatprep.subr.bf16.mxu0 0
        %743 = vmatpush1.bf16.msra.mxu0 %v699
        %744 = vmatprep.subr.bf16.mxu0 0
        %745 = vmatpush1.bf16.msra.mxu0 %v700
        %746 = vmatprep.subr.bf16.mxu0 0
        %747 = vmatpush1.bf16.msra.mxu0 %v701
        %748 = vmatprep.subr.bf16.mxu0 0
        %749 = vmatpush1.bf16.msra.mxu0 %v702
        %750 = vmatprep.subr.bf16.mxu0 0
        %751 = vmatpush1.bf16.msra.mxu0 %v703
        %752 = vmatprep.mubr.bf16.mxu0 %v497
        %753 = vmatmul.mubr.bf16.gmra.mrb[0].mxu0 %v496
        %v754 = vpop.f32.mrb[0].mxu0
        %v755 = vadd.f32 %v302, %v754
        %v756 = vpop.f32.mrb[0].mxu0
        %v757 = vpop.f32.mrb[0].mxu0
        %v758 = vadd.f32 %v302, %v757
        %v759 = vpop.f32.mrb[0].mxu0
        %760 = vmatprep.mubr.bf16.mxu0 %v499
        %761 = vmatmul.mubr.bf16.gmra.mrb[0].mxu0 %v498
        %v762 = vpop.f32.mrb[0].mxu0
        %v763 = vadd.f32 %v302, %v762
        %v764 = vpop.f32.mrb[0].mxu0
        %v765 = vpop.f32.mrb[0].mxu0
        %v766 = vadd.f32 %v302, %v765
        %v767 = vpop.f32.mrb[0].mxu0
        %768 = vmatprep.mubr.bf16.mxu0 %v501
        %769 = vmatmul.mubr.bf16.gmra.mrb[0].mxu0 %v500
        %v770 = vpop.f32.mrb[0].mxu0
        %v771 = vadd.f32 %v302, %v770
        %v772 = vpop.f32.mrb[0].mxu0
        %v773 = vpop.f32.mrb[0].mxu0
        %v774 = vadd.f32 %v302, %v773
        %v775 = vpop.f32.mrb[0].mxu0
        %776 = vmatprep.mubr.bf16.mxu0 %v503
        %777 = vmatmul.mubr.bf16.gmra.mrb[0].mxu0 %v502
        %v778 = vpop.f32.mrb[0].mxu0
        %v779 = vadd.f32 %v302, %v778
        %v780 = vpop.f32.mrb[0].mxu0
        %v781 = vpop.f32.mrb[0].mxu0
        %v782 = vadd.f32 %v302, %v781
        %v783 = vpop.f32.mrb[0].mxu0
        %784 = vmatprep.mubr.bf16.mxu0 %v505
        %785 = vmatmul.mubr.bf16.gmra.mrb[0].mxu0 %v504
        %v786 = vpop.f32.mrb[0].mxu0
        %v787 = vadd.f32 %v302, %v786
        %v788 = vpop.f32.mrb[0].mxu0
        %v789 = vpop.f32.mrb[0].mxu0
        %v790 = vadd.f32 %v302, %v789
        %v791 = vpop.f32.mrb[0].mxu0
        %792 = vmatprep.mubr.bf16.mxu0 %v507
        %793 = vmatmul.mubr.bf16.gmra.mrb[0].mxu0 %v506
        %v794 = vpop.f32.mrb[0].mxu0
        %v795 = vadd.f32 %v302, %v794
        %v796 = vpop.f32.mrb[0].mxu0
        %v797 = vpop.f32.mrb[0].mxu0
        %v798 = vadd.f32 %v302, %v797
        %v799 = vpop.f32.mrb[0].mxu0
        %800 = vmatprep.mubr.bf16.mxu0 %v509
        %801 = vmatmul.mubr.bf16.gmra.mrb[0].mxu0 %v508
        %v802 = vpop.f32.mrb[0].mxu0
        %v803 = vadd.f32 %v302, %v802
        %v804 = vpop.f32.mrb[0].mxu0
        %v805 = vpop.f32.mrb[0].mxu0
        %v806 = vadd.f32 %v302, %v805
        %v807 = vpop.f32.mrb[0].mxu0
        %808 = vmatprep.mubr.bf16.mxu0 %v511
        %809 = vmatmul.mubr.bf16.gmra.mrb[0].mxu0 %v510
        %v810 = vpop.f32.mrb[0].mxu0
        %v811 = vadd.f32 %v302, %v810
        %v812 = vpop.f32.mrb[0].mxu0
        %v813 = vpop.f32.mrb[0].mxu0
        %v814 = vadd.f32 %v302, %v813
        %v815 = vpop.f32.mrb[0].mxu0
        %816 = vmatprep.mubr.bf16.mxu0 %v513
        %817 = vmatmul.mubr.bf16.gmra.mrb[0].mxu0 %v512
        %v818 = vpop.f32.mrb[0].mxu0
        %v819 = vadd.f32 %v302, %v818
        %v820 = vpop.f32.mrb[0].mxu0
        %v821 = vpop.f32.mrb[0].mxu0
        %v822 = vadd.f32 %v302, %v821
        %v823 = vpop.f32.mrb[0].mxu0
        %824 = vmatprep.mubr.bf16.mxu0 %v515
        %825 = vmatmul.mubr.bf16.gmra.mrb[0].mxu0 %v514
        %v826 = vpop.f32.mrb[0].mxu0
        %v827 = vadd.f32 %v302, %v826
        %v828 = vpop.f32.mrb[0].mxu0
        %v829 = vpop.f32.mrb[0].mxu0
        %v830 = vadd.f32 %v302, %v829
        %v831 = vpop.f32.mrb[0].mxu0
        %832 = vmatprep.mubr.bf16.mxu0 %v517
        %833 = vmatmul.mubr.bf16.gmra.mrb[0].mxu0 %v516
        %v834 = vpop.f32.mrb[0].mxu0
        %v835 = vadd.f32 %v302, %v834
        %v836 = vpop.f32.mrb[0].mxu0
        %v837 = vpop.f32.mrb[0].mxu0
        %v838 = vadd.f32 %v302, %v837
        %v839 = vpop.f32.mrb[0].mxu0
        %840 = vmatprep.mubr.bf16.mxu0 %v519
        %841 = vmatmul.mubr.bf16.gmra.mrb[0].mxu0 %v518
        %v842 = vpop.f32.mrb[0].mxu0
        %v843 = vadd.f32 %v302, %v842
        %v844 = vpop.f32.mrb[0].mxu0
        %v845 = vpop.f32.mrb[0].mxu0
        %v846 = vadd.f32 %v302, %v845
        %v847 = vpop.f32.mrb[0].mxu0
        %848 = vmatprep.mubr.bf16.mxu0 %v521
        %849 = vmatmul.mubr.bf16.gmra.mrb[0].mxu0 %v520
        %v850 = vpop.f32.mrb[0].mxu0
        %v851 = vadd.f32 %v302, %v850
        %v852 = vpop.f32.mrb[0].mxu0
        %v853 = vpop.f32.mrb[0].mxu0
        %v854 = vadd.f32 %v302, %v853
        %v855 = vpop.f32.mrb[0].mxu0
        %856 = vmatprep.mubr.bf16.mxu0 %v523
        %857 = vmatmul.mubr.bf16.gmra.mrb[0].mxu0 %v522
        %v858 = vpop.f32.mrb[0].mxu0
        %v859 = vadd.f32 %v302, %v858
        %v860 = vpop.f32.mrb[0].mxu0
        %v861 = vpop.f32.mrb[0].mxu0
        %v862 = vadd.f32 %v302, %v861
        %v863 = vpop.f32.mrb[0].mxu0
        %864 = vmatprep.mubr.bf16.mxu0 %v525
        %865 = vmatmul.mubr.bf16.gmra.mrb[0].mxu0 %v524
        %v866 = vpop.f32.mrb[0].mxu0
        %v867 = vadd.f32 %v302, %v866
        %v868 = vpop.f32.mrb[0].mxu0
        %v869 = vpop.f32.mrb[0].mxu0
        %v870 = vadd.f32 %v302, %v869
        %v871 = vpop.f32.mrb[0].mxu0
        %872 = vmatprep.mubr.bf16.mxu0 %v527
        %873 = vmatmul.mubr.bf16.gmra.mrb[0].mxu0 %v526
        %v874 = vpop.f32.mrb[0].mxu0
        %v875 = vadd.f32 %v302, %v874
        %v876 = vpop.f32.mrb[0].mxu0
        %v877 = vpop.f32.mrb[0].mxu0
        %v878 = vadd.f32 %v302, %v877
        %v879 = vpop.f32.mrb[0].mxu0
        %880 = vmatprep.mubr.bf16.mxu0 %v529
        %881 = vmatmul.mubr.bf16.gmra.mrb[0].mxu0 %v528
        %v882 = vpop.f32.mrb[0].mxu0
        %v883 = vadd.f32 %v302, %v882
        %v884 = vpop.f32.mrb[0].mxu0
        %v885 = vpop.f32.mrb[0].mxu0
        %v886 = vadd.f32 %v302, %v885
        %v887 = vpop.f32.mrb[0].mxu0
        %888 = vmatprep.mubr.bf16.mxu0 %v531
        %889 = vmatmul.mubr.bf16.gmra.mrb[0].mxu0 %v530
        %v890 = vpop.f32.mrb[0].mxu0
        %v891 = vadd.f32 %v302, %v890
        %v892 = vpop.f32.mrb[0].mxu0
        %v893 = vpop.f32.mrb[0].mxu0
        %v894 = vadd.f32 %v302, %v893
        %v895 = vpop.f32.mrb[0].mxu0
        %896 = vmatprep.mubr.bf16.mxu0 %v533
        %897 = vmatmul.mubr.bf16.gmra.mrb[0].mxu0 %v532
        %v898 = vpop.f32.mrb[0].mxu0
        %v899 = vadd.f32 %v302, %v898
        %v900 = vpop.f32.mrb[0].mxu0
        %v901 = vpop.f32.mrb[0].mxu0
        %v902 = vadd.f32 %v302, %v901
        %v903 = vpop.f32.mrb[0].mxu0
        %904 = vmatprep.mubr.bf16.mxu0 %v535
        %905 = vmatmul.mubr.bf16.gmra.mrb[0].mxu0 %v534
        %v906 = vpop.f32.mrb[0].mxu0
        %v907 = vadd.f32 %v302, %v906
        %v908 = vpop.f32.mrb[0].mxu0
        %v909 = vpop.f32.mrb[0].mxu0
        %v910 = vadd.f32 %v302, %v909
        %v911 = vpop.f32.mrb[0].mxu0
        %912 = vmatprep.mubr.bf16.mxu0 %v537
        %913 = vmatmul.mubr.bf16.gmra.mrb[0].mxu0 %v536
        %v914 = vpop.f32.mrb[0].mxu0
        %v915 = vadd.f32 %v302, %v914
        %v916 = vpop.f32.mrb[0].mxu0
        %v917 = vpop.f32.mrb[0].mxu0
        %v918 = vadd.f32 %v302, %v917
        %v919 = vpop.f32.mrb[0].mxu0
        %920 = vmatprep.mubr.bf16.mxu0 %v539
        %921 = vmatmul.mubr.bf16.gmra.mrb[0].mxu0 %v538
        %v922 = vpop.f32.mrb[0].mxu0
        %v923 = vadd.f32 %v302, %v922
        %v924 = vpop.f32.mrb[0].mxu0
        %v925 = vpop.f32.mrb[0].mxu0
        %v926 = vadd.f32 %v302, %v925
        %v927 = vpop.f32.mrb[0].mxu0
        %928 = vmatprep.mubr.bf16.mxu0 %v541
        %929 = vmatmul.mubr.bf16.gmra.mrb[0].mxu0 %v540
        %v930 = vpop.f32.mrb[0].mxu0
        %v931 = vadd.f32 %v302, %v930
        %v932 = vpop.f32.mrb[0].mxu0
        %v933 = vpop.f32.mrb[0].mxu0
        %v934 = vadd.f32 %v302, %v933
        %v935 = vpop.f32.mrb[0].mxu0
        %936 = vmatprep.mubr.bf16.mxu0 %v543
        %937 = vmatmul.mubr.bf16.gmra.mrb[0].mxu0 %v542
        %v938 = vpop.f32.mrb[0].mxu0
        %v939 = vadd.f32 %v302, %v938
        %v940 = vpop.f32.mrb[0].mxu0
        %v941 = vpop.f32.mrb[0].mxu0
        %v942 = vadd.f32 %v302, %v941
        %v943 = vpop.f32.mrb[0].mxu0
        %944 = vmatprep.mubr.bf16.mxu0 %v545
        %945 = vmatmul.mubr.bf16.gmra.mrb[0].mxu0 %v544
        %v946 = vpop.f32.mrb[0].mxu0
        %v947 = vadd.f32 %v302, %v946
        %v948 = vpop.f32.mrb[0].mxu0
        %v949 = vpop.f32.mrb[0].mxu0
        %v950 = vadd.f32 %v302, %v949
        %v951 = vpop.f32.mrb[0].mxu0
        %952 = vmatprep.mubr.bf16.mxu0 %v547
        %953 = vmatmul.mubr.bf16.gmra.mrb[0].mxu0 %v546
        %v954 = vpop.f32.mrb[0].mxu0
        %v955 = vadd.f32 %v302, %v954
        %v956 = vpop.f32.mrb[0].mxu0
        %v957 = vpop.f32.mrb[0].mxu0
        %v958 = vadd.f32 %v302, %v957
        %v959 = vpop.f32.mrb[0].mxu0
        %960 = vmatprep.mubr.bf16.mxu0 %v549
        %961 = vmatmul.mubr.bf16.gmra.mrb[0].mxu0 %v548
        %v962 = vpop.f32.mrb[0].mxu0
        %v963 = vadd.f32 %v302, %v962
        %v964 = vpop.f32.mrb[0].mxu0
        %v965 = vpop.f32.mrb[0].mxu0
        %v966 = vadd.f32 %v302, %v965
        %v967 = vpop.f32.mrb[0].mxu0
        %968 = vmatprep.mubr.bf16.mxu0 %v551
        %969 = vmatmul.mubr.bf16.gmra.mrb[0].mxu0 %v550
        %v970 = vpop.f32.mrb[0].mxu0
        %v971 = vadd.f32 %v302, %v970
        %v972 = vpop.f32.mrb[0].mxu0
        %v973 = vpop.f32.mrb[0].mxu0
        %v974 = vadd.f32 %v302, %v973
        %v975 = vpop.f32.mrb[0].mxu0
        %976 = vmatprep.mubr.bf16.mxu0 %v553
        %977 = vmatmul.mubr.bf16.gmra.mrb[0].mxu0 %v552
        %v978 = vpop.f32.mrb[0].mxu0
        %v979 = vadd.f32 %v302, %v978
        %v980 = vpop.f32.mrb[0].mxu0
        %v981 = vpop.f32.mrb[0].mxu0
        %v982 = vadd.f32 %v302, %v981
        %v983 = vpop.f32.mrb[0].mxu0
        %984 = vmatprep.mubr.bf16.mxu0 %v555
        %985 = vmatmul.mubr.bf16.gmra.mrb[0].mxu0 %v554
        %v986 = vpop.f32.mrb[0].mxu0
        %v987 = vadd.f32 %v302, %v986
        %v988 = vpop.f32.mrb[0].mxu0
        %v989 = vpop.f32.mrb[0].mxu0
        %v990 = vadd.f32 %v302, %v989
        %v991 = vpop.f32.mrb[0].mxu0
        %992 = vmatprep.mubr.bf16.mxu0 %v557
        %993 = vmatmul.mubr.bf16.gmra.mrb[0].mxu0 %v556
        %v994 = vpop.f32.mrb[0].mxu0
        %v995 = vadd.f32 %v302, %v994
        %v996 = vpop.f32.mrb[0].mxu0
        %v997 = vpop.f32.mrb[0].mxu0
        %v998 = vadd.f32 %v302, %v997
        %v999 = vpop.f32.mrb[0].mxu0
        %1000 = vmatprep.mubr.bf16.mxu0 %v559
        %1001 = vmatmul.mubr.bf16.gmra.mrb[0].mxu0 %v558
        %v1002 = vpop.f32.mrb[0].mxu0
        %v1003 = vadd.f32 %v302, %v1002
        %v1004 = vpop.f32.mrb[0].mxu0
        %v1005 = vpop.f32.mrb[0].mxu0
        %v1006 = vadd.f32 %v302, %v1005
        %v1007 = vpop.f32.mrb[0].mxu0
        %1008 = vdwg.mxu0
        %v1009 = vmax.f32 %v755, 0.0
        %v1010 = vmax.f32 %v758, 0.0
        %v1011 = vmax.f32 %v763, 0.0
        %v1012 = vmax.f32 %v766, 0.0
        %v1013 = vmax.f32 %v771, 0.0
        %v1014 = vmax.f32 %v774, 0.0
        %v1015 = vmax.f32 %v779, 0.0
        %v1016 = vmax.f32 %v782, 0.0
        %v1017 = vmax.f32 %v787, 0.0
        %v1018 = vmax.f32 %v790, 0.0
        %v1019 = vmax.f32 %v795, 0.0
        %v1020 = vmax.f32 %v798, 0.0
        %v1021 = vmax.f32 %v803, 0.0
        %v1022 = vmax.f32 %v806, 0.0
        %v1023 = vmax.f32 %v811, 0.0
        %v1024 = vmax.f32 %v814, 0.0
        %v1025 = vmax.f32 %v819, 0.0
        %v1026 = vmax.f32 %v822, 0.0
        %v1027 = vmax.f32 %v827, 0.0
        %v1028 = vmax.f32 %v830, 0.0
        %v1029 = vmax.f32 %v835, 0.0
        %v1030 = vmax.f32 %v838, 0.0
        %v1031 = vmax.f32 %v843, 0.0
        %v1032 = vmax.f32 %v846, 0.0
        %v1033 = vmax.f32 %v851, 0.0
        %v1034 = vmax.f32 %v854, 0.0
        %v1035 = vmax.f32 %v859, 0.0
        %v1036 = vmax.f32 %v862, 0.0
        %v1037 = vmax.f32 %v867, 0.0
        %v1038 = vmax.f32 %v870, 0.0
        %v1039 = vmax.f32 %v875, 0.0
        %v1040 = vmax.f32 %v878, 0.0
        %v1041 = vmax.f32 %v883, 0.0
        %v1042 = vmax.f32 %v886, 0.0
        %v1043 = vmax.f32 %v891, 0.0
        %v1044 = vmax.f32 %v894, 0.0
        %v1045 = vmax.f32 %v899, 0.0
        %v1046 = vmax.f32 %v902, 0.0
        %v1047 = vmax.f32 %v907, 0.0
        %v1048 = vmax.f32 %v910, 0.0
        %v1049 = vmax.f32 %v915, 0.0
        %v1050 = vmax.f32 %v918, 0.0
        %v1051 = vmax.f32 %v923, 0.0
        %v1052 = vmax.f32 %v926, 0.0
        %v1053 = vmax.f32 %v931, 0.0
        %v1054 = vmax.f32 %v934, 0.0
        %v1055 = vmax.f32 %v939, 0.0
        %v1056 = vmax.f32 %v942, 0.0
        %v1057 = vmax.f32 %v947, 0.0
        %v1058 = vmax.f32 %v950, 0.0
        %v1059 = vmax.f32 %v955, 0.0
        %v1060 = vmax.f32 %v958, 0.0
        %v1061 = vmax.f32 %v963, 0.0
        %v1062 = vmax.f32 %v966, 0.0
        %v1063 = vmax.f32 %v971, 0.0
        %v1064 = vmax.f32 %v974, 0.0
        %v1065 = vmax.f32 %v979, 0.0
        %v1066 = vmax.f32 %v982, 0.0
        %v1067 = vmax.f32 %v987, 0.0
        %v1068 = vmax.f32 %v990, 0.0
        %v1069 = vmax.f32 %v995, 0.0
        %v1070 = vmax.f32 %v998, 0.0
        %v1071 = vmax.f32 %v1003, 0.0
        %v1072 = vmax.f32 %v1006, 0.0
        %v1073 = vpack.c.bf16 %v1010, %v1009
        %v1074 = vpack.c.bf16 %v1012, %v1011
        %v1075 = vpack.c.bf16 %v1014, %v1013
        %v1076 = vpack.c.bf16 %v1016, %v1015
        %v1077 = vpack.c.bf16 %v1018, %v1017
        %v1078 = vpack.c.bf16 %v1020, %v1019
        %v1079 = vpack.c.bf16 %v1022, %v1021
        %v1080 = vpack.c.bf16 %v1024, %v1023
        %v1081 = vpack.c.bf16 %v1026, %v1025
        %v1082 = vpack.c.bf16 %v1028, %v1027
        %v1083 = vpack.c.bf16 %v1030, %v1029
        %v1084 = vpack.c.bf16 %v1032, %v1031
        %v1085 = vpack.c.bf16 %v1034, %v1033
        %v1086 = vpack.c.bf16 %v1036, %v1035
        %v1087 = vpack.c.bf16 %v1038, %v1037
        %v1088 = vpack.c.bf16 %v1040, %v1039
        %v1089 = vpack.c.bf16 %v1042, %v1041
        %v1090 = vpack.c.bf16 %v1044, %v1043
        %v1091 = vpack.c.bf16 %v1046, %v1045
        %v1092 = vpack.c.bf16 %v1048, %v1047
        %v1093 = vpack.c.bf16 %v1050, %v1049
        %v1094 = vpack.c.bf16 %v1052, %v1051
        %v1095 = vpack.c.bf16 %v1054, %v1053
        %v1096 = vpack.c.bf16 %v1056, %v1055
        %v1097 = vpack.c.bf16 %v1058, %v1057
        %v1098 = vpack.c.bf16 %v1060, %v1059
        %v1099 = vpack.c.bf16 %v1062, %v1061
        %v1100 = vpack.c.bf16 %v1064, %v1063
        %v1101 = vpack.c.bf16 %v1066, %v1065
        %v1102 = vpack.c.bf16 %v1068, %v1067
        %v1103 = vpack.c.bf16 %v1070, %v1069
        %v1104 = vpack.c.bf16 %v1072, %v1071
        %v1137 = vunpack.c.l.b16 %v1073
        %v1138 = vunpack.c.h.b16 %v1073
        %v1139 = vunpack.c.l.b16 %v1074
        %v1140 = vunpack.c.h.b16 %v1074
        %v1141 = vunpack.c.l.b16 %v1075
        %v1142 = vunpack.c.h.b16 %v1075
        %v1143 = vunpack.c.l.b16 %v1076
        %v1144 = vunpack.c.h.b16 %v1076
        %v1145 = vunpack.c.l.b16 %v1077
        %v1146 = vunpack.c.h.b16 %v1077
        %v1147 = vunpack.c.l.b16 %v1078
        %v1148 = vunpack.c.h.b16 %v1078
        %v1149 = vunpack.c.l.b16 %v1079
        %v1150 = vunpack.c.h.b16 %v1079
        %v1151 = vunpack.c.l.b16 %v1080
        %v1152 = vunpack.c.h.b16 %v1080
        %v1153 = vunpack.c.l.b16 %v1081
        %v1154 = vunpack.c.h.b16 %v1081
        %v1155 = vunpack.c.l.b16 %v1082
        %v1156 = vunpack.c.h.b16 %v1082
        %v1157 = vunpack.c.l.b16 %v1083
        %v1158 = vunpack.c.h.b16 %v1083
        %v1159 = vunpack.c.l.b16 %v1084
        %v1160 = vunpack.c.h.b16 %v1084
        %v1161 = vunpack.c.l.b16 %v1085
        %v1162 = vunpack.c.h.b16 %v1085
        %v1163 = vunpack.c.l.b16 %v1086
        %v1164 = vunpack.c.h.b16 %v1086
        %v1165 = vunpack.c.l.b16 %v1087
        %v1166 = vunpack.c.h.b16 %v1087
        %v1167 = vunpack.c.l.b16 %v1088
        %v1168 = vunpack.c.h.b16 %v1088
        %v1169 = vunpack.c.l.b16 %v1089
        %v1170 = vunpack.c.h.b16 %v1089
        %v1171 = vunpack.c.l.b16 %v1090
        %v1172 = vunpack.c.h.b16 %v1090
        %v1173 = vunpack.c.l.b16 %v1091
        %v1174 = vunpack.c.h.b16 %v1091
        %v1175 = vunpack.c.l.b16 %v1092
        %v1176 = vunpack.c.h.b16 %v1092
        %v1177 = vunpack.c.l.b16 %v1093
        %v1178 = vunpack.c.h.b16 %v1093
        %v1179 = vunpack.c.l.b16 %v1094
        %v1180 = vunpack.c.h.b16 %v1094
        %v1181 = vunpack.c.l.b16 %v1095
        %v1182 = vunpack.c.h.b16 %v1095
        %v1183 = vunpack.c.l.b16 %v1096
        %v1184 = vunpack.c.h.b16 %v1096
        %v1185 = vunpack.c.l.b16 %v1097
        %v1186 = vunpack.c.h.b16 %v1097
        %v1187 = vunpack.c.l.b16 %v1098
        %v1188 = vunpack.c.h.b16 %v1098
        %v1189 = vunpack.c.l.b16 %v1099
        %v1190 = vunpack.c.h.b16 %v1099
        %v1191 = vunpack.c.l.b16 %v1100
        %v1192 = vunpack.c.h.b16 %v1100
        %v1193 = vunpack.c.l.b16 %v1101
        %v1194 = vunpack.c.h.b16 %v1101
        %v1195 = vunpack.c.l.b16 %v1102
        %v1196 = vunpack.c.h.b16 %v1102
        %v1197 = vunpack.c.l.b16 %v1103
        %v1198 = vunpack.c.h.b16 %v1103
        %v1199 = vunpack.c.l.b16 %v1104
        %v1200 = vunpack.c.h.b16 %v1104
        %v1201 = vpack.c.b16 %v1137, %v1137
        %v1202 = vpack.c.b16 %v1138, %v1138
        %v1203 = vpack.c.b16 %v1139, %v1139
        %v1204 = vpack.c.b16 %v1140, %v1140
        %v1205 = vpack.c.b16 %v1141, %v1141
        %v1206 = vpack.c.b16 %v1142, %v1142
        %v1207 = vpack.c.b16 %v1143, %v1143
        %v1208 = vpack.c.b16 %v1144, %v1144
        %v1209 = vpack.c.b16 %v1145, %v1145
        %v1210 = vpack.c.b16 %v1146, %v1146
        %v1211 = vpack.c.b16 %v1147, %v1147
        %v1212 = vpack.c.b16 %v1148, %v1148
        %v1213 = vpack.c.b16 %v1149, %v1149
        %v1214 = vpack.c.b16 %v1150, %v1150
        %v1215 = vpack.c.b16 %v1151, %v1151
        %v1216 = vpack.c.b16 %v1152, %v1152
        %v1217 = vpack.c.b16 %v1153, %v1153
        %v1218 = vpack.c.b16 %v1154, %v1154
        %v1219 = vpack.c.b16 %v1155, %v1155
        %v1220 = vpack.c.b16 %v1156, %v1156
        %v1221 = vpack.c.b16 %v1157, %v1157
        %v1222 = vpack.c.b16 %v1158, %v1158
        %v1223 = vpack.c.b16 %v1159, %v1159
        %v1224 = vpack.c.b16 %v1160, %v1160
        %v1225 = vpack.c.b16 %v1161, %v1161
        %v1226 = vpack.c.b16 %v1162, %v1162
        %v1227 = vpack.c.b16 %v1163, %v1163
        %v1228 = vpack.c.b16 %v1164, %v1164
        %v1229 = vpack.c.b16 %v1165, %v1165
        %v1230 = vpack.c.b16 %v1166, %v1166
        %v1231 = vpack.c.b16 %v1167, %v1167
        %v1232 = vpack.c.b16 %v1168, %v1168
        %v1233 = vpack.c.b16 %v1169, %v1169
        %v1234 = vpack.c.b16 %v1170, %v1170
        %v1235 = vpack.c.b16 %v1171, %v1171
        %v1236 = vpack.c.b16 %v1172, %v1172
        %v1237 = vpack.c.b16 %v1173, %v1173
        %v1238 = vpack.c.b16 %v1174, %v1174
        %v1239 = vpack.c.b16 %v1175, %v1175
        %v1240 = vpack.c.b16 %v1176, %v1176
        %v1241 = vpack.c.b16 %v1177, %v1177
        %v1242 = vpack.c.b16 %v1178, %v1178
        %v1243 = vpack.c.b16 %v1179, %v1179
        %v1244 = vpack.c.b16 %v1180, %v1180
        %v1245 = vpack.c.b16 %v1181, %v1181
        %v1246 = vpack.c.b16 %v1182, %v1182
        %v1247 = vpack.c.b16 %v1183, %v1183
        %v1248 = vpack.c.b16 %v1184, %v1184
        %v1249 = vpack.c.b16 %v1185, %v1185
        %v1250 = vpack.c.b16 %v1186, %v1186
        %v1251 = vpack.c.b16 %v1187, %v1187
        %v1252 = vpack.c.b16 %v1188, %v1188
        %v1253 = vpack.c.b16 %v1189, %v1189
        %v1254 = vpack.c.b16 %v1190, %v1190
        %v1255 = vpack.c.b16 %v1191, %v1191
        %v1256 = vpack.c.b16 %v1192, %v1192
        %v1257 = vpack.c.b16 %v1193, %v1193
        %v1258 = vpack.c.b16 %v1194, %v1194
        %v1259 = vpack.c.b16 %v1195, %v1195
        %v1260 = vpack.c.b16 %v1196, %v1196
        %v1261 = vpack.c.b16 %v1197, %v1197
        %v1262 = vpack.c.b16 %v1198, %v1198
        %v1263 = vpack.c.b16 %v1199, %v1199
        %v1264 = vpack.c.b16 %v1200, %v1200
        %1329 = vst [vmem:[%s177] sm:$0xf] %v1201
        %1330 = vst [vmem:[%s177 + $0x4] sm:$0xf] %v1202
        %1331 = vst [vmem:[%s177 + $0x8] sm:$0xf] %v1203
        %1332 = vst [vmem:[%s177 + $0xc] sm:$0xf] %v1204
        %1333 = vst [vmem:[%s177 + $0x10] sm:$0xf] %v1205
        %1334 = vst [vmem:[%s177 + $0x14] sm:$0xf] %v1206
        %1335 = vst [vmem:[%s177 + $0x18] sm:$0xf] %v1207
        %1336 = vst [vmem:[%s177 + $0x1c] sm:$0xf] %v1208
        %1337 = vst [vmem:[%s177 + $0x20] sm:$0xf] %v1209
        %1338 = vst [vmem:[%s177 + $0x24] sm:$0xf] %v1210
        %1339 = vst [vmem:[%s177 + $0x28] sm:$0xf] %v1211
        %1340 = vst [vmem:[%s177 + $0x2c] sm:$0xf] %v1212
        %1341 = vst [vmem:[%s177 + $0x30] sm:$0xf] %v1213
        %1342 = vst [vmem:[%s177 + $0x34] sm:$0xf] %v1214
        %1343 = vst [vmem:[%s177 + $0x38] sm:$0xf] %v1215
        %1344 = vst [vmem:[%s177 + $0x3c] sm:$0xf] %v1216
        %1345 = vst [vmem:[%s177 + $0x40] sm:$0xf] %v1217
        %1346 = vst [vmem:[%s177 + $0x44] sm:$0xf] %v1218
        %1347 = vst [vmem:[%s177 + $0x48] sm:$0xf] %v1219
        %1348 = vst [vmem:[%s177 + $0x4c] sm:$0xf] %v1220
        %1349 = vst [vmem:[%s177 + $0x50] sm:$0xf] %v1221
        %1350 = vst [vmem:[%s177 + $0x54] sm:$0xf] %v1222
        %1351 = vst [vmem:[%s177 + $0x58] sm:$0xf] %v1223
        %1352 = vst [vmem:[%s177 + $0x5c] sm:$0xf] %v1224
        %1353 = vst [vmem:[%s177 + $0x60] sm:$0xf] %v1225
        %1354 = vst [vmem:[%s177 + $0x64] sm:$0xf] %v1226
        %1355 = vst [vmem:[%s177 + $0x68] sm:$0xf] %v1227
        %1356 = vst [vmem:[%s177 + $0x6c] sm:$0xf] %v1228
        %1357 = vst [vmem:[%s177 + $0x70] sm:$0xf] %v1229
        %1358 = vst [vmem:[%s177 + $0x74] sm:$0xf] %v1230
        %1359 = vst [vmem:[%s177 + $0x78] sm:$0xf] %v1231
        %1360 = vst [vmem:[%s177 + $0x7c] sm:$0xf] %v1232
        %1361 = vst [vmem:[%s177 + $0x80] sm:$0xf] %v1233
        %1362 = vst [vmem:[%s177 + $0x84] sm:$0xf] %v1234
        %1363 = vst [vmem:[%s177 + $0x88] sm:$0xf] %v1235
        %1364 = vst [vmem:[%s177 + $0x8c] sm:$0xf] %v1236
        %1365 = vst [vmem:[%s177 + $0x90] sm:$0xf] %v1237
        %1366 = vst [vmem:[%s177 + $0x94] sm:$0xf] %v1238
        %1367 = vst [vmem:[%s177 + $0x98] sm:$0xf] %v1239
        %1368 = vst [vmem:[%s177 + $0x9c] sm:$0xf] %v1240
        %1369 = vst [vmem:[%s177 + $0xa0] sm:$0xf] %v1241
        %1370 = vst [vmem:[%s177 + $0xa4] sm:$0xf] %v1242
        %1371 = vst [vmem:[%s177 + $0xa8] sm:$0xf] %v1243
        %1372 = vst [vmem:[%s177 + $0xac] sm:$0xf] %v1244
        %1373 = vst [vmem:[%s177 + $0xb0] sm:$0xf] %v1245
        %1374 = vst [vmem:[%s177 + $0xb4] sm:$0xf] %v1246
        %1375 = vst [vmem:[%s177 + $0xb8] sm:$0xf] %v1247
        %1376 = vst [vmem:[%s177 + $0xbc] sm:$0xf] %v1248
        %1377 = vst [vmem:[%s177 + $0xc0] sm:$0xf] %v1249
        %1378 = vst [vmem:[%s177 + $0xc4] sm:$0xf] %v1250
        %1379 = vst [vmem:[%s177 + $0xc8] sm:$0xf] %v1251
        %1380 = vst [vmem:[%s177 + $0xcc] sm:$0xf] %v1252
        %1381 = vst [vmem:[%s177 + $0xd0] sm:$0xf] %v1253
        %1382 = vst [vmem:[%s177 + $0xd4] sm:$0xf] %v1254
        %1383 = vst [vmem:[%s177 + $0xd8] sm:$0xf] %v1255
        %1384 = vst [vmem:[%s177 + $0xdc] sm:$0xf] %v1256
        %1385 = vst [vmem:[%s177 + $0xe0] sm:$0xf] %v1257
        %1386 = vst [vmem:[%s177 + $0xe4] sm:$0xf] %v1258
        %1387 = vst [vmem:[%s177 + $0xe8] sm:$0xf] %v1259
        %1388 = vst [vmem:[%s177 + $0xec] sm:$0xf] %v1260
        %1389 = vst [vmem:[%s177 + $0xf0] sm:$0xf] %v1261
        %1390 = vst [vmem:[%s177 + $0xf4] sm:$0xf] %v1262
        %1391 = vst [vmem:[%s177 + $0xf8] sm:$0xf] %v1263
        %1392 = vst [vmem:[%s177 + $0xfc] sm:$0xf] %v1264
        %s1393 = sand.u32 %s90, 1
        %s1394 = sand.u32 %s90, 1
        %s1395 = smul.addr %s1394, 256
        %s1396 = scalar_lea.vmem [#allocation2], %s1395
        // Predicated region
        $region33: #{_lambda_.4} parent=31 // pred_check
          %p1397 = pneg %p100
        $region34: #{_lambda_.4} parent=31 // pred_check_branch
          %1399 = sbr.rel (%p1397) target = $region36
        $region35: #{_lambda_.4} parent=31 // pred_region
          %s1400 = smul.u32 64, %s14
          %s1401 = ssub.s32 91, %s1400
          %p1402 = scmp.lt.s32.totalorder %s1401, 64
          %s1403 = scalar_select %p1402, %s1401, 64
          %s1404 = smul.u32 64, %s1403
          %p1405 = scmp.ne.s32.totalorder 0, %s1404
          %s1406 = smul.addr %s1400, 4
          %s1407 = scalar_lea.vmem %s3, %s1406
          // Predicated region
          $region37: #{_lambda_.4} parent=35 // pred_check
            %p1408 = pneg %p1405
          $region38: #{_lambda_.4} parent=35 // pred_check_branch
            %1410 = sbr.rel (%p1408) target = $region40
          $region39: #{_lambda_.4} parent=35 // pred_region
            // Predicated region
            $region41: #{_lambda_.4} parent=39 // pred_check
              _
            $region42: #{_lambda_.4} parent=39 // pred_check_branch
              %1412 = sbr.rel target = $region44
            $region43: #{_lambda_.4} parent=39 // pred_region
              // Predicated region
              $region63: #{_lambda_.4} parent=43 // pred_check
                _
              $region64: #{_lambda_.4} parent=43 // pred_check_branch
                %1587 = sbr.rel (0) target = $region66
              $region65: #{_lambda_.4} parent=43 // pred_region
                %s1589 = sshrl.u32 %s1403, 6
                // While loop
                $region67: #{_lambda_.4} parent=65 // loop_pre_header
                  _
                $region68: #{_lambda_.4} parent=65 // loop_header
                  %s1591 = sphi 0, %s1593
                  %p1592 = scmp.ge.s32.totalorder %s1591, %s1589
                  %s1596 = sphi 0, %s1729
                  %s1597 = sphi %s1396, %s1732
                  %s1598 = sphi %s1407, %s1733
                $region69: #{_lambda_.4} parent=65 // loop_header_branch
                  %1595 = sbr.rel (%p1592) target = $region73
                $region70: #{_lambda_.4} parent=65 // loop_body
                  %v1599 = vld [vmem:[%s1597] sm:$0xf]
                  %1600 = vst [vmem:[%s1598] sm:$0xf] %v1599
                  %v1601 = vld [vmem:[%s1597 + $0x4] sm:$0xf]
                  %1602 = vst [vmem:[%s1598 + $0x4] sm:$0xf] %v1601
                  %v1603 = vld [vmem:[%s1597 + $0x8] sm:$0xf]
                  %1604 = vst [vmem:[%s1598 + $0x8] sm:$0xf] %v1603
                  %v1605 = vld [vmem:[%s1597 + $0xc] sm:$0xf]
                  %1606 = vst [vmem:[%s1598 + $0xc] sm:$0xf] %v1605
                  %v1607 = vld [vmem:[%s1597 + $0x10] sm:$0xf]
                  %1608 = vst [vmem:[%s1598 + $0x10] sm:$0xf] %v1607
                  %v1609 = vld [vmem:[%s1597 + $0x14] sm:$0xf]
                  %1610 = vst [vmem:[%s1598 + $0x14] sm:$0xf] %v1609
                  %v1611 = vld [vmem:[%s1597 + $0x18] sm:$0xf]
                  %1612 = vst [vmem:[%s1598 + $0x18] sm:$0xf] %v1611
                  %v1613 = vld [vmem:[%s1597 + $0x1c] sm:$0xf]
                  %1614 = vst [vmem:[%s1598 + $0x1c] sm:$0xf] %v1613
                  %v1615 = vld [vmem:[%s1597 + $0x20] sm:$0xf]
                  %1616 = vst [vmem:[%s1598 + $0x20] sm:$0xf] %v1615
                  %v1617 = vld [vmem:[%s1597 + $0x24] sm:$0xf]
                  %1618 = vst [vmem:[%s1598 + $0x24] sm:$0xf] %v1617
                  %v1619 = vld [vmem:[%s1597 + $0x28] sm:$0xf]
                  %1620 = vst [vmem:[%s1598 + $0x28] sm:$0xf] %v1619
                  %v1621 = vld [vmem:[%s1597 + $0x2c] sm:$0xf]
                  %1622 = vst [vmem:[%s1598 + $0x2c] sm:$0xf] %v1621
                  %v1623 = vld [vmem:[%s1597 + $0x30] sm:$0xf]
                  %1624 = vst [vmem:[%s1598 + $0x30] sm:$0xf] %v1623
                  %v1625 = vld [vmem:[%s1597 + $0x34] sm:$0xf]
                  %1626 = vst [vmem:[%s1598 + $0x34] sm:$0xf] %v1625
                  %v1627 = vld [vmem:[%s1597 + $0x38] sm:$0xf]
                  %1628 = vst [vmem:[%s1598 + $0x38] sm:$0xf] %v1627
                  %v1629 = vld [vmem:[%s1597 + $0x3c] sm:$0xf]
                  %1630 = vst [vmem:[%s1598 + $0x3c] sm:$0xf] %v1629
                  %v1631 = vld [vmem:[%s1597 + $0x40] sm:$0xf]
                  %1632 = vst [vmem:[%s1598 + $0x40] sm:$0xf] %v1631
                  %v1633 = vld [vmem:[%s1597 + $0x44] sm:$0xf]
                  %1634 = vst [vmem:[%s1598 + $0x44] sm:$0xf] %v1633
                  %v1635 = vld [vmem:[%s1597 + $0x48] sm:$0xf]
                  %1636 = vst [vmem:[%s1598 + $0x48] sm:$0xf] %v1635
                  %v1637 = vld [vmem:[%s1597 + $0x4c] sm:$0xf]
                  %1638 = vst [vmem:[%s1598 + $0x4c] sm:$0xf] %v1637
                  %v1639 = vld [vmem:[%s1597 + $0x50] sm:$0xf]
                  %1640 = vst [vmem:[%s1598 + $0x50] sm:$0xf] %v1639
                  %v1641 = vld [vmem:[%s1597 + $0x54] sm:$0xf]
                  %1642 = vst [vmem:[%s1598 + $0x54] sm:$0xf] %v1641
                  %v1643 = vld [vmem:[%s1597 + $0x58] sm:$0xf]
                  %1644 = vst [vmem:[%s1598 + $0x58] sm:$0xf] %v1643
                  %v1645 = vld [vmem:[%s1597 + $0x5c] sm:$0xf]
                  %1646 = vst [vmem:[%s1598 + $0x5c] sm:$0xf] %v1645
                  %v1647 = vld [vmem:[%s1597 + $0x60] sm:$0xf]
                  %1648 = vst [vmem:[%s1598 + $0x60] sm:$0xf] %v1647
                  %v1649 = vld [vmem:[%s1597 + $0x64] sm:$0xf]
                  %1650 = vst [vmem:[%s1598 + $0x64] sm:$0xf] %v1649
                  %v1651 = vld [vmem:[%s1597 + $0x68] sm:$0xf]
                  %1652 = vst [vmem:[%s1598 + $0x68] sm:$0xf] %v1651
                  %v1653 = vld [vmem:[%s1597 + $0x6c] sm:$0xf]
                  %1654 = vst [vmem:[%s1598 + $0x6c] sm:$0xf] %v1653
                  %v1655 = vld [vmem:[%s1597 + $0x70] sm:$0xf]
                  %1656 = vst [vmem:[%s1598 + $0x70] sm:$0xf] %v1655
                  %v1657 = vld [vmem:[%s1597 + $0x74] sm:$0xf]
                  %1658 = vst [vmem:[%s1598 + $0x74] sm:$0xf] %v1657
                  %v1659 = vld [vmem:[%s1597 + $0x78] sm:$0xf]
                  %1660 = vst [vmem:[%s1598 + $0x78] sm:$0xf] %v1659
                  %v1661 = vld [vmem:[%s1597 + $0x7c] sm:$0xf]
                  %1662 = vst [vmem:[%s1598 + $0x7c] sm:$0xf] %v1661
                  %v1663 = vld [vmem:[%s1597 + $0x80] sm:$0xf]
                  %1664 = vst [vmem:[%s1598 + $0x80] sm:$0xf] %v1663
                  %v1665 = vld [vmem:[%s1597 + $0x84] sm:$0xf]
                  %1666 = vst [vmem:[%s1598 + $0x84] sm:$0xf] %v1665
                  %v1667 = vld [vmem:[%s1597 + $0x88] sm:$0xf]
                  %1668 = vst [vmem:[%s1598 + $0x88] sm:$0xf] %v1667
                  %v1669 = vld [vmem:[%s1597 + $0x8c] sm:$0xf]
                  %1670 = vst [vmem:[%s1598 + $0x8c] sm:$0xf] %v1669
                  %v1671 = vld [vmem:[%s1597 + $0x90] sm:$0xf]
                  %1672 = vst [vmem:[%s1598 + $0x90] sm:$0xf] %v1671
                  %v1673 = vld [vmem:[%s1597 + $0x94] sm:$0xf]
                  %1674 = vst [vmem:[%s1598 + $0x94] sm:$0xf] %v1673
                  %v1675 = vld [vmem:[%s1597 + $0x98] sm:$0xf]
                  %1676 = vst [vmem:[%s1598 + $0x98] sm:$0xf] %v1675
                  %v1677 = vld [vmem:[%s1597 + $0x9c] sm:$0xf]
                  %1678 = vst [vmem:[%s1598 + $0x9c] sm:$0xf] %v1677
                  %v1679 = vld [vmem:[%s1597 + $0xa0] sm:$0xf]
                  %1680 = vst [vmem:[%s1598 + $0xa0] sm:$0xf] %v1679
                  %v1681 = vld [vmem:[%s1597 + $0xa4] sm:$0xf]
                  %1682 = vst [vmem:[%s1598 + $0xa4] sm:$0xf] %v1681
                  %v1683 = vld [vmem:[%s1597 + $0xa8] sm:$0xf]
                  %1684 = vst [vmem:[%s1598 + $0xa8] sm:$0xf] %v1683
                  %v1685 = vld [vmem:[%s1597 + $0xac] sm:$0xf]
                  %1686 = vst [vmem:[%s1598 + $0xac] sm:$0xf] %v1685
                  %v1687 = vld [vmem:[%s1597 + $0xb0] sm:$0xf]
                  %1688 = vst [vmem:[%s1598 + $0xb0] sm:$0xf] %v1687
                  %v1689 = vld [vmem:[%s1597 + $0xb4] sm:$0xf]
                  %1690 = vst [vmem:[%s1598 + $0xb4] sm:$0xf] %v1689
                  %v1691 = vld [vmem:[%s1597 + $0xb8] sm:$0xf]
                  %1692 = vst [vmem:[%s1598 + $0xb8] sm:$0xf] %v1691
                  %v1693 = vld [vmem:[%s1597 + $0xbc] sm:$0xf]
                  %1694 = vst [vmem:[%s1598 + $0xbc] sm:$0xf] %v1693
                  %v1695 = vld [vmem:[%s1597 + $0xc0] sm:$0xf]
                  %1696 = vst [vmem:[%s1598 + $0xc0] sm:$0xf] %v1695
                  %v1697 = vld [vmem:[%s1597 + $0xc4] sm:$0xf]
                  %1698 = vst [vmem:[%s1598 + $0xc4] sm:$0xf] %v1697
                  %v1699 = vld [vmem:[%s1597 + $0xc8] sm:$0xf]
                  %1700 = vst [vmem:[%s1598 + $0xc8] sm:$0xf] %v1699
                  %v1701 = vld [vmem:[%s1597 + $0xcc] sm:$0xf]
                  %1702 = vst [vmem:[%s1598 + $0xcc] sm:$0xf] %v1701
                  %v1703 = vld [vmem:[%s1597 + $0xd0] sm:$0xf]
                  %1704 = vst [vmem:[%s1598 + $0xd0] sm:$0xf] %v1703
                  %v1705 = vld [vmem:[%s1597 + $0xd4] sm:$0xf]
                  %1706 = vst [vmem:[%s1598 + $0xd4] sm:$0xf] %v1705
                  %v1707 = vld [vmem:[%s1597 + $0xd8] sm:$0xf]
                  %1708 = vst [vmem:[%s1598 + $0xd8] sm:$0xf] %v1707
                  %v1709 = vld [vmem:[%s1597 + $0xdc] sm:$0xf]
                  %1710 = vst [vmem:[%s1598 + $0xdc] sm:$0xf] %v1709
                  %v1711 = vld [vmem:[%s1597 + $0xe0] sm:$0xf]
                  %1712 = vst [vmem:[%s1598 + $0xe0] sm:$0xf] %v1711
                  %v1713 = vld [vmem:[%s1597 + $0xe4] sm:$0xf]
                  %1714 = vst [vmem:[%s1598 + $0xe4] sm:$0xf] %v1713
                  %v1715 = vld [vmem:[%s1597 + $0xe8] sm:$0xf]
                  %1716 = vst [vmem:[%s1598 + $0xe8] sm:$0xf] %v1715
                  %v1717 = vld [vmem:[%s1597 + $0xec] sm:$0xf]
                  %1718 = vst [vmem:[%s1598 + $0xec] sm:$0xf] %v1717
                  %v1719 = vld [vmem:[%s1597 + $0xf0] sm:$0xf]
                  %1720 = vst [vmem:[%s1598 + $0xf0] sm:$0xf] %v1719
                  %v1721 = vld [vmem:[%s1597 + $0xf4] sm:$0xf]
                  %1722 = vst [vmem:[%s1598 + $0xf4] sm:$0xf] %v1721
                  %v1723 = vld [vmem:[%s1597 + $0xf8] sm:$0xf]
                  %1724 = vst [vmem:[%s1598 + $0xf8] sm:$0xf] %v1723
                  %v1725 = vld [vmem:[%s1597 + $0xfc] sm:$0xf]
                  %1726 = vst [vmem:[%s1598 + $0xfc] sm:$0xf] %v1725
                  %s1727 = sadd.s32 1, %s1596
                  %p1728 = scmp.ge.s32.totalorder %s1727, %s1589
                  %s1729 = scalar_select %p1728, 0, %s1727
                  %s1730 = smul.u32 %s1729, 256
                  %s1731 = smul.u32 %s1729, 256
                  %s1732 = scalar_lea.vmem %s1396, %s1730 [#allocation2]
                  %s1733 = scalar_lea.vmem %s1407, %s1731
                $region71: #{_lambda_.4} parent=65 // loop_footer
                  %s1593 = sadd.s32 %s1591, 1
                $region72: #{_lambda_.4} parent=65 // loop_footer_branch
                  %1590 = sbr.rel target = $region68
                $region73: #{_lambda_.4} parent=65 // loop_exit
                  _
                %s1734 = sshrl.u32 %s1403, 6
                %s1735 = sand.u32 %s1403, 63
                %s1736 = smul.u32 %s1734, 64
                %s1737 = smul.u32 4, %s1736
                %s1738 = scalar_lea.vmem %s1396, %s1737 [#allocation2]
                %s1739 = smul.u32 4, %s1736
                %s1740 = scalar_lea.vmem %s1407, %s1739
                // While loop
                $region74: #{_lambda_.4} parent=65 // loop_pre_header
                  _
                $region75: #{_lambda_.4} parent=65 // loop_header
                  %s1742 = sphi 0, %s1744
                  %p1743 = scmp.ge.s32.totalorder %s1742, %s1735
                  %s1747 = sphi 0, %s1754
                  %s1748 = sphi %s1738, %s1757
                  %s1749 = sphi %s1740, %s1758
                $region76: #{_lambda_.4} parent=65 // loop_header_branch
                  %1746 = sbr.rel (%p1743) target = $region80
                $region77: #{_lambda_.4} parent=65 // loop_body
                  %v1750 = vld [vmem:[%s1748] sm:$0xf]
                  %1751 = vst [vmem:[%s1749] sm:$0xf] %v1750
                  %s1752 = sadd.s32 1, %s1747
                  %p1753 = scmp.ge.s32.totalorder %s1752, %s1735
                  %s1754 = scalar_select %p1753, 0, %s1752
                  %s1755 = smul.u32 %s1754, 4
                  %s1756 = smul.u32 %s1754, 4
                  %s1757 = scalar_lea.vmem %s1738, %s1755 [#allocation2]
                  %s1758 = scalar_lea.vmem %s1740, %s1756
                $region78: #{_lambda_.4} parent=65 // loop_footer
                  %s1744 = sadd.s32 %s1742, 1
                $region79: #{_lambda_.4} parent=65 // loop_footer_branch
                  %1741 = sbr.rel target = $region75
                $region80: #{_lambda_.4} parent=65 // loop_exit
                  _
              $region66: #{_lambda_.4} parent=43 // pred_fallthru
                _
            $region44: #{_lambda_.4} parent=39 // pred_fallthru
              _
            // Predicated region
            $region45: #{_lambda_.4} parent=39 // pred_check
              _
            $region46: #{_lambda_.4} parent=39 // pred_check_branch
              %1414 = sbr.rel (0) target = $region48
            $region47: #{_lambda_.4} parent=39 // pred_region
              %s1416 = sshrl.u32 %s1403, 6
              // While loop
              $region49: #{_lambda_.4} parent=47 // loop_pre_header
                _
              $region50: #{_lambda_.4} parent=47 // loop_header
                %s1418 = sphi 0, %s1420
                %p1419 = scmp.ge.s32.totalorder %s1418, %s1416
                %s1423 = sphi 0, %s1556
                %s1424 = sphi %s1396, %s1559
                %s1425 = sphi %s1407, %s1560
              $region51: #{_lambda_.4} parent=47 // loop_header_branch
                %1422 = sbr.rel (%p1419) target = $region55
              $region52: #{_lambda_.4} parent=47 // loop_body
                %v1426 = vld [vmem:[%s1424] sm:$0xf]
                %1427 = vst [vmem:[%s1425] sm:$0xf] %v1426
                %v1428 = vld [vmem:[%s1424 + $0x4] sm:$0xf]
                %1429 = vst [vmem:[%s1425 + $0x4] sm:$0xf] %v1428
                %v1430 = vld [vmem:[%s1424 + $0x8] sm:$0xf]
                %1431 = vst [vmem:[%s1425 + $0x8] sm:$0xf] %v1430
                %v1432 = vld [vmem:[%s1424 + $0xc] sm:$0xf]
                %1433 = vst [vmem:[%s1425 + $0xc] sm:$0xf] %v1432
                %v1434 = vld [vmem:[%s1424 + $0x10] sm:$0xf]
                %1435 = vst [vmem:[%s1425 + $0x10] sm:$0xf] %v1434
                %v1436 = vld [vmem:[%s1424 + $0x14] sm:$0xf]
                %1437 = vst [vmem:[%s1425 + $0x14] sm:$0xf] %v1436
                %v1438 = vld [vmem:[%s1424 + $0x18] sm:$0xf]
                %1439 = vst [vmem:[%s1425 + $0x18] sm:$0xf] %v1438
                %v1440 = vld [vmem:[%s1424 + $0x1c] sm:$0xf]
                %1441 = vst [vmem:[%s1425 + $0x1c] sm:$0xf] %v1440
                %v1442 = vld [vmem:[%s1424 + $0x20] sm:$0xf]
                %1443 = vst [vmem:[%s1425 + $0x20] sm:$0xf] %v1442
                %v1444 = vld [vmem:[%s1424 + $0x24] sm:$0xf]
                %1445 = vst [vmem:[%s1425 + $0x24] sm:$0xf] %v1444
                %v1446 = vld [vmem:[%s1424 + $0x28] sm:$0xf]
                %1447 = vst [vmem:[%s1425 + $0x28] sm:$0xf] %v1446
                %v1448 = vld [vmem:[%s1424 + $0x2c] sm:$0xf]
                %1449 = vst [vmem:[%s1425 + $0x2c] sm:$0xf] %v1448
                %v1450 = vld [vmem:[%s1424 + $0x30] sm:$0xf]
                %1451 = vst [vmem:[%s1425 + $0x30] sm:$0xf] %v1450
                %v1452 = vld [vmem:[%s1424 + $0x34] sm:$0xf]
                %1453 = vst [vmem:[%s1425 + $0x34] sm:$0xf] %v1452
                %v1454 = vld [vmem:[%s1424 + $0x38] sm:$0xf]
                %1455 = vst [vmem:[%s1425 + $0x38] sm:$0xf] %v1454
                %v1456 = vld [vmem:[%s1424 + $0x3c] sm:$0xf]
                %1457 = vst [vmem:[%s1425 + $0x3c] sm:$0xf] %v1456
                %v1458 = vld [vmem:[%s1424 + $0x40] sm:$0xf]
                %1459 = vst [vmem:[%s1425 + $0x40] sm:$0xf] %v1458
                %v1460 = vld [vmem:[%s1424 + $0x44] sm:$0xf]
                %1461 = vst [vmem:[%s1425 + $0x44] sm:$0xf] %v1460
                %v1462 = vld [vmem:[%s1424 + $0x48] sm:$0xf]
                %1463 = vst [vmem:[%s1425 + $0x48] sm:$0xf] %v1462
                %v1464 = vld [vmem:[%s1424 + $0x4c] sm:$0xf]
                %1465 = vst [vmem:[%s1425 + $0x4c] sm:$0xf] %v1464
                %v1466 = vld [vmem:[%s1424 + $0x50] sm:$0xf]
                %1467 = vst [vmem:[%s1425 + $0x50] sm:$0xf] %v1466
                %v1468 = vld [vmem:[%s1424 + $0x54] sm:$0xf]
                %1469 = vst [vmem:[%s1425 + $0x54] sm:$0xf] %v1468
                %v1470 = vld [vmem:[%s1424 + $0x58] sm:$0xf]
                %1471 = vst [vmem:[%s1425 + $0x58] sm:$0xf] %v1470
                %v1472 = vld [vmem:[%s1424 + $0x5c] sm:$0xf]
                %1473 = vst [vmem:[%s1425 + $0x5c] sm:$0xf] %v1472
                %v1474 = vld [vmem:[%s1424 + $0x60] sm:$0xf]
                %1475 = vst [vmem:[%s1425 + $0x60] sm:$0xf] %v1474
                %v1476 = vld [vmem:[%s1424 + $0x64] sm:$0xf]
                %1477 = vst [vmem:[%s1425 + $0x64] sm:$0xf] %v1476
                %v1478 = vld [vmem:[%s1424 + $0x68] sm:$0xf]
                %1479 = vst [vmem:[%s1425 + $0x68] sm:$0xf] %v1478
                %v1480 = vld [vmem:[%s1424 + $0x6c] sm:$0xf]
                %1481 = vst [vmem:[%s1425 + $0x6c] sm:$0xf] %v1480
                %v1482 = vld [vmem:[%s1424 + $0x70] sm:$0xf]
                %1483 = vst [vmem:[%s1425 + $0x70] sm:$0xf] %v1482
                %v1484 = vld [vmem:[%s1424 + $0x74] sm:$0xf]
                %1485 = vst [vmem:[%s1425 + $0x74] sm:$0xf] %v1484
                %v1486 = vld [vmem:[%s1424 + $0x78] sm:$0xf]
                %1487 = vst [vmem:[%s1425 + $0x78] sm:$0xf] %v1486
                %v1488 = vld [vmem:[%s1424 + $0x7c] sm:$0xf]
                %1489 = vst [vmem:[%s1425 + $0x7c] sm:$0xf] %v1488
                %v1490 = vld [vmem:[%s1424 + $0x80] sm:$0xf]
                %1491 = vst [vmem:[%s1425 + $0x80] sm:$0xf] %v1490
                %v1492 = vld [vmem:[%s1424 + $0x84] sm:$0xf]
                %1493 = vst [vmem:[%s1425 + $0x84] sm:$0xf] %v1492
                %v1494 = vld [vmem:[%s1424 + $0x88] sm:$0xf]
                %1495 = vst [vmem:[%s1425 + $0x88] sm:$0xf] %v1494
                %v1496 = vld [vmem:[%s1424 + $0x8c] sm:$0xf]
                %1497 = vst [vmem:[%s1425 + $0x8c] sm:$0xf] %v1496
                %v1498 = vld [vmem:[%s1424 + $0x90] sm:$0xf]
                %1499 = vst [vmem:[%s1425 + $0x90] sm:$0xf] %v1498
                %v1500 = vld [vmem:[%s1424 + $0x94] sm:$0xf]
                %1501 = vst [vmem:[%s1425 + $0x94] sm:$0xf] %v1500
                %v1502 = vld [vmem:[%s1424 + $0x98] sm:$0xf]
                %1503 = vst [vmem:[%s1425 + $0x98] sm:$0xf] %v1502
                %v1504 = vld [vmem:[%s1424 + $0x9c] sm:$0xf]
                %1505 = vst [vmem:[%s1425 + $0x9c] sm:$0xf] %v1504
                %v1506 = vld [vmem:[%s1424 + $0xa0] sm:$0xf]
                %1507 = vst [vmem:[%s1425 + $0xa0] sm:$0xf] %v1506
                %v1508 = vld [vmem:[%s1424 + $0xa4] sm:$0xf]
                %1509 = vst [vmem:[%s1425 + $0xa4] sm:$0xf] %v1508
                %v1510 = vld [vmem:[%s1424 + $0xa8] sm:$0xf]
                %1511 = vst [vmem:[%s1425 + $0xa8] sm:$0xf] %v1510
                %v1512 = vld [vmem:[%s1424 + $0xac] sm:$0xf]
                %1513 = vst [vmem:[%s1425 + $0xac] sm:$0xf] %v1512
                %v1514 = vld [vmem:[%s1424 + $0xb0] sm:$0xf]
                %1515 = vst [vmem:[%s1425 + $0xb0] sm:$0xf] %v1514
                %v1516 = vld [vmem:[%s1424 + $0xb4] sm:$0xf]
                %1517 = vst [vmem:[%s1425 + $0xb4] sm:$0xf] %v1516
                %v1518 = vld [vmem:[%s1424 + $0xb8] sm:$0xf]
                %1519 = vst [vmem:[%s1425 + $0xb8] sm:$0xf] %v1518
                %v1520 = vld [vmem:[%s1424 + $0xbc] sm:$0xf]
                %1521 = vst [vmem:[%s1425 + $0xbc] sm:$0xf] %v1520
                %v1522 = vld [vmem:[%s1424 + $0xc0] sm:$0xf]
                %1523 = vst [vmem:[%s1425 + $0xc0] sm:$0xf] %v1522
                %v1524 = vld [vmem:[%s1424 + $0xc4] sm:$0xf]
                %1525 = vst [vmem:[%s1425 + $0xc4] sm:$0xf] %v1524
                %v1526 = vld [vmem:[%s1424 + $0xc8] sm:$0xf]
                %1527 = vst [vmem:[%s1425 + $0xc8] sm:$0xf] %v1526
                %v1528 = vld [vmem:[%s1424 + $0xcc] sm:$0xf]
                %1529 = vst [vmem:[%s1425 + $0xcc] sm:$0xf] %v1528
                %v1530 = vld [vmem:[%s1424 + $0xd0] sm:$0xf]
                %1531 = vst [vmem:[%s1425 + $0xd0] sm:$0xf] %v1530
                %v1532 = vld [vmem:[%s1424 + $0xd4] sm:$0xf]
                %1533 = vst [vmem:[%s1425 + $0xd4] sm:$0xf] %v1532
                %v1534 = vld [vmem:[%s1424 + $0xd8] sm:$0xf]
                %1535 = vst [vmem:[%s1425 + $0xd8] sm:$0xf] %v1534
                %v1536 = vld [vmem:[%s1424 + $0xdc] sm:$0xf]
                %1537 = vst [vmem:[%s1425 + $0xdc] sm:$0xf] %v1536
                %v1538 = vld [vmem:[%s1424 + $0xe0] sm:$0xf]
                %1539 = vst [vmem:[%s1425 + $0xe0] sm:$0xf] %v1538
                %v1540 = vld [vmem:[%s1424 + $0xe4] sm:$0xf]
                %1541 = vst [vmem:[%s1425 + $0xe4] sm:$0xf] %v1540
                %v1542 = vld [vmem:[%s1424 + $0xe8] sm:$0xf]
                %1543 = vst [vmem:[%s1425 + $0xe8] sm:$0xf] %v1542
                %v1544 = vld [vmem:[%s1424 + $0xec] sm:$0xf]
                %1545 = vst [vmem:[%s1425 + $0xec] sm:$0xf] %v1544
                %v1546 = vld [vmem:[%s1424 + $0xf0] sm:$0xf]
                %1547 = vst [vmem:[%s1425 + $0xf0] sm:$0xf] %v1546
                %v1548 = vld [vmem:[%s1424 + $0xf4] sm:$0xf]
                %1549 = vst [vmem:[%s1425 + $0xf4] sm:$0xf] %v1548
                %v1550 = vld [vmem:[%s1424 + $0xf8] sm:$0xf]
                %1551 = vst [vmem:[%s1425 + $0xf8] sm:$0xf] %v1550
                %v1552 = vld [vmem:[%s1424 + $0xfc] sm:$0xf]
                %1553 = vst [vmem:[%s1425 + $0xfc] sm:$0xf] %v1552
                %s1554 = sadd.s32 1, %s1423
                %p1555 = scmp.ge.s32.totalorder %s1554, %s1416
                %s1556 = scalar_select %p1555, 0, %s1554
                %s1557 = smul.u32 %s1556, 256
                %s1558 = smul.u32 %s1556, 256
                %s1559 = scalar_lea.vmem %s1396, %s1557 [#allocation2]
                %s1560 = scalar_lea.vmem %s1407, %s1558
              $region53: #{_lambda_.4} parent=47 // loop_footer
                %s1420 = sadd.s32 %s1418, 1
              $region54: #{_lambda_.4} parent=47 // loop_footer_branch
                %1417 = sbr.rel target = $region50
              $region55: #{_lambda_.4} parent=47 // loop_exit
                _
              %s1561 = sshrl.u32 %s1403, 6
              %s1562 = sand.u32 %s1403, 63
              %s1563 = smul.u32 %s1561, 64
              %s1564 = smul.u32 4, %s1563
              %s1565 = scalar_lea.vmem %s1396, %s1564 [#allocation2]
              %s1566 = smul.u32 4, %s1563
              %s1567 = scalar_lea.vmem %s1407, %s1566
              // While loop
              $region56: #{_lambda_.4} parent=47 // loop_pre_header
                _
              $region57: #{_lambda_.4} parent=47 // loop_header
                %s1569 = sphi 0, %s1571
                %p1570 = scmp.ge.s32.totalorder %s1569, %s1562
                %s1574 = sphi 0, %s1581
                %s1575 = sphi %s1565, %s1584
                %s1576 = sphi %s1567, %s1585
              $region58: #{_lambda_.4} parent=47 // loop_header_branch
                %1573 = sbr.rel (%p1570) target = $region62
              $region59: #{_lambda_.4} parent=47 // loop_body
                %v1577 = vld [vmem:[%s1575] sm:$0xf]
                %1578 = vst [vmem:[%s1576] sm:$0xf] %v1577
                %s1579 = sadd.s32 1, %s1574
                %p1580 = scmp.ge.s32.totalorder %s1579, %s1562
                %s1581 = scalar_select %p1580, 0, %s1579
                %s1582 = smul.u32 %s1581, 4
                %s1583 = smul.u32 %s1581, 4
                %s1584 = scalar_lea.vmem %s1565, %s1582 [#allocation2]
                %s1585 = scalar_lea.vmem %s1567, %s1583
              $region60: #{_lambda_.4} parent=47 // loop_footer
                %s1571 = sadd.s32 %s1569, 1
              $region61: #{_lambda_.4} parent=47 // loop_footer_branch
                %1568 = sbr.rel target = $region57
              $region62: #{_lambda_.4} parent=47 // loop_exit
                _
            $region48: #{_lambda_.4} parent=39 // pred_fallthru
              _
          $region40: #{_lambda_.4} parent=35 // pred_fallthru
            _
          %1759 = vnop
        $region36: #{_lambda_.4} parent=31 // pred_fallthru
          _
      $region32: #{_lambda_.4} parent=5 // pred_fallthru
        _
      %p1760 = scmp.le.s32.totalorder 2, %s9
      // Predicated region
      $region81: #{_lambda_.4} parent=5 // pred_check
        %p1761 = pneg %p1760
      $region82: #{_lambda_.4} parent=5 // pred_check_branch
        %1763 = sbr.rel (%p1761) target = $region84
      $region83: #{_lambda_.4} parent=5 // pred_region
        %s1764 = ssub.s32 %s9, 2
        // Predicated region
        $region85: #{_lambda_.4} parent=83 // pred_check
          %p1765 = pneg %p106
        $region86: #{_lambda_.4} parent=83 // pred_check_branch
          %1767 = sbr.rel (%p1765) target = $region88
        $region87: #{_lambda_.4} parent=83 // pred_region
          %s1768 = sand.u32 %s91, 1
          %s1769 = sand.u32 %s91, 1
          %s1770 = smul.addr %s1769, 256
          %s1771 = scalar_lea.vmem [#allocation2], %s1770
        $region88: #{_lambda_.4} parent=83 // pred_fallthru
          _
      $region84: #{_lambda_.4} parent=5 // pred_fallthru
        _
    $region6: #{_lambda_.4} parent=1 // loop_footer
      %s13 = sadd.s32 1, %s9
    $region7: #{_lambda_.4} parent=1 // loop_footer_branch
      %8 = sbr.rel target = $region3
    $region8: #{_lambda_.4} parent=1 // loop_exit
      _

// kernel: _lambda_.5
$region0: #{_lambda_.5}
  #allocation0 [shape = 'u32[]', space=smem, size = 0x4, offset = 0x4, fixed_abs, tag = 'smem constant byte address 0x4 - core index']
  #allocation1 [shape = 'u32[144,128]{1,0:T(1,128)}', space=vmem, size = 0x12000, scoped, tag = 'internal scratch']
  %s0 = inlined_call_operand.vmem [shape: bf16[128,512], index: 0, kind: input, shape index: {}]
  %s1 = inlined_call_operand.vmem [shape: bf16[512,128], index: 1, kind: input, shape index: {}]
  %s2 = inlined_call_operand.vmem [shape: f32[1,128], index: 2, kind: input, shape index: {}]
  %s3 = inlined_call_operand.vmem [shape: bf16[128,128], index: 3, kind: output, shape index: {}]
  %s4 = sld [smem:[#allocation0]]
  $region22: #{_lambda_.5} parent=0
    _
  %s6 = ssub.s32 1, %s4
  %s7 = scalar_select 0, %s6, %s4
  // Predicated region
  $region2: #{_lambda_.5} parent=0 // pred_check
    _
  $region3: #{_lambda_.5} parent=0 // pred_check_branch
    %9 = sbr.rel (0) target = $region5
  $region4: #{_lambda_.5} parent=0 // pred_region
    _
  $region5: #{_lambda_.5} parent=0 // pred_fallthru
    _
  // Predicated region
  $region6: #{_lambda_.5} parent=0 // pred_check
    _
  $region7: #{_lambda_.5} parent=0 // pred_check_branch
    %11 = sbr.rel (0) target = $region9
  $region8: #{_lambda_.5} parent=0 // pred_region
    _
  $region9: #{_lambda_.5} parent=0 // pred_fallthru
    _
  // Predicated region
  $region10: #{_lambda_.5} parent=0 // pred_check
    _
  $region11: #{_lambda_.5} parent=0 // pred_check_branch
    %13 = sbr.rel (0) target = $region13
  $region12: #{_lambda_.5} parent=0 // pred_region
    _
  $region13: #{_lambda_.5} parent=0 // pred_fallthru
    _
  %v15 = vld [vmem:[%s0] sm:$0xff]
  %v16 = vld [vmem:[%s0 + $0x8] sm:$0xff]
  %v17 = vld [vmem:[%s0 + $0x10] sm:$0xff]
  %v18 = vld [vmem:[%s0 + $0x18] sm:$0xff]
  %v19 = vld [vmem:[%s0 + $0x20] sm:$0xff]
  %v20 = vld [vmem:[%s0 + $0x28] sm:$0xff]
  %v21 = vld [vmem:[%s0 + $0x30] sm:$0xff]
  %v22 = vld [vmem:[%s0 + $0x38] sm:$0xff]
  %v23 = vld [vmem:[%s0 + $0x40] sm:$0xff]
  %v24 = vld [vmem:[%s0 + $0x48] sm:$0xff]
  %v25 = vld [vmem:[%s0 + $0x50] sm:$0xff]
  %v26 = vld [vmem:[%s0 + $0x58] sm:$0xff]
  %v27 = vld [vmem:[%s0 + $0x60] sm:$0xff]
  %v28 = vld [vmem:[%s0 + $0x68] sm:$0xff]
  %v29 = vld [vmem:[%s0 + $0x70] sm:$0xff]
  %v30 = vld [vmem:[%s0 + $0x78] sm:$0xff]
  %v31 = vld [vmem:[%s0 + $0x80] sm:$0xff]
  %v32 = vld [vmem:[%s0 + $0x88] sm:$0xff]
  %v33 = vld [vmem:[%s0 + $0x90] sm:$0xff]
  %v34 = vld [vmem:[%s0 + $0x98] sm:$0xff]
  %v35 = vld [vmem:[%s0 + $0xa0] sm:$0xff]
  %v36 = vld [vmem:[%s0 + $0xa8] sm:$0xff]
  %v37 = vld [vmem:[%s0 + $0xb0] sm:$0xff]
  %v38 = vld [vmem:[%s0 + $0xb8] sm:$0xff]
  %v39 = vld [vmem:[%s0 + $0xc0] sm:$0xff]
  %v40 = vld [vmem:[%s0 + $0xc8] sm:$0xff]
  %v41 = vld [vmem:[%s0 + $0xd0] sm:$0xff]
  %v42 = vld [vmem:[%s0 + $0xd8] sm:$0xff]
  %v43 = vld [vmem:[%s0 + $0xe0] sm:$0xff]
  %v44 = vld [vmem:[%s0 + $0xe8] sm:$0xff]
  %v45 = vld [vmem:[%s0 + $0xf0] sm:$0xff]
  %v46 = vld [vmem:[%s0 + $0xf8] sm:$0xff]
  %v47 = vld [vmem:[%s1] sm:$0xf]
  %v48 = vld [vmem:[%s1 + $0x4] sm:$0xf]
  %v49 = vld [vmem:[%s1 + $0x8] sm:$0xf]
  %v50 = vld [vmem:[%s1 + $0xc] sm:$0xf]
  %v51 = vld [vmem:[%s1 + $0x10] sm:$0xf]
  %v52 = vld [vmem:[%s1 + $0x14] sm:$0xf]
  %v53 = vld [vmem:[%s1 + $0x18] sm:$0xf]
  %v54 = vld [vmem:[%s1 + $0x1c] sm:$0xf]
  %v55 = vld [vmem:[%s1 + $0x20] sm:$0xf]
  %v56 = vld [vmem:[%s1 + $0x24] sm:$0xf]
  %v57 = vld [vmem:[%s1 + $0x28] sm:$0xf]
  %v58 = vld [vmem:[%s1 + $0x2c] sm:$0xf]
  %v59 = vld [vmem:[%s1 + $0x30] sm:$0xf]
  %v60 = vld [vmem:[%s1 + $0x34] sm:$0xf]
  %v61 = vld [vmem:[%s1 + $0x38] sm:$0xf]
  %v62 = vld [vmem:[%s1 + $0x3c] sm:$0xf]
  %v63 = vld [vmem:[%s1 + $0x40] sm:$0xf]
  %v64 = vld [vmem:[%s1 + $0x44] sm:$0xf]
  %v65 = vld [vmem:[%s1 + $0x48] sm:$0xf]
  %v66 = vld [vmem:[%s1 + $0x4c] sm:$0xf]
  %v67 = vld [vmem:[%s1 + $0x50] sm:$0xf]
  %v68 = vld [vmem:[%s1 + $0x54] sm:$0xf]
  %v69 = vld [vmem:[%s1 + $0x58] sm:$0xf]
  %v70 = vld [vmem:[%s1 + $0x5c] sm:$0xf]
  %v71 = vld [vmem:[%s1 + $0x60] sm:$0xf]
  %v72 = vld [vmem:[%s1 + $0x64] sm:$0xf]
  %v73 = vld [vmem:[%s1 + $0x68] sm:$0xf]
  %v74 = vld [vmem:[%s1 + $0x6c] sm:$0xf]
  %v75 = vld [vmem:[%s1 + $0x70] sm:$0xf]
  %v76 = vld [vmem:[%s1 + $0x74] sm:$0xf]
  %v77 = vld [vmem:[%s1 + $0x78] sm:$0xf]
  %v78 = vld [vmem:[%s1 + $0x7c] sm:$0xf]
  %v79 = vld [vmem:[%s1 + $0x80] sm:$0xf]
  %v80 = vld [vmem:[%s1 + $0x84] sm:$0xf]
  %v81 = vld [vmem:[%s1 + $0x88] sm:$0xf]
  %v82 = vld [vmem:[%s1 + $0x8c] sm:$0xf]
  %v83 = vld [vmem:[%s1 + $0x90] sm:$0xf]
  %v84 = vld [vmem:[%s1 + $0x94] sm:$0xf]
  %v85 = vld [vmem:[%s1 + $0x98] sm:$0xf]
  %v86 = vld [vmem:[%s1 + $0x9c] sm:$0xf]
  %v87 = vld [vmem:[%s1 + $0xa0] sm:$0xf]
  %v88 = vld [vmem:[%s1 + $0xa4] sm:$0xf]
  %v89 = vld [vmem:[%s1 + $0xa8] sm:$0xf]
  %v90 = vld [vmem:[%s1 + $0xac] sm:$0xf]
  %v91 = vld [vmem:[%s1 + $0xb0] sm:$0xf]
  %v92 = vld [vmem:[%s1 + $0xb4] sm:$0xf]
  %v93 = vld [vmem:[%s1 + $0xb8] sm:$0xf]
  %v94 = vld [vmem:[%s1 + $0xbc] sm:$0xf]
  %v95 = vld [vmem:[%s1 + $0xc0] sm:$0xf]
  %v96 = vld [vmem:[%s1 + $0xc4] sm:$0xf]
  %v97 = vld [vmem:[%s1 + $0xc8] sm:$0xf]
  %v98 = vld [vmem:[%s1 + $0xcc] sm:$0xf]
  %v99 = vld [vmem:[%s1 + $0xd0] sm:$0xf]
  %v100 = vld [vmem:[%s1 + $0xd4] sm:$0xf]
  %v101 = vld [vmem:[%s1 + $0xd8] sm:$0xf]
  %v102 = vld [vmem:[%s1 + $0xdc] sm:$0xf]
  %v103 = vld [vmem:[%s1 + $0xe0] sm:$0xf]
  %v104 = vld [vmem:[%s1 + $0xe4] sm:$0xf]
  %v105 = vld [vmem:[%s1 + $0xe8] sm:$0xf]
  %v106 = vld [vmem:[%s1 + $0xec] sm:$0xf]
  %v107 = vld [vmem:[%s1 + $0xf0] sm:$0xf]
  %v108 = vld [vmem:[%s1 + $0xf4] sm:$0xf]
  %v109 = vld [vmem:[%s1 + $0xf8] sm:$0xf]
  %v110 = vld [vmem:[%s1 + $0xfc] sm:$0xf]
  %v111 = vld [vmem:[%s2] sm:$0x1]
  %v113 = vlaneseq
  %v114 = vshrl.u32 %v113, 7
  %v115 = vsub.s32 0, %v114
  %v116 = vrot.slane %v111, %v115
  %v150 = vunpack.c.l.b16 %v15
  %v151 = vunpack.c.h.b16 %v15
  %v152 = vunpack.c.l.b16 %v16
  %v153 = vunpack.c.h.b16 %v16
  %v154 = vunpack.c.l.b16 %v17
  %v155 = vunpack.c.h.b16 %v17
  %v156 = vunpack.c.l.b16 %v18
  %v157 = vunpack.c.h.b16 %v18
  %v158 = vunpack.c.l.b16 %v19
  %v159 = vunpack.c.h.b16 %v19
  %v160 = vunpack.c.l.b16 %v20
  %v161 = vunpack.c.h.b16 %v20
  %v162 = vunpack.c.l.b16 %v21
  %v163 = vunpack.c.h.b16 %v21
  %v164 = vunpack.c.l.b16 %v22
  %v165 = vunpack.c.h.b16 %v22
  %v166 = vunpack.c.l.b16 %v23
  %v167 = vunpack.c.h.b16 %v23
  %v168 = vunpack.c.l.b16 %v24
  %v169 = vunpack.c.h.b16 %v24
  %v170 = vunpack.c.l.b16 %v25
  %v171 = vunpack.c.h.b16 %v25
  %v172 = vunpack.c.l.b16 %v26
  %v173 = vunpack.c.h.b16 %v26
  %v174 = vunpack.c.l.b16 %v27
  %v175 = vunpack.c.h.b16 %v27
  %v176 = vunpack.c.l.b16 %v28
  %v177 = vunpack.c.h.b16 %v28
  %v178 = vunpack.c.l.b16 %v29
  %v179 = vunpack.c.h.b16 %v29
  %v180 = vunpack.c.l.b16 %v30
  %v181 = vunpack.c.h.b16 %v30
  %v182 = vunpack.c.l.b16 %v31
  %v183 = vunpack.c.h.b16 %v31
  %v184 = vunpack.c.l.b16 %v32
  %v185 = vunpack.c.h.b16 %v32
  %v186 = vunpack.c.l.b16 %v33
  %v187 = vunpack.c.h.b16 %v33
  %v188 = vunpack.c.l.b16 %v34
  %v189 = vunpack.c.h.b16 %v34
  %v190 = vunpack.c.l.b16 %v35
  %v191 = vunpack.c.h.b16 %v35
  %v192 = vunpack.c.l.b16 %v36
  %v193 = vunpack.c.h.b16 %v36
  %v194 = vunpack.c.l.b16 %v37
  %v195 = vunpack.c.h.b16 %v37
  %v196 = vunpack.c.l.b16 %v38
  %v197 = vunpack.c.h.b16 %v38
  %v198 = vunpack.c.l.b16 %v39
  %v199 = vunpack.c.h.b16 %v39
  %v200 = vunpack.c.l.b16 %v40
  %v201 = vunpack.c.h.b16 %v40
  %v202 = vunpack.c.l.b16 %v41
  %v203 = vunpack.c.h.b16 %v41
  %v204 = vunpack.c.l.b16 %v42
  %v205 = vunpack.c.h.b16 %v42
  %v206 = vunpack.c.l.b16 %v43
  %v207 = vunpack.c.h.b16 %v43
  %v208 = vunpack.c.l.b16 %v44
  %v209 = vunpack.c.h.b16 %v44
  %v210 = vunpack.c.l.b16 %v45
  %v211 = vunpack.c.h.b16 %v45
  %v212 = vunpack.c.l.b16 %v46
  %v213 = vunpack.c.h.b16 %v46
  %v214 = vpack.c.b16 %v154, %v150
  %v215 = vpack.c.b16 %v155, %v151
  %v216 = vpack.c.b16 %v156, %v152
  %v217 = vpack.c.b16 %v157, %v153
  %v218 = vpack.c.b16 %v162, %v158
  %v219 = vpack.c.b16 %v163, %v159
  %v220 = vpack.c.b16 %v164, %v160
  %v221 = vpack.c.b16 %v165, %v161
  %v222 = vpack.c.b16 %v170, %v166
  %v223 = vpack.c.b16 %v171, %v167
  %v224 = vpack.c.b16 %v172, %v168
  %v225 = vpack.c.b16 %v173, %v169
  %v226 = vpack.c.b16 %v178, %v174
  %v227 = vpack.c.b16 %v179, %v175
  %v228 = vpack.c.b16 %v180, %v176
  %v229 = vpack.c.b16 %v181, %v177
  %v230 = vpack.c.b16 %v186, %v182
  %v231 = vpack.c.b16 %v187, %v183
  %v232 = vpack.c.b16 %v188, %v184
  %v233 = vpack.c.b16 %v189, %v185
  %v234 = vpack.c.b16 %v194, %v190
  %v235 = vpack.c.b16 %v195, %v191
  %v236 = vpack.c.b16 %v196, %v192
  %v237 = vpack.c.b16 %v197, %v193
  %v238 = vpack.c.b16 %v202, %v198
  %v239 = vpack.c.b16 %v203, %v199
  %v240 = vpack.c.b16 %v204, %v200
  %v241 = vpack.c.b16 %v205, %v201
  %v242 = vpack.c.b16 %v210, %v206
  %v243 = vpack.c.b16 %v211, %v207
  %v244 = vpack.c.b16 %v212, %v208
  %v245 = vpack.c.b16 %v213, %v209
  %v342 = vunpack.c.l.b16 %v47
  %v343 = vunpack.c.l.b16 %v48
  %v344 = vunpack.c.l.b16 %v49
  %v345 = vunpack.c.l.b16 %v50
  %v346 = vunpack.c.l.b16 %v51
  %v347 = vunpack.c.l.b16 %v52
  %v348 = vunpack.c.l.b16 %v53
  %v349 = vunpack.c.l.b16 %v54
  %v350 = vunpack.c.l.b16 %v55
  %v351 = vunpack.c.l.b16 %v56
  %v352 = vunpack.c.l.b16 %v57
  %v353 = vunpack.c.l.b16 %v58
  %v354 = vunpack.c.l.b16 %v59
  %v355 = vunpack.c.l.b16 %v60
  %v356 = vunpack.c.l.b16 %v61
  %v357 = vunpack.c.l.b16 %v62
  %v358 = vunpack.c.l.b16 %v63
  %v359 = vunpack.c.l.b16 %v64
  %v360 = vunpack.c.l.b16 %v65
  %v361 = vunpack.c.l.b16 %v66
  %v362 = vunpack.c.l.b16 %v67
  %v363 = vunpack.c.l.b16 %v68
  %v364 = vunpack.c.l.b16 %v69
  %v365 = vunpack.c.l.b16 %v70
  %v366 = vunpack.c.l.b16 %v71
  %v367 = vunpack.c.l.b16 %v72
  %v368 = vunpack.c.l.b16 %v73
  %v369 = vunpack.c.l.b16 %v74
  %v370 = vunpack.c.l.b16 %v75
  %v371 = vunpack.c.l.b16 %v76
  %v372 = vunpack.c.l.b16 %v77
  %v373 = vunpack.c.l.b16 %v78
  %v374 = vunpack.c.l.b16 %v79
  %v375 = vunpack.c.l.b16 %v80
  %v376 = vunpack.c.l.b16 %v81
  %v377 = vunpack.c.l.b16 %v82
  %v378 = vunpack.c.l.b16 %v83
  %v379 = vunpack.c.l.b16 %v84
  %v380 = vunpack.c.l.b16 %v85
  %v381 = vunpack.c.l.b16 %v86
  %v382 = vunpack.c.l.b16 %v87
  %v383 = vunpack.c.l.b16 %v88
  %v384 = vunpack.c.l.b16 %v89
  %v385 = vunpack.c.l.b16 %v90
  %v386 = vunpack.c.l.b16 %v91
  %v387 = vunpack.c.l.b16 %v92
  %v388 = vunpack.c.l.b16 %v93
  %v389 = vunpack.c.l.b16 %v94
  %v390 = vunpack.c.l.b16 %v95
  %v391 = vunpack.c.l.b16 %v96
  %v392 = vunpack.c.l.b16 %v97
  %v393 = vunpack.c.l.b16 %v98
  %v394 = vunpack.c.l.b16 %v99
  %v395 = vunpack.c.l.b16 %v100
  %v396 = vunpack.c.l.b16 %v101
  %v397 = vunpack.c.l.b16 %v102
  %v398 = vunpack.c.l.b16 %v103
  %v399 = vunpack.c.l.b16 %v104
  %v400 = vunpack.c.l.b16 %v105
  %v401 = vunpack.c.l.b16 %v106
  %v402 = vunpack.c.l.b16 %v107
  %v403 = vunpack.c.l.b16 %v108
  %v404 = vunpack.c.l.b16 %v109
  %v405 = vunpack.c.l.b16 %v110
  %v406 = vpack.c.b16 %v343, %v342
  %v407 = vpack.c.b16 %v345, %v344
  %v408 = vpack.c.b16 %v347, %v346
  %v409 = vpack.c.b16 %v349, %v348
  %v410 = vpack.c.b16 %v351, %v350
  %v411 = vpack.c.b16 %v353, %v352
  %v412 = vpack.c.b16 %v355, %v354
  %v413 = vpack.c.b16 %v357, %v356
  %v414 = vpack.c.b16 %v359, %v358
  %v415 = vpack.c.b16 %v361, %v360
  %v416 = vpack.c.b16 %v363, %v362
  %v417 = vpack.c.b16 %v365, %v364
  %v418 = vpack.c.b16 %v367, %v366
  %v419 = vpack.c.b16 %v369, %v368
  %v420 = vpack.c.b16 %v371, %v370
  %v421 = vpack.c.b16 %v373, %v372
  %v422 = vpack.c.b16 %v375, %v374
  %v423 = vpack.c.b16 %v377, %v376
  %v424 = vpack.c.b16 %v379, %v378
  %v425 = vpack.c.b16 %v381, %v380
  %v426 = vpack.c.b16 %v383, %v382
  %v427 = vpack.c.b16 %v385, %v384
  %v428 = vpack.c.b16 %v387, %v386
  %v429 = vpack.c.b16 %v389, %v388
  %v430 = vpack.c.b16 %v391, %v390
  %v431 = vpack.c.b16 %v393, %v392
  %v432 = vpack.c.b16 %v395, %v394
  %v433 = vpack.c.b16 %v397, %v396
  %v434 = vpack.c.b16 %v399, %v398
  %v435 = vpack.c.b16 %v401, %v400
  %v436 = vpack.c.b16 %v403, %v402
  %v437 = vpack.c.b16 %v405, %v404
  %470 = vmatprep.subr.bf16.mxu0 0
  %471 = vmatpush1.bf16.msra.mxu0 %v406
  %472 = vmatprep.subr.bf16.mxu0 0
  %473 = vmatpush1.bf16.msra.mxu0 %v407
  %474 = vmatprep.subr.bf16.mxu0 0
  %475 = vmatpush1.bf16.msra.mxu0 %v408
  %476 = vmatprep.subr.bf16.mxu0 0
  %477 = vmatpush1.bf16.msra.mxu0 %v409
  %478 = vmatprep.subr.bf16.mxu0 0
  %479 = vmatpush1.bf16.msra.mxu0 %v410
  %480 = vmatprep.subr.bf16.mxu0 0
  %481 = vmatpush1.bf16.msra.mxu0 %v411
  %482 = vmatprep.subr.bf16.mxu0 0
  %483 = vmatpush1.bf16.msra.mxu0 %v412
  %484 = vmatprep.subr.bf16.mxu0 0
  %485 = vmatpush1.bf16.msra.mxu0 %v413
  %486 = vmatprep.subr.bf16.mxu0 0
  %487 = vmatpush1.bf16.msra.mxu0 %v414
  %488 = vmatprep.subr.bf16.mxu0 0
  %489 = vmatpush1.bf16.msra.mxu0 %v415
  %490 = vmatprep.subr.bf16.mxu0 0
  %491 = vmatpush1.bf16.msra.mxu0 %v416
  %492 = vmatprep.subr.bf16.mxu0 0
  %493 = vmatpush1.bf16.msra.mxu0 %v417
  %494 = vmatprep.subr.bf16.mxu0 0
  %495 = vmatpush1.bf16.msra.mxu0 %v418
  %496 = vmatprep.subr.bf16.mxu0 0
  %497 = vmatpush1.bf16.msra.mxu0 %v419
  %498 = vmatprep.subr.bf16.mxu0 0
  %499 = vmatpush1.bf16.msra.mxu0 %v420
  %500 = vmatprep.subr.bf16.mxu0 0
  %501 = vmatpush1.bf16.msra.mxu0 %v421
  %502 = vmatprep.mubr.bf16.mxu0 %v215
  %503 = vmatmul.mubr.bf16.gmra.mrb[0].mxu0 %v214
  %v504 = vpop.f32.mrb[0].mxu0
  %v505 = vadd.f32 %v116, %v504
  %v506 = vpop.f32.mrb[0].mxu0
  %v507 = vpop.f32.mrb[0].mxu0
  %v508 = vadd.f32 %v116, %v507
  %v509 = vpop.f32.mrb[0].mxu0
  %510 = vmatprep.mubr.bf16.mxu0 %v219
  %511 = vmatmul.mubr.bf16.gmra.mrb[0].mxu0 %v218
  %v512 = vpop.f32.mrb[0].mxu0
  %v513 = vadd.f32 %v116, %v512
  %v514 = vpop.f32.mrb[0].mxu0
  %v515 = vpop.f32.mrb[0].mxu0
  %v516 = vadd.f32 %v116, %v515
  %v517 = vpop.f32.mrb[0].mxu0
  %518 = vmatprep.mubr.bf16.mxu0 %v223
  %519 = vmatmul.mubr.bf16.gmra.mrb[0].mxu0 %v222
  %v520 = vpop.f32.mrb[0].mxu0
  %v521 = vadd.f32 %v116, %v520
  %v522 = vpop.f32.mrb[0].mxu0
  %v523 = vpop.f32.mrb[0].mxu0
  %v524 = vadd.f32 %v116, %v523
  %v525 = vpop.f32.mrb[0].mxu0
  %526 = vmatprep.mubr.bf16.mxu0 %v227
  %527 = vmatmul.mubr.bf16.gmra.mrb[0].mxu0 %v226
  %v528 = vpop.f32.mrb[0].mxu0
  %v529 = vadd.f32 %v116, %v528
  %v530 = vpop.f32.mrb[0].mxu0
  %v531 = vpop.f32.mrb[0].mxu0
  %v532 = vadd.f32 %v116, %v531
  %v533 = vpop.f32.mrb[0].mxu0
  %534 = vmatprep.mubr.bf16.mxu0 %v231
  %535 = vmatmul.mubr.bf16.gmra.mrb[0].mxu0 %v230
  %v536 = vpop.f32.mrb[0].mxu0
  %v537 = vadd.f32 %v116, %v536
  %v538 = vpop.f32.mrb[0].mxu0
  %v539 = vpop.f32.mrb[0].mxu0
  %v540 = vadd.f32 %v116, %v539
  %v541 = vpop.f32.mrb[0].mxu0
  %542 = vmatprep.mubr.bf16.mxu0 %v235
  %543 = vmatmul.mubr.bf16.gmra.mrb[0].mxu0 %v234
  %v544 = vpop.f32.mrb[0].mxu0
  %v545 = vadd.f32 %v116, %v544
  %v546 = vpop.f32.mrb[0].mxu0
  %v547 = vpop.f32.mrb[0].mxu0
  %v548 = vadd.f32 %v116, %v547
  %v549 = vpop.f32.mrb[0].mxu0
  %550 = vmatprep.mubr.bf16.mxu0 %v239
  %551 = vmatmul.mubr.bf16.gmra.mrb[0].mxu0 %v238
  %v552 = vpop.f32.mrb[0].mxu0
  %v553 = vadd.f32 %v116, %v552
  %v554 = vpop.f32.mrb[0].mxu0
  %v555 = vpop.f32.mrb[0].mxu0
  %v556 = vadd.f32 %v116, %v555
  %v557 = vpop.f32.mrb[0].mxu0
  %558 = vmatprep.mubr.bf16.mxu0 %v243
  %559 = vmatmul.mubr.bf16.gmra.mrb[0].mxu0 %v242
  %v560 = vpop.f32.mrb[0].mxu0
  %v561 = vadd.f32 %v116, %v560
  %v562 = vpop.f32.mrb[0].mxu0
  %v563 = vpop.f32.mrb[0].mxu0
  %v564 = vadd.f32 %v116, %v563
  %v565 = vpop.f32.mrb[0].mxu0
  %566 = vdwg.mxu0
  %567 = vmatprep.subr.bf16.mxu0 0
  %568 = vmatpush1.bf16.msra.mxu0 %v422
  %569 = vmatprep.subr.bf16.mxu0 0
  %570 = vmatpush1.bf16.msra.mxu0 %v423
  %571 = vmatprep.subr.bf16.mxu0 0
  %572 = vmatpush1.bf16.msra.mxu0 %v424
  %573 = vmatprep.subr.bf16.mxu0 0
  %574 = vmatpush1.bf16.msra.mxu0 %v425
  %575 = vmatprep.subr.bf16.mxu0 0
  %576 = vmatpush1.bf16.msra.mxu0 %v426
  %577 = vmatprep.subr.bf16.mxu0 0
  %578 = vmatpush1.bf16.msra.mxu0 %v427
  %579 = vmatprep.subr.bf16.mxu0 0
  %580 = vmatpush1.bf16.msra.mxu0 %v428
  %581 = vmatprep.subr.bf16.mxu0 0
  %582 = vmatpush1.bf16.msra.mxu0 %v429
  %583 = vmatprep.subr.bf16.mxu0 0
  %584 = vmatpush1.bf16.msra.mxu0 %v430
  %585 = vmatprep.subr.bf16.mxu0 0
  %586 = vmatpush1.bf16.msra.mxu0 %v431
  %587 = vmatprep.subr.bf16.mxu0 0
  %588 = vmatpush1.bf16.msra.mxu0 %v432
  %589 = vmatprep.subr.bf16.mxu0 0
  %590 = vmatpush1.bf16.msra.mxu0 %v433
  %591 = vmatprep.subr.bf16.mxu0 0
  %592 = vmatpush1.bf16.msra.mxu0 %v434
  %593 = vmatprep.subr.bf16.mxu0 0
  %594 = vmatpush1.bf16.msra.mxu0 %v435
  %595 = vmatprep.subr.bf16.mxu0 0
  %596 = vmatpush1.bf16.msra.mxu0 %v436
  %597 = vmatprep.subr.bf16.mxu0 0
  %598 = vmatpush1.bf16.msra.mxu0 %v437
  %599 = vmatprep.mubr.bf16.mxu0 %v217
  %600 = vmatmul.mubr.bf16.gmra.mrb[0].mxu0 %v216
  %v601 = vpop.f32.mrb[0].mxu0
  %v602 = vadd.f32 %v505, %v601
  %v603 = vpop.f32.mrb[0].mxu0
  %v604 = vpop.f32.mrb[0].mxu0
  %v605 = vadd.f32 %v508, %v604
  %v606 = vpop.f32.mrb[0].mxu0
  %607 = vmatprep.mubr.bf16.mxu0 %v221
  %608 = vmatmul.mubr.bf16.gmra.mrb[0].mxu0 %v220
  %v609 = vpop.f32.mrb[0].mxu0
  %v610 = vadd.f32 %v513, %v609
  %v611 = vpop.f32.mrb[0].mxu0
  %v612 = vpop.f32.mrb[0].mxu0
  %v613 = vadd.f32 %v516, %v612
  %v614 = vpop.f32.mrb[0].mxu0
  %615 = vmatprep.mubr.bf16.mxu0 %v225
  %616 = vmatmul.mubr.bf16.gmra.mrb[0].mxu0 %v224
  %v617 = vpop.f32.mrb[0].mxu0
  %v618 = vadd.f32 %v521, %v617
  %v619 = vpop.f32.mrb[0].mxu0
  %v620 = vpop.f32.mrb[0].mxu0
  %v621 = vadd.f32 %v524, %v620
  %v622 = vpop.f32.mrb[0].mxu0
  %623 = vmatprep.mubr.bf16.mxu0 %v229
  %624 = vmatmul.mubr.bf16.gmra.mrb[0].mxu0 %v228
  %v625 = vpop.f32.mrb[0].mxu0
  %v626 = vadd.f32 %v529, %v625
  %v627 = vpop.f32.mrb[0].mxu0
  %v628 = vpop.f32.mrb[0].mxu0
  %v629 = vadd.f32 %v532, %v628
  %v630 = vpop.f32.mrb[0].mxu0
  %631 = vmatprep.mubr.bf16.mxu0 %v233
  %632 = vmatmul.mubr.bf16.gmra.mrb[0].mxu0 %v232
  %v633 = vpop.f32.mrb[0].mxu0
  %v634 = vadd.f32 %v537, %v633
  %v635 = vpop.f32.mrb[0].mxu0
  %v636 = vpop.f32.mrb[0].mxu0
  %v637 = vadd.f32 %v540, %v636
  %v638 = vpop.f32.mrb[0].mxu0
  %639 = vmatprep.mubr.bf16.mxu0 %v237
  %640 = vmatmul.mubr.bf16.gmra.mrb[0].mxu0 %v236
  %v641 = vpop.f32.mrb[0].mxu0
  %v642 = vadd.f32 %v545, %v641
  %v643 = vpop.f32.mrb[0].mxu0
  %v644 = vpop.f32.mrb[0].mxu0
  %v645 = vadd.f32 %v548, %v644
  %v646 = vpop.f32.mrb[0].mxu0
  %647 = vmatprep.mubr.bf16.mxu0 %v241
  %648 = vmatmul.mubr.bf16.gmra.mrb[0].mxu0 %v240
  %v649 = vpop.f32.mrb[0].mxu0
  %v650 = vadd.f32 %v553, %v649
  %v651 = vpop.f32.mrb[0].mxu0
  %v652 = vpop.f32.mrb[0].mxu0
  %v653 = vadd.f32 %v556, %v652
  %v654 = vpop.f32.mrb[0].mxu0
  %655 = vmatprep.mubr.bf16.mxu0 %v245
  %656 = vmatmul.mubr.bf16.gmra.mrb[0].mxu0 %v244
  %v657 = vpop.f32.mrb[0].mxu0
  %v658 = vadd.f32 %v561, %v657
  %v659 = vpop.f32.mrb[0].mxu0
  %v660 = vpop.f32.mrb[0].mxu0
  %v661 = vadd.f32 %v564, %v660
  %v662 = vpop.f32.mrb[0].mxu0
  %663 = vdwg.mxu0
  %v664 = vmax.f32 %v602, 0.0
  %v665 = vmax.f32 %v605, 0.0
  %v666 = vmax.f32 %v610, 0.0
  %v667 = vmax.f32 %v613, 0.0
  %v668 = vmax.f32 %v618, 0.0
  %v669 = vmax.f32 %v621, 0.0
  %v670 = vmax.f32 %v626, 0.0
  %v671 = vmax.f32 %v629, 0.0
  %v672 = vmax.f32 %v634, 0.0
  %v673 = vmax.f32 %v637, 0.0
  %v674 = vmax.f32 %v642, 0.0
  %v675 = vmax.f32 %v645, 0.0
  %v676 = vmax.f32 %v650, 0.0
  %v677 = vmax.f32 %v653, 0.0
  %v678 = vmax.f32 %v658, 0.0
  %v679 = vmax.f32 %v661, 0.0
  %v680 = vpack.c.bf16 %v665, %v664
  %v681 = vpack.c.bf16 %v667, %v666
  %v682 = vpack.c.bf16 %v669, %v668
  %v683 = vpack.c.bf16 %v671, %v670
  %v684 = vpack.c.bf16 %v673, %v672
  %v685 = vpack.c.bf16 %v675, %v674
  %v686 = vpack.c.bf16 %v677, %v676
  %v687 = vpack.c.bf16 %v679, %v678
  %v696 = vunpack.c.l.b16 %v680
  %v697 = vunpack.c.h.b16 %v680
  %v698 = vunpack.c.l.b16 %v681
  %v699 = vunpack.c.h.b16 %v681
  %v700 = vunpack.c.l.b16 %v682
  %v701 = vunpack.c.h.b16 %v682
  %v702 = vunpack.c.l.b16 %v683
  %v703 = vunpack.c.h.b16 %v683
  %v704 = vunpack.c.l.b16 %v684
  %v705 = vunpack.c.h.b16 %v684
  %v706 = vunpack.c.l.b16 %v685
  %v707 = vunpack.c.h.b16 %v685
  %v708 = vunpack.c.l.b16 %v686
  %v709 = vunpack.c.h.b16 %v686
  %v710 = vunpack.c.l.b16 %v687
  %v711 = vunpack.c.h.b16 %v687
  %v712 = vpack.c.b16 %v696, %v696
  %v713 = vpack.c.b16 %v697, %v697
  %v714 = vpack.c.b16 %v698, %v698
  %v715 = vpack.c.b16 %v699, %v699
  %v716 = vpack.c.b16 %v700, %v700
  %v717 = vpack.c.b16 %v701, %v701
  %v718 = vpack.c.b16 %v702, %v702
  %v719 = vpack.c.b16 %v703, %v703
  %v720 = vpack.c.b16 %v704, %v704
  %v721 = vpack.c.b16 %v705, %v705
  %v722 = vpack.c.b16 %v706, %v706
  %v723 = vpack.c.b16 %v707, %v707
  %v724 = vpack.c.b16 %v708, %v708
  %v725 = vpack.c.b16 %v709, %v709
  %v726 = vpack.c.b16 %v710, %v710
  %v727 = vpack.c.b16 %v711, %v711
  %744 = vst [vmem:[%s3] sm:$0xf] %v712
  %745 = vst [vmem:[%s3 + $0x4] sm:$0xf] %v713
  %746 = vst [vmem:[%s3 + $0x8] sm:$0xf] %v714
  %747 = vst [vmem:[%s3 + $0xc] sm:$0xf] %v715
  %748 = vst [vmem:[%s3 + $0x10] sm:$0xf] %v716
  %749 = vst [vmem:[%s3 + $0x14] sm:$0xf] %v717
  %750 = vst [vmem:[%s3 + $0x18] sm:$0xf] %v718
  %751 = vst [vmem:[%s3 + $0x1c] sm:$0xf] %v719
  %752 = vst [vmem:[%s3 + $0x20] sm:$0xf] %v720
  %753 = vst [vmem:[%s3 + $0x24] sm:$0xf] %v721
  %754 = vst [vmem:[%s3 + $0x28] sm:$0xf] %v722
  %755 = vst [vmem:[%s3 + $0x2c] sm:$0xf] %v723
  %756 = vst [vmem:[%s3 + $0x30] sm:$0xf] %v724
  %757 = vst [vmem:[%s3 + $0x34] sm:$0xf] %v725
  %758 = vst [vmem:[%s3 + $0x38] sm:$0xf] %v726
  %759 = vst [vmem:[%s3 + $0x3c] sm:$0xf] %v727
  // Predicated region
  $region14: #{_lambda_.5} parent=0 // pred_check
    _
  $region15: #{_lambda_.5} parent=0 // pred_check_branch
    %761 = sbr.rel (0) target = $region17
  $region16: #{_lambda_.5} parent=0 // pred_region
    _
  $region17: #{_lambda_.5} parent=0 // pred_fallthru
    _
  // Predicated region
  $region18: #{_lambda_.5} parent=0 // pred_check
    _
  $region19: #{_lambda_.5} parent=0 // pred_check_branch
    %763 = sbr.rel (0) target = $region21
  $region20: #{_lambda_.5} parent=0 // pred_region
    _
  $region21: #{_lambda_.5} parent=0 // pred_fallthru
    _

// kernel: _lambda_.6
$region0: #{_lambda_.6}
  #allocation0 [shape = 'u32[]', space=smem, size = 0x4, offset = 0x4, fixed_abs, tag = 'smem constant byte address 0x4 - core index']
  #allocation1 [shape = 'u32[144,128]{1,0:T(1,128)}', space=vmem, size = 0x12000, scoped, tag = 'internal scratch']
  %s0 = inlined_call_operand.vmem [shape: bf16[72,576], index: 0, kind: input, shape index: {}]
  %s1 = inlined_call_operand.vmem [shape: bf16[576,128], index: 1, kind: input, shape index: {}]
  %s2 = inlined_call_operand.vmem [shape: f32[1,128], index: 2, kind: input, shape index: {}]
  %s3 = inlined_call_operand.vmem [shape: bf16[72,128], index: 3, kind: output, shape index: {}]
  %s4 = sld [smem:[#allocation0]]
  $region22: #{_lambda_.6} parent=0
    _
  %s6 = ssub.s32 1, %s4
  %s7 = scalar_select 0, %s6, %s4
  // Predicated region
  $region2: #{_lambda_.6} parent=0 // pred_check
    _
  $region3: #{_lambda_.6} parent=0 // pred_check_branch
    %9 = sbr.rel (0) target = $region5
  $region4: #{_lambda_.6} parent=0 // pred_region
    _
  $region5: #{_lambda_.6} parent=0 // pred_fallthru
    _
  // Predicated region
  $region6: #{_lambda_.6} parent=0 // pred_check
    _
  $region7: #{_lambda_.6} parent=0 // pred_check_branch
    %11 = sbr.rel (0) target = $region9
  $region8: #{_lambda_.6} parent=0 // pred_region
    _
  $region9: #{_lambda_.6} parent=0 // pred_fallthru
    _
  // Predicated region
  $region10: #{_lambda_.6} parent=0 // pred_check
    _
  $region11: #{_lambda_.6} parent=0 // pred_check_branch
    %13 = sbr.rel (0) target = $region13
  $region12: #{_lambda_.6} parent=0 // pred_region
    _
  $region13: #{_lambda_.6} parent=0 // pred_fallthru
    _
  %v15 = vld [vmem:[%s0] sm:$0xff]
  %v16 = vld [vmem:[%s0 + $0x8] sm:$0xff]
  %v17 = vld [vmem:[%s0 + $0x10] sm:$0xf]
  %v18 = vld [vmem:[%s0 + $0x14] sm:$0xff]
  %v19 = vld [vmem:[%s0 + $0x1c] sm:$0xff]
  %v20 = vld [vmem:[%s0 + $0x24] sm:$0xf]
  %v21 = vld [vmem:[%s0 + $0x28] sm:$0xff]
  %v22 = vld [vmem:[%s0 + $0x30] sm:$0xff]
  %v23 = vld [vmem:[%s0 + $0x38] sm:$0xf]
  %v24 = vld [vmem:[%s0 + $0x3c] sm:$0xff]
  %v25 = vld [vmem:[%s0 + $0x44] sm:$0xff]
  %v26 = vld [vmem:[%s0 + $0x4c] sm:$0xf]
  %v27 = vld [vmem:[%s0 + $0x50] sm:$0xff]
  %v28 = vld [vmem:[%s0 + $0x58] sm:$0xff]
  %v29 = vld [vmem:[%s0 + $0x60] sm:$0xf]
  %v30 = vld [vmem:[%s0 + $0x64] sm:$0xff]
  %v31 = vld [vmem:[%s0 + $0x6c] sm:$0xff]
  %v32 = vld [vmem:[%s0 + $0x74] sm:$0xf]
  %v33 = vld [vmem:[%s0 + $0x78] sm:$0xff]
  %v34 = vld [vmem:[%s0 + $0x80] sm:$0xff]
  %v35 = vld [vmem:[%s0 + $0x88] sm:$0xf]
  %v36 = vld [vmem:[%s0 + $0x8c] sm:$0xff]
  %v37 = vld [vmem:[%s0 + $0x94] sm:$0xff]
  %v38 = vld [vmem:[%s0 + $0x9c] sm:$0xf]
  %v39 = vld [vmem:[%s0 + $0xa0] sm:$0xff]
  %v40 = vld [vmem:[%s0 + $0xa8] sm:$0xff]
  %v41 = vld [vmem:[%s0 + $0xb0] sm:$0xf]
  %v42 = vld [vmem:[%s1] sm:$0xf]
  %v43 = vld [vmem:[%s1 + $0x4] sm:$0xf]
  %v44 = vld [vmem:[%s1 + $0x8] sm:$0xf]
  %v45 = vld [vmem:[%s1 + $0xc] sm:$0xf]
  %v46 = vld [vmem:[%s1 + $0x10] sm:$0xf]
  %v47 = vld [vmem:[%s1 + $0x14] sm:$0xf]
  %v48 = vld [vmem:[%s1 + $0x18] sm:$0xf]
  %v49 = vld [vmem:[%s1 + $0x1c] sm:$0xf]
  %v50 = vld [vmem:[%s1 + $0x20] sm:$0xf]
  %v51 = vld [vmem:[%s1 + $0x24] sm:$0xf]
  %v52 = vld [vmem:[%s1 + $0x28] sm:$0xf]
  %v53 = vld [vmem:[%s1 + $0x2c] sm:$0xf]
  %v54 = vld [vmem:[%s1 + $0x30] sm:$0xf]
  %v55 = vld [vmem:[%s1 + $0x34] sm:$0xf]
  %v56 = vld [vmem:[%s1 + $0x38] sm:$0xf]
  %v57 = vld [vmem:[%s1 + $0x3c] sm:$0xf]
  %v58 = vld [vmem:[%s1 + $0x40] sm:$0xf]
  %v59 = vld [vmem:[%s1 + $0x44] sm:$0xf]
  %v60 = vld [vmem:[%s1 + $0x48] sm:$0xf]
  %v61 = vld [vmem:[%s1 + $0x4c] sm:$0xf]
  %v62 = vld [vmem:[%s1 + $0x50] sm:$0xf]
  %v63 = vld [vmem:[%s1 + $0x54] sm:$0xf]
  %v64 = vld [vmem:[%s1 + $0x58] sm:$0xf]
  %v65 = vld [vmem:[%s1 + $0x5c] sm:$0xf]
  %v66 = vld [vmem:[%s1 + $0x60] sm:$0xf]
  %v67 = vld [vmem:[%s1 + $0x64] sm:$0xf]
  %v68 = vld [vmem:[%s1 + $0x68] sm:$0xf]
  %v69 = vld [vmem:[%s1 + $0x6c] sm:$0xf]
  %v70 = vld [vmem:[%s1 + $0x70] sm:$0xf]
  %v71 = vld [vmem:[%s1 + $0x74] sm:$0xf]
  %v72 = vld [vmem:[%s1 + $0x78] sm:$0xf]
  %v73 = vld [vmem:[%s1 + $0x7c] sm:$0xf]
  %v74 = vld [vmem:[%s1 + $0x80] sm:$0xf]
  %v75 = vld [vmem:[%s1 + $0x84] sm:$0xf]
  %v76 = vld [vmem:[%s1 + $0x88] sm:$0xf]
  %v77 = vld [vmem:[%s1 + $0x8c] sm:$0xf]
  %v78 = vld [vmem:[%s1 + $0x90] sm:$0xf]
  %v79 = vld [vmem:[%s1 + $0x94] sm:$0xf]
  %v80 = vld [vmem:[%s1 + $0x98] sm:$0xf]
  %v81 = vld [vmem:[%s1 + $0x9c] sm:$0xf]
  %v82 = vld [vmem:[%s1 + $0xa0] sm:$0xf]
  %v83 = vld [vmem:[%s1 + $0xa4] sm:$0xf]
  %v84 = vld [vmem:[%s1 + $0xa8] sm:$0xf]
  %v85 = vld [vmem:[%s1 + $0xac] sm:$0xf]
  %v86 = vld [vmem:[%s1 + $0xb0] sm:$0xf]
  %v87 = vld [vmem:[%s1 + $0xb4] sm:$0xf]
  %v88 = vld [vmem:[%s1 + $0xb8] sm:$0xf]
  %v89 = vld [vmem:[%s1 + $0xbc] sm:$0xf]
  %v90 = vld [vmem:[%s1 + $0xc0] sm:$0xf]
  %v91 = vld [vmem:[%s1 + $0xc4] sm:$0xf]
  %v92 = vld [vmem:[%s1 + $0xc8] sm:$0xf]
  %v93 = vld [vmem:[%s1 + $0xcc] sm:$0xf]
  %v94 = vld [vmem:[%s1 + $0xd0] sm:$0xf]
  %v95 = vld [vmem:[%s1 + $0xd4] sm:$0xf]
  %v96 = vld [vmem:[%s1 + $0xd8] sm:$0xf]
  %v97 = vld [vmem:[%s1 + $0xdc] sm:$0xf]
  %v98 = vld [vmem:[%s1 + $0xe0] sm:$0xf]
  %v99 = vld [vmem:[%s1 + $0xe4] sm:$0xf]
  %v100 = vld [vmem:[%s1 + $0xe8] sm:$0xf]
  %v101 = vld [vmem:[%s1 + $0xec] sm:$0xf]
  %v102 = vld [vmem:[%s1 + $0xf0] sm:$0xf]
  %v103 = vld [vmem:[%s1 + $0xf4] sm:$0xf]
  %v104 = vld [vmem:[%s1 + $0xf8] sm:$0xf]
  %v105 = vld [vmem:[%s1 + $0xfc] sm:$0xf]
  %v106 = vld [vmem:[%s1 + $0x100] sm:$0xf]
  %v107 = vld [vmem:[%s1 + $0x104] sm:$0xf]
  %v108 = vld [vmem:[%s1 + $0x108] sm:$0xf]
  %v109 = vld [vmem:[%s1 + $0x10c] sm:$0xf]
  %v110 = vld [vmem:[%s1 + $0x110] sm:$0xf]
  %v111 = vld [vmem:[%s1 + $0x114] sm:$0xf]
  %v112 = vld [vmem:[%s1 + $0x118] sm:$0xf]
  %v113 = vld [vmem:[%s1 + $0x11c] sm:$0xf]
  %v114 = vld [vmem:[%s2] sm:$0x1]
  %v116 = vlaneseq
  %v117 = vshrl.u32 %v116, 7
  %v118 = vsub.s32 0, %v117
  %v119 = vrot.slane %v114, %v118
  %v148 = vunpack.c.l.b16 %v15
  %v149 = vunpack.c.h.b16 %v15
  %v150 = vunpack.c.l.b16 %v16
  %v151 = vunpack.c.h.b16 %v16
  %v152 = vunpack.c.l.b16 %v17
  %v153 = vunpack.c.l.b16 %v18
  %v154 = vunpack.c.h.b16 %v18
  %v155 = vunpack.c.l.b16 %v19
  %v156 = vunpack.c.h.b16 %v19
  %v157 = vunpack.c.l.b16 %v20
  %v158 = vunpack.c.l.b16 %v21
  %v159 = vunpack.c.h.b16 %v21
  %v160 = vunpack.c.l.b16 %v22
  %v161 = vunpack.c.h.b16 %v22
  %v162 = vunpack.c.l.b16 %v23
  %v163 = vunpack.c.l.b16 %v24
  %v164 = vunpack.c.h.b16 %v24
  %v165 = vunpack.c.l.b16 %v25
  %v166 = vunpack.c.h.b16 %v25
  %v167 = vunpack.c.l.b16 %v26
  %v168 = vunpack.c.l.b16 %v27
  %v169 = vunpack.c.h.b16 %v27
  %v170 = vunpack.c.l.b16 %v28
  %v171 = vunpack.c.h.b16 %v28
  %v172 = vunpack.c.l.b16 %v29
  %v173 = vunpack.c.l.b16 %v30
  %v174 = vunpack.c.h.b16 %v30
  %v175 = vunpack.c.l.b16 %v31
  %v176 = vunpack.c.h.b16 %v31
  %v177 = vunpack.c.l.b16 %v32
  %v178 = vunpack.c.l.b16 %v33
  %v179 = vunpack.c.h.b16 %v33
  %v180 = vunpack.c.l.b16 %v34
  %v181 = vunpack.c.h.b16 %v34
  %v182 = vunpack.c.l.b16 %v35
  %v183 = vunpack.c.l.b16 %v36
  %v184 = vunpack.c.h.b16 %v36
  %v185 = vunpack.c.l.b16 %v37
  %v186 = vunpack.c.h.b16 %v37
  %v187 = vunpack.c.l.b16 %v38
  %v188 = vunpack.c.l.b16 %v39
  %v189 = vunpack.c.h.b16 %v39
  %v190 = vunpack.c.l.b16 %v40
  %v191 = vunpack.c.h.b16 %v40
  %v192 = vunpack.c.l.b16 %v41
  %v193 = vpack.c.b16 %v153, %v148
  %v194 = vpack.c.b16 %v154, %v149
  %v195 = vpack.c.b16 %v155, %v150
  %v196 = vpack.c.b16 %v156, %v151
  %v197 = vpack.c.b16 %v157, %v152
  %v198 = vpack.c.b16 %v163, %v158
  %v199 = vpack.c.b16 %v164, %v159
  %v200 = vpack.c.b16 %v165, %v160
  %v201 = vpack.c.b16 %v166, %v161
  %v202 = vpack.c.b16 %v167, %v162
  %v203 = vpack.c.b16 %v173, %v168
  %v204 = vpack.c.b16 %v174, %v169
  %v205 = vpack.c.b16 %v175, %v170
  %v206 = vpack.c.b16 %v176, %v171
  %v207 = vpack.c.b16 %v177, %v172
  %v208 = vpack.c.b16 %v183, %v178
  %v209 = vpack.c.b16 %v184, %v179
  %v210 = vpack.c.b16 %v185, %v180
  %v211 = vpack.c.b16 %v186, %v181
  %v212 = vpack.c.b16 %v187, %v182
  %v213 = vpack.c.b16 %v188, %v188
  %v214 = vpack.c.b16 %v189, %v189
  %v215 = vpack.c.b16 %v190, %v190
  %v216 = vpack.c.b16 %v191, %v191
  %v217 = vpack.c.b16 %v192, %v192
  %v310 = vunpack.c.l.b16 %v42
  %v311 = vunpack.c.l.b16 %v43
  %v312 = vunpack.c.l.b16 %v44
  %v313 = vunpack.c.l.b16 %v45
  %v314 = vunpack.c.l.b16 %v46
  %v315 = vunpack.c.l.b16 %v47
  %v316 = vunpack.c.l.b16 %v48
  %v317 = vunpack.c.l.b16 %v49
  %v318 = vunpack.c.l.b16 %v50
  %v319 = vunpack.c.l.b16 %v51
  %v320 = vunpack.c.l.b16 %v52
  %v321 = vunpack.c.l.b16 %v53
  %v322 = vunpack.c.l.b16 %v54
  %v323 = vunpack.c.l.b16 %v55
  %v324 = vunpack.c.l.b16 %v56
  %v325 = vunpack.c.l.b16 %v57
  %v326 = vunpack.c.l.b16 %v58
  %v327 = vunpack.c.l.b16 %v59
  %v328 = vunpack.c.l.b16 %v60
  %v329 = vunpack.c.l.b16 %v61
  %v330 = vunpack.c.l.b16 %v62
  %v331 = vunpack.c.l.b16 %v63
  %v332 = vunpack.c.l.b16 %v64
  %v333 = vunpack.c.l.b16 %v65
  %v334 = vunpack.c.l.b16 %v66
  %v335 = vunpack.c.l.b16 %v67
  %v336 = vunpack.c.l.b16 %v68
  %v337 = vunpack.c.l.b16 %v69
  %v338 = vunpack.c.l.b16 %v70
  %v339 = vunpack.c.l.b16 %v71
  %v340 = vunpack.c.l.b16 %v72
  %v341 = vunpack.c.l.b16 %v73
  %v342 = vunpack.c.l.b16 %v74
  %v343 = vunpack.c.l.b16 %v75
  %v344 = vunpack.c.l.b16 %v76
  %v345 = vunpack.c.l.b16 %v77
  %v346 = vunpack.c.l.b16 %v78
  %v347 = vunpack.c.l.b16 %v79
  %v348 = vunpack.c.l.b16 %v80
  %v349 = vunpack.c.l.b16 %v81
  %v350 = vunpack.c.l.b16 %v82
  %v351 = vunpack.c.l.b16 %v83
  %v352 = vunpack.c.l.b16 %v84
  %v353 = vunpack.c.l.b16 %v85
  %v354 = vunpack.c.l.b16 %v86
  %v355 = vunpack.c.l.b16 %v87
  %v356 = vunpack.c.l.b16 %v88
  %v357 = vunpack.c.l.b16 %v89
  %v358 = vunpack.c.l.b16 %v90
  %v359 = vunpack.c.l.b16 %v91
  %v360 = vunpack.c.l.b16 %v92
  %v361 = vunpack.c.l.b16 %v93
  %v362 = vunpack.c.l.b16 %v94
  %v363 = vunpack.c.l.b16 %v95
  %v364 = vunpack.c.l.b16 %v96
  %v365 = vunpack.c.l.b16 %v97
  %v366 = vunpack.c.l.b16 %v98
  %v367 = vunpack.c.l.b16 %v99
  %v368 = vunpack.c.l.b16 %v100
  %v369 = vunpack.c.l.b16 %v101
  %v370 = vunpack.c.l.b16 %v102
  %v371 = vunpack.c.l.b16 %v103
  %v372 = vunpack.c.l.b16 %v104
  %v373 = vunpack.c.l.b16 %v105
  %v374 = vunpack.c.l.b16 %v106
  %v375 = vunpack.c.l.b16 %v107
  %v376 = vunpack.c.l.b16 %v108
  %v377 = vunpack.c.l.b16 %v109
  %v378 = vunpack.c.l.b16 %v110
  %v379 = vunpack.c.l.b16 %v111
  %v380 = vunpack.c.l.b16 %v112
  %v381 = vunpack.c.l.b16 %v113
  %v382 = vpack.c.b16 %v311, %v310
  %v383 = vpack.c.b16 %v313, %v312
  %v384 = vpack.c.b16 %v315, %v314
  %v385 = vpack.c.b16 %v317, %v316
  %v386 = vpack.c.b16 %v319, %v318
  %v387 = vpack.c.b16 %v321, %v320
  %v388 = vpack.c.b16 %v323, %v322
  %v389 = vpack.c.b16 %v325, %v324
  %v390 = vpack.c.b16 %v327, %v326
  %v391 = vpack.c.b16 %v329, %v328
  %v392 = vpack.c.b16 %v331, %v330
  %v393 = vpack.c.b16 %v333, %v332
  %v394 = vpack.c.b16 %v335, %v334
  %v395 = vpack.c.b16 %v337, %v336
  %v396 = vpack.c.b16 %v339, %v338
  %v397 = vpack.c.b16 %v341, %v340
  %v398 = vpack.c.b16 %v343, %v342
  %v399 = vpack.c.b16 %v345, %v344
  %v400 = vpack.c.b16 %v347, %v346
  %v401 = vpack.c.b16 %v349, %v348
  %v402 = vpack.c.b16 %v351, %v350
  %v403 = vpack.c.b16 %v353, %v352
  %v404 = vpack.c.b16 %v355, %v354
  %v405 = vpack.c.b16 %v357, %v356
  %v406 = vpack.c.b16 %v359, %v358
  %v407 = vpack.c.b16 %v361, %v360
  %v408 = vpack.c.b16 %v363, %v362
  %v409 = vpack.c.b16 %v365, %v364
  %v410 = vpack.c.b16 %v367, %v366
  %v411 = vpack.c.b16 %v369, %v368
  %v412 = vpack.c.b16 %v371, %v370
  %v413 = vpack.c.b16 %v373, %v372
  %v414 = vpack.c.b16 %v375, %v374
  %v415 = vpack.c.b16 %v377, %v376
  %v416 = vpack.c.b16 %v379, %v378
  %v417 = vpack.c.b16 %v381, %v380
  %vm454 = vcmask 523264
  %v456 = vsel %vm454, %v197, 0
  %v459 = vsel %vm454, %v202, 0
  %v462 = vsel %vm454, %v207, 0
  %v465 = vsel %vm454, %v212, 0
  %v468 = vsel %vm454, %v217, 0
  %470 = vmatprep.subr.bf16.mxu0 0
  %471 = vmatpush1.bf16.msra.mxu0 %v382
  %472 = vmatprep.subr.bf16.mxu0 0
  %473 = vmatpush1.bf16.msra.mxu0 %v383
  %474 = vmatprep.subr.bf16.mxu0 0
  %475 = vmatpush1.bf16.msra.mxu0 %v384
  %476 = vmatprep.subr.bf16.mxu0 0
  %477 = vmatpush1.bf16.msra.mxu0 %v385
  %478 = vmatprep.subr.bf16.mxu0 0
  %479 = vmatpush1.bf16.msra.mxu0 %v386
  %480 = vmatprep.subr.bf16.mxu0 0
  %481 = vmatpush1.bf16.msra.mxu0 %v387
  %482 = vmatprep.subr.bf16.mxu0 0
  %483 = vmatpush1.bf16.msra.mxu0 %v388
  %484 = vmatprep.subr.bf16.mxu0 0
  %485 = vmatpush1.bf16.msra.mxu0 %v389
  %486 = vmatprep.subr.bf16.mxu0 0
  %487 = vmatpush1.bf16.msra.mxu0 %v390
  %488 = vmatprep.subr.bf16.mxu0 0
  %489 = vmatpush1.bf16.msra.mxu0 %v391
  %490 = vmatprep.subr.bf16.mxu0 0
  %491 = vmatpush1.bf16.msra.mxu0 %v392
  %492 = vmatprep.subr.bf16.mxu0 0
  %493 = vmatpush1.bf16.msra.mxu0 %v393
  %494 = vmatprep.subr.bf16.mxu0 0
  %495 = vmatpush1.bf16.msra.mxu0 %v394
  %496 = vmatprep.subr.bf16.mxu0 0
  %497 = vmatpush1.bf16.msra.mxu0 %v395
  %498 = vmatprep.subr.bf16.mxu0 0
  %499 = vmatpush1.bf16.msra.mxu0 %v396
  %500 = vmatprep.subr.bf16.mxu0 0
  %501 = vmatpush1.bf16.msra.mxu0 %v397
  %502 = vmatprep.mubr.bf16.mxu0 %v194
  %503 = vmatmul.mubr.bf16.gmra.mrb[0].mxu0 %v193
  %v504 = vpop.f32.mrb[0].mxu0
  %v505 = vadd.f32 %v119, %v504
  %v506 = vpop.f32.mrb[0].mxu0
  %v507 = vpop.f32.mrb[0].mxu0
  %v508 = vadd.f32 %v119, %v507
  %v509 = vpop.f32.mrb[0].mxu0
  %510 = vmatprep.mubr.bf16.mxu0 %v199
  %511 = vmatmul.mubr.bf16.gmra.mrb[0].mxu0 %v198
  %v512 = vpop.f32.mrb[0].mxu0
  %v513 = vadd.f32 %v119, %v512
  %v514 = vpop.f32.mrb[0].mxu0
  %v515 = vpop.f32.mrb[0].mxu0
  %v516 = vadd.f32 %v119, %v515
  %v517 = vpop.f32.mrb[0].mxu0
  %518 = vmatprep.mubr.bf16.mxu0 %v204
  %519 = vmatmul.mubr.bf16.gmra.mrb[0].mxu0 %v203
  %v520 = vpop.f32.mrb[0].mxu0
  %v521 = vadd.f32 %v119, %v520
  %v522 = vpop.f32.mrb[0].mxu0
  %v523 = vpop.f32.mrb[0].mxu0
  %v524 = vadd.f32 %v119, %v523
  %v525 = vpop.f32.mrb[0].mxu0
  %526 = vmatprep.mubr.bf16.mxu0 %v209
  %527 = vmatmul.mubr.bf16.gmra.mrb[0].mxu0 %v208
  %v528 = vpop.f32.mrb[0].mxu0
  %v529 = vadd.f32 %v119, %v528
  %v530 = vpop.f32.mrb[0].mxu0
  %v531 = vpop.f32.mrb[0].mxu0
  %v532 = vadd.f32 %v119, %v531
  %v533 = vpop.f32.mrb[0].mxu0
  %534 = vmatprep.mubr.bf16.mxu0 %v214
  %535 = vmatmul.mubr.bf16.gmra.mrb[0].mxu0 %v213
  %v536 = vpop.f32.mrb[0].mxu0
  %v537 = vadd.f32 %v119, %v536
  %v538 = vpop.f32.mrb[0].mxu0
  %v539 = vpop.f32.mrb[0].mxu0
  %v540 = vpop.f32.mrb[0].mxu0
  %541 = vdwg.mxu0
  %542 = vmatprep.subr.bf16.mxu0 0
  %543 = vmatpush1.bf16.msra.mxu0 %v398
  %544 = vmatprep.subr.bf16.mxu0 0
  %545 = vmatpush1.bf16.msra.mxu0 %v399
  %546 = vmatprep.subr.bf16.mxu0 0
  %547 = vmatpush1.bf16.msra.mxu0 %v400
  %548 = vmatprep.subr.bf16.mxu0 0
  %549 = vmatpush1.bf16.msra.mxu0 %v401
  %550 = vmatprep.subr.bf16.mxu0 0
  %551 = vmatpush1.bf16.msra.mxu0 %v402
  %552 = vmatprep.subr.bf16.mxu0 0
  %553 = vmatpush1.bf16.msra.mxu0 %v403
  %554 = vmatprep.subr.bf16.mxu0 0
  %555 = vmatpush1.bf16.msra.mxu0 %v404
  %556 = vmatprep.subr.bf16.mxu0 0
  %557 = vmatpush1.bf16.msra.mxu0 %v405
  %558 = vmatprep.subr.bf16.mxu0 0
  %559 = vmatpush1.bf16.msra.mxu0 %v406
  %560 = vmatprep.subr.bf16.mxu0 0
  %561 = vmatpush1.bf16.msra.mxu0 %v407
  %562 = vmatprep.subr.bf16.mxu0 0
  %563 = vmatpush1.bf16.msra.mxu0 %v408
  %564 = vmatprep.subr.bf16.mxu0 0
  %565 = vmatpush1.bf16.msra.mxu0 %v409
  %566 = vmatprep.subr.bf16.mxu0 0
  %567 = vmatpush1.bf16.msra.mxu0 %v410
  %568 = vmatprep.subr.bf16.mxu0 0
  %569 = vmatpush1.bf16.msra.mxu0 %v411
  %570 = vmatprep.subr.bf16.mxu0 0
  %571 = vmatpush1.bf16.msra.mxu0 %v412
  %572 = vmatprep.subr.bf16.mxu0 0
  %573 = vmatpush1.bf16.msra.mxu0 %v413
  %574 = vmatprep.mubr.bf16.mxu0 %v196
  %575 = vmatmul.mubr.bf16.gmra.mrb[0].mxu0 %v195
  %v576 = vpop.f32.mrb[0].mxu0
  %v577 = vadd.f32 %v505, %v576
  %v578 = vpop.f32.mrb[0].mxu0
  %v579 = vpop.f32.mrb[0].mxu0
  %v580 = vadd.f32 %v508, %v579
  %v581 = vpop.f32.mrb[0].mxu0
  %582 = vmatprep.mubr.bf16.mxu0 %v201
  %583 = vmatmul.mubr.bf16.gmra.mrb[0].mxu0 %v200
  %v584 = vpop.f32.mrb[0].mxu0
  %v585 = vadd.f32 %v513, %v584
  %v586 = vpop.f32.mrb[0].mxu0
  %v587 = vpop.f32.mrb[0].mxu0
  %v588 = vadd.f32 %v516, %v587
  %v589 = vpop.f32.mrb[0].mxu0
  %590 = vmatprep.mubr.bf16.mxu0 %v206
  %591 = vmatmul.mubr.bf16.gmra.mrb[0].mxu0 %v205
  %v592 = vpop.f32.mrb[0].mxu0
  %v593 = vadd.f32 %v521, %v592
  %v594 = vpop.f32.mrb[0].mxu0
  %v595 = vpop.f32.mrb[0].mxu0
  %v596 = vadd.f32 %v524, %v595
  %v597 = vpop.f32.mrb[0].mxu0
  %598 = vmatprep.mubr.bf16.mxu0 %v211
  %599 = vmatmul.mubr.bf16.gmra.mrb[0].mxu0 %v210
  %v600 = vpop.f32.mrb[0].mxu0
  %v601 = vadd.f32 %v529, %v600
  %v602 = vpop.f32.mrb[0].mxu0
  %v603 = vpop.f32.mrb[0].mxu0
  %v604 = vadd.f32 %v532, %v603
  %v605 = vpop.f32.mrb[0].mxu0
  %606 = vmatprep.mubr.bf16.mxu0 %v216
  %607 = vmatmul.mubr.bf16.gmra.mrb[0].mxu0 %v215
  %v608 = vpop.f32.mrb[0].mxu0
  %v609 = vadd.f32 %v537, %v608
  %v610 = vpop.f32.mrb[0].mxu0
  %v611 = vpop.f32.mrb[0].mxu0
  %v612 = vpop.f32.mrb[0].mxu0
  %613 = vdwg.mxu0
  %614 = vmatprep.subr.bf16.mxu0 0
  %615 = vmatpush1.bf16.msra.mxu0 %v414
  %616 = vmatprep.subr.bf16.mxu0 0
  %617 = vmatpush1.bf16.msra.mxu0 %v415
  %618 = vmatprep.subr.bf16.mxu0 0
  %619 = vmatpush1.bf16.msra.mxu0 %v416
  %620 = vmatprep.subr.bf16.mxu0 0
  %621 = vmatpush1.bf16.msra.mxu0 %v417
  %622 = vmatprep.subr.bf16.mxu0 0
  %623 = vmatpush1.bf16.msra.mxu0 0
  %624 = vmatprep.subr.bf16.mxu0 0
  %625 = vmatpush1.bf16.msra.mxu0 0
  %626 = vmatprep.subr.bf16.mxu0 0
  %627 = vmatpush1.bf16.msra.mxu0 0
  %628 = vmatprep.subr.bf16.mxu0 0
  %629 = vmatpush1.bf16.msra.mxu0 0
  %630 = vmatprep.subr.bf16.mxu0 0
  %631 = vmatpush1.bf16.msra.mxu0 0
  %632 = vmatprep.subr.bf16.mxu0 0
  %633 = vmatpush1.bf16.msra.mxu0 0
  %634 = vmatprep.subr.bf16.mxu0 0
  %635 = vmatpush1.bf16.msra.mxu0 0
  %636 = vmatprep.subr.bf16.mxu0 0
  %637 = vmatpush1.bf16.msra.mxu0 0
  %638 = vmatprep.subr.bf16.mxu0 0
  %639 = vmatpush1.bf16.msra.mxu0 0
  %640 = vmatprep.subr.bf16.mxu0 0
  %641 = vmatpush1.bf16.msra.mxu0 0
  %642 = vmatprep.subr.bf16.mxu0 0
  %643 = vmatpush1.bf16.msra.mxu0 0
  %644 = vmatprep.subr.bf16.mxu0 0
  %645 = vmatpush1.bf16.msra.mxu0 0
  %646 = vmatprep.mubr.bf16.mxu0 0
  %647 = vmatmul.mubr.bf16.gmra.mrb[0].mxu0 %v456
  %v648 = vpop.f32.mrb[0].mxu0
  %v649 = vadd.f32 %v577, %v648
  %v650 = vpop.f32.mrb[0].mxu0
  %v651 = vpop.f32.mrb[0].mxu0
  %v652 = vadd.f32 %v580, %v651
  %v653 = vpop.f32.mrb[0].mxu0
  %654 = vmatprep.mubr.bf16.mxu0 0
  %655 = vmatmul.mubr.bf16.gmra.mrb[0].mxu0 %v459
  %v656 = vpop.f32.mrb[0].mxu0
  %v657 = vadd.f32 %v585, %v656
  %v658 = vpop.f32.mrb[0].mxu0
  %v659 = vpop.f32.mrb[0].mxu0
  %v660 = vadd.f32 %v588, %v659
  %v661 = vpop.f32.mrb[0].mxu0
  %662 = vmatprep.mubr.bf16.mxu0 0
  %663 = vmatmul.mubr.bf16.gmra.mrb[0].mxu0 %v462
  %v664 = vpop.f32.mrb[0].mxu0
  %v665 = vadd.f32 %v593, %v664
  %v666 = vpop.f32.mrb[0].mxu0
  %v667 = vpop.f32.mrb[0].mxu0
  %v668 = vadd.f32 %v596, %v667
  %v669 = vpop.f32.mrb[0].mxu0
  %670 = vmatprep.mubr.bf16.mxu0 0
  %671 = vmatmul.mubr.bf16.gmra.mrb[0].mxu0 %v465
  %v672 = vpop.f32.mrb[0].mxu0
  %v673 = vadd.f32 %v601, %v672
  %v674 = vpop.f32.mrb[0].mxu0
  %v675 = vpop.f32.mrb[0].mxu0
  %v676 = vadd.f32 %v604, %v675
  %v677 = vpop.f32.mrb[0].mxu0
  %678 = vmatprep.mubr.bf16.mxu0 0
  %679 = vmatmul.mubr.bf16.gmra.mrb[0].mxu0 %v468
  %v680 = vpop.f32.mrb[0].mxu0
  %v681 = vadd.f32 %v609, %v680
  %v682 = vpop.f32.mrb[0].mxu0
  %v683 = vpop.f32.mrb[0].mxu0
  %v684 = vpop.f32.mrb[0].mxu0
  %685 = vdwg.mxu0
  %v686 = vmax.f32 %v649, 0.0
  %v687 = vmax.f32 %v652, 0.0
  %v688 = vmax.f32 %v657, 0.0
  %v689 = vmax.f32 %v660, 0.0
  %v690 = vmax.f32 %v665, 0.0
  %v691 = vmax.f32 %v668, 0.0
  %v692 = vmax.f32 %v673, 0.0
  %v693 = vmax.f32 %v676, 0.0
  %v694 = vmax.f32 %v681, 0.0
  %v695 = vpack.c.bf16 %v687, %v686
  %v696 = vpack.c.bf16 %v689, %v688
  %v697 = vpack.c.bf16 %v691, %v690
  %v698 = vpack.c.bf16 %v693, %v692
  %v699 = vpack.c.bf16 %v694, %v694
  %v705 = vunpack.c.l.b16 %v695
  %v706 = vunpack.c.h.b16 %v695
  %v707 = vunpack.c.l.b16 %v696
  %v708 = vunpack.c.h.b16 %v696
  %v709 = vunpack.c.l.b16 %v697
  %v710 = vunpack.c.h.b16 %v697
  %v711 = vunpack.c.l.b16 %v698
  %v712 = vunpack.c.h.b16 %v698
  %v713 = vunpack.c.l.b16 %v699
  %v714 = vpack.c.b16 %v705, %v705
  %v715 = vpack.c.b16 %v706, %v706
  %v716 = vpack.c.b16 %v707, %v707
  %v717 = vpack.c.b16 %v708, %v708
  %v718 = vpack.c.b16 %v709, %v709
  %v719 = vpack.c.b16 %v710, %v710
  %v720 = vpack.c.b16 %v711, %v711
  %v721 = vpack.c.b16 %v712, %v712
  %v722 = vpack.c.b16 %v713, %v713
  %732 = vst [vmem:[%s3] sm:$0xf] %v714
  %733 = vst [vmem:[%s3 + $0x4] sm:$0xf] %v715
  %734 = vst [vmem:[%s3 + $0x8] sm:$0xf] %v716
  %735 = vst [vmem:[%s3 + $0xc] sm:$0xf] %v717
  %736 = vst [vmem:[%s3 + $0x10] sm:$0xf] %v718
  %737 = vst [vmem:[%s3 + $0x14] sm:$0xf] %v719
  %738 = vst [vmem:[%s3 + $0x18] sm:$0xf] %v720
  %739 = vst [vmem:[%s3 + $0x1c] sm:$0xf] %v721
  %740 = vst [vmem:[%s3 + $0x20] sm:$0xf] %v722
  // Predicated region
  $region14: #{_lambda_.6} parent=0 // pred_check
    _
  $region15: #{_lambda_.6} parent=0 // pred_check_branch
    %742 = sbr.rel (0) target = $region17
  $region16: #{_lambda_.6} parent=0 // pred_region
    _
  $region17: #{_lambda_.6} parent=0 // pred_fallthru
    _
  // Predicated region
  $region18: #{_lambda_.6} parent=0 // pred_check
    _
  $region19: #{_lambda_.6} parent=0 // pred_check_branch
    %744 = sbr.rel (0) target = $region21
  $region20: #{_lambda_.6} parent=0 // pred_region
    _
  $region21: #{_lambda_.6} parent=0 // pred_fallthru
    _

// kernel: _lambda_.7
$region0: #{_lambda_.7}
  #allocation0 [shape = 'u32[]', space=smem, size = 0x4, offset = 0x4, fixed_abs, tag = 'smem constant byte address 0x4 - core index']
  #allocation1 [shape = 'u32[144,128]{1,0:T(1,128)}', space=vmem, size = 0x12000, scoped, tag = 'internal scratch']
  #allocation2 [shape = 'f32[8,512]{1,0:T(8,128)}', space=vmem, size = 0x4000, scoped, tag = 'scratch operand']
  %s0 = inlined_call_operand.vmem [shape: bf16[8,2304], index: 0, kind: input, shape index: {}]
  %s1 = inlined_call_operand.vmem [shape: bf16[2304,512], index: 1, kind: input, shape index: {}]
  %s2 = inlined_call_operand.vmem [shape: f32[1,512], index: 2, kind: input, shape index: {}]
  %s3 = inlined_call_operand.vmem [shape: bf16[512,128], index: 3, kind: input, shape index: {}]
  %s4 = inlined_call_operand.vmem [shape: f32[1,128], index: 4, kind: input, shape index: {}]
  %s5 = inlined_call_operand.vmem [shape: f32[8,128], index: 5, kind: output, shape index: {}]
  %s6 = sld [smem:[#allocation0]]
  $region61: #{_lambda_.7} parent=0
    _
  %s8 = ssub.s32 1, %s6
  %s9 = scalar_select 0, %s8, %s6
  loop: start=0, step=1, limit=5
  $region2: #{_lambda_.7} parent=0 // loop_pre_header
    _
  $region3: #{_lambda_.7} parent=0 // loop_header
    %s11 = sphi 0, %s15
    %p12 = scmp.ge.s32.totalorder %s11, 5
    %s21 = sphi 0, %s23
    %s24 = sphi 0, %s21
    %s25 = sphi 0, %s24
    %s41 = sphi 0, %s25
    %s47 = sphi 0, %s49
    %s50 = sphi 0, %s47
    %s51 = sphi 0, %s50
    %s67 = sphi 0, %s51
    %s71 = sphi 0, %s71
    %s73 = sphi 0, %s71
    %s74 = sphi 0, %s73
    %s88 = sphi 0, %s74
    %s92 = sphi 0, %s92
    %s94 = sphi 0, %s92
    %s95 = sphi 0, %s94
    %s109 = sphi 0, %s95
    %s113 = sphi 0, %s113
    %s115 = sphi 0, %s113
    %s116 = sphi 0, %s115
    %s130 = sphi 0, %s116
    %s134 = sphi 0, %s134
    %s136 = sphi 0, %s134
    %s137 = sphi 0, %s136
    %s151 = sphi 0, %s137
  $region4: #{_lambda_.7} parent=0 // loop_header_branch
    %14 = sbr.rel (%p12) target = $region8
  $region5: #{_lambda_.7} parent=0 // loop_body
    %s16 = ssub.s32 %s11, 1
    %s17 = ssub.s32 %s11, 2
    %s18 = sadd.s32 %s11, 1
    %s19 = ssub.s32 %s11, %s18
    %p20 = scmp.eq.s32.totalorder %s19, 0
    %s22 = sadd.s32 %s21, 1
    %s23 = scalar_select %p20, %s21, %s22
    %p26 = pneg %p20
    %p27 = scmp.eq.s32.totalorder %s11, 2
    %p28 = por %p26, %p27
    %p29 = scmp.ne.s32.totalorder %s21, %s24
    %p30 = scmp.eq.s32.totalorder %s11, 0
    %p31 = por %p29, %p30
    %p32 = scmp.ne.s32.totalorder %s21, %s24
    %p33 = scmp.eq.s32.totalorder %s16, 2
    %p34 = por %p32, %p33
    %p35 = scmp.ne.s32.totalorder %s24, %s25
    %p36 = scmp.eq.s32.totalorder %s16, 0
    %p37 = por %p35, %p36
    %p38 = scmp.ne.s32.totalorder %s24, %s25
    %p39 = scmp.eq.s32.totalorder %s17, 2
    %p40 = por %p38, %p39
    %p42 = scmp.ne.s32.totalorder %s25, %s41
    %p43 = scmp.eq.s32.totalorder %s17, 0
    %p44 = por %p42, %p43
    %s45 = ssub.s32 %s11, %s18
    %p46 = scmp.eq.s32.totalorder %s45, 0
    %s48 = sadd.s32 %s47, 1
    %s49 = scalar_select %p46, %s47, %s48
    %p52 = pneg %p46
    %p53 = scmp.eq.s32.totalorder %s11, 2
    %p54 = por %p52, %p53
    %p55 = scmp.ne.s32.totalorder %s47, %s50
    %p56 = scmp.eq.s32.totalorder %s11, 0
    %p57 = por %p55, %p56
    %p58 = scmp.ne.s32.totalorder %s47, %s50
    %p59 = scmp.eq.s32.totalorder %s16, 2
    %p60 = por %p58, %p59
    %p61 = scmp.ne.s32.totalorder %s50, %s51
    %p62 = scmp.eq.s32.totalorder %s16, 0
    %p63 = por %p61, %p62
    %p64 = scmp.ne.s32.totalorder %s50, %s51
    %p65 = scmp.eq.s32.totalorder %s17, 2
    %p66 = por %p64, %p65
    %p68 = scmp.ne.s32.totalorder %s51, %s67
    %p69 = scmp.eq.s32.totalorder %s17, 0
    %p70 = por %p68, %p69
    %s72 = sadd.s32 %s71, 1
    %p75 = scmp.eq.s32.totalorder %s11, 2
    %p76 = scmp.ne.s32.totalorder %s71, %s73
    %p77 = scmp.eq.s32.totalorder %s11, 0
    %p78 = por %p76, %p77
    %p79 = scmp.ne.s32.totalorder %s71, %s73
    %p80 = scmp.eq.s32.totalorder %s16, 2
    %p81 = por %p79, %p80
    %p82 = scmp.ne.s32.totalorder %s73, %s74
    %p83 = scmp.eq.s32.totalorder %s16, 0
    %p84 = por %p82, %p83
    %p85 = scmp.ne.s32.totalorder %s73, %s74
    %p86 = scmp.eq.s32.totalorder %s17, 2
    %p87 = por %p85, %p86
    %p89 = scmp.ne.s32.totalorder %s74, %s88
    %p90 = scmp.eq.s32.totalorder %s17, 0
    %p91 = por %p89, %p90
    %s93 = sadd.s32 %s92, 1
    %p96 = scmp.eq.s32.totalorder %s11, 2
    %p97 = scmp.ne.s32.totalorder %s92, %s94
    %p98 = scmp.eq.s32.totalorder %s11, 0
    %p99 = por %p97, %p98
    %p100 = scmp.ne.s32.totalorder %s92, %s94
    %p101 = scmp.eq.s32.totalorder %s16, 2
    %p102 = por %p100, %p101
    %p103 = scmp.ne.s32.totalorder %s94, %s95
    %p104 = scmp.eq.s32.totalorder %s16, 0
    %p105 = por %p103, %p104
    %p106 = scmp.ne.s32.totalorder %s94, %s95
    %p107 = scmp.eq.s32.totalorder %s17, 2
    %p108 = por %p106, %p107
    %p110 = scmp.ne.s32.totalorder %s95, %s109
    %p111 = scmp.eq.s32.totalorder %s17, 0
    %p112 = por %p110, %p111
    %s114 = sadd.s32 %s113, 1
    %p117 = scmp.eq.s32.totalorder %s11, 2
    %p118 = scmp.ne.s32.totalorder %s113, %s115
    %p119 = scmp.eq.s32.totalorder %s11, 0
    %p120 = por %p118, %p119
    %p121 = scmp.ne.s32.totalorder %s113, %s115
    %p122 = scmp.eq.s32.totalorder %s16, 2
    %p123 = por %p121, %p122
    %p124 = scmp.ne.s32.totalorder %s115, %s116
    %p125 = scmp.eq.s32.totalorder %s16, 0
    %p126 = por %p124, %p125
    %p127 = scmp.ne.s32.totalorder %s115, %s116
    %p128 = scmp.eq.s32.totalorder %s17, 2
    %p129 = por %p127, %p128
    %p131 = scmp.ne.s32.totalorder %s116, %s130
    %p132 = scmp.eq.s32.totalorder %s17, 0
    %p133 = por %p131, %p132
    %s135 = sadd.s32 %s134, 1
    %p138 = scmp.eq.s32.totalorder %s11, 2
    %p139 = scmp.ne.s32.totalorder %s134, %s136
    %p140 = scmp.eq.s32.totalorder %s11, 0
    %p141 = por %p139, %p140
    %p142 = scmp.ne.s32.totalorder %s134, %s136
    %p143 = scmp.eq.s32.totalorder %s16, 2
    %p144 = por %p142, %p143
    %p145 = scmp.ne.s32.totalorder %s136, %s137
    %p146 = scmp.eq.s32.totalorder %s16, 0
    %p147 = por %p145, %p146
    %p148 = scmp.ne.s32.totalorder %s136, %s137
    %p149 = scmp.eq.s32.totalorder %s17, 2
    %p150 = por %p148, %p149
    %p152 = scmp.ne.s32.totalorder %s137, %s151
    %p153 = scmp.eq.s32.totalorder %s17, 0
    %p154 = por %p152, %p153
    %p155 = scmp.le.s32.totalorder 1, %s11
    %p156 = scmp.lt.s32.totalorder %s11, 4
    %p157 = pnand %p155, %p156
    %p158 = pneg %p157
    // Predicated region
    $region9: #{_lambda_.7} parent=5 // pred_check
      _
    $region10: #{_lambda_.7} parent=5 // pred_check_branch
      %160 = sbr.rel (%p157) target = $region12
    $region11: #{_lambda_.7} parent=5 // pred_region
      %s161 = ssub.s32 %s11, 1
      // Predicated region
      $region13: #{_lambda_.7} parent=11 // pred_check
        %p162 = pneg %p84
      $region14: #{_lambda_.7} parent=11 // pred_check_branch
        %164 = sbr.rel (%p162) target = $region16
      $region15: #{_lambda_.7} parent=11 // pred_region
        _
      $region16: #{_lambda_.7} parent=11 // pred_fallthru
        _
      // Predicated region
      $region17: #{_lambda_.7} parent=11 // pred_check
        %p165 = pneg %p105
      $region18: #{_lambda_.7} parent=11 // pred_check_branch
        %167 = sbr.rel (%p165) target = $region20
      $region19: #{_lambda_.7} parent=11 // pred_region
        _
      $region20: #{_lambda_.7} parent=11 // pred_fallthru
        _
      // Predicated region
      $region21: #{_lambda_.7} parent=11 // pred_check
        %p168 = pneg %p126
      $region22: #{_lambda_.7} parent=11 // pred_check_branch
        %170 = sbr.rel (%p168) target = $region24
      $region23: #{_lambda_.7} parent=11 // pred_region
        _
      $region24: #{_lambda_.7} parent=11 // pred_fallthru
        _
    $region12: #{_lambda_.7} parent=5 // pred_fallthru
      _
    %p171 = scmp.lt.s32.totalorder %s11, 3
    // Predicated region
    $region25: #{_lambda_.7} parent=5 // pred_check
      %p172 = pneg %p171
    $region26: #{_lambda_.7} parent=5 // pred_check_branch
      %174 = sbr.rel (%p172) target = $region28
    $region27: #{_lambda_.7} parent=5 // pred_region
      // Predicated region
      $region29: #{_lambda_.7} parent=27 // pred_check
        %p175 = pneg %p31
      $region30: #{_lambda_.7} parent=27 // pred_check_branch
        %177 = sbr.rel (%p175) target = $region32
      $region31: #{_lambda_.7} parent=27 // pred_region
        %s178 = smul.u32 6, %s11
        %p179 = scmp.lt.s32.totalorder %s178, 17
        %s180 = scalar_select %p179, %s178, 17
        %s181 = smul.addr %s180, 4
        %s182 = scalar_lea.vmem %s0, %s181
        %s183 = smul.u32 6, %s11
      $region32: #{_lambda_.7} parent=27 // pred_fallthru
        _
      // Predicated region
      $region33: #{_lambda_.7} parent=27 // pred_check
        %p184 = pneg %p57
      $region34: #{_lambda_.7} parent=27 // pred_check_branch
        %186 = sbr.rel (%p184) target = $region36
      $region35: #{_lambda_.7} parent=27 // pred_region
        %s187 = smul.u32 96, %s11
        %p188 = scmp.lt.s32.totalorder %s187, 287
        %s189 = scalar_select %p188, %s187, 287
        %s190 = smul.addr %s189, 4
        %s191 = smul.addr %s190, 4
        %s192 = scalar_lea.vmem %s1, %s191
        %s193 = smul.u32 96, %s11
      $region36: #{_lambda_.7} parent=27 // pred_fallthru
        _
    $region28: #{_lambda_.7} parent=5 // pred_fallthru
      _
    %p194 = scmp.le.s32.totalorder 1, %s11
    %p195 = scmp.lt.s32.totalorder %s11, 4
    %p196 = pnand %p194, %p195
    %p197 = pneg %p196
    // Predicated region
    $region37: #{_lambda_.7} parent=5 // pred_check
      _
    $region38: #{_lambda_.7} parent=5 // pred_check_branch
      %199 = sbr.rel (%p196) target = $region40
    $region39: #{_lambda_.7} parent=5 // pred_region
      %s200 = ssub.s32 %s11, 1
      %s201 = smul.u32 6, %s16
      %p202 = scmp.lt.s32.totalorder %s201, 17
      %s203 = scalar_select %p202, %s201, 17
      %s204 = smul.addr %s203, 4
      %s205 = scalar_lea.vmem %s0, %s204
      %p206 = pneg %p37
      %p207 = pneg %p34
      %s208 = smul.u32 96, %s16
      %p209 = scmp.lt.s32.totalorder %s208, 287
      %s210 = scalar_select %p209, %s208, 287
      %s211 = smul.addr %s210, 4
      %s212 = smul.addr %s211, 4
      %s213 = scalar_lea.vmem %s1, %s212
      %p214 = pneg %p63
      %p215 = pneg %p60
      %p216 = pneg %p84
      %p217 = pneg %p81
      %p218 = pneg %p105
      %p219 = pneg %p102
      %p220 = pneg %p126
      %p221 = pneg %p123
      %p222 = pneg %p147
      %p223 = pneg %p144
      %s224 = smul.u32 6, %s16
      %p225 = scmp.lt.s32.totalorder %s224, 17
      %s226 = scalar_select %p225, %s224, 17
      %s227 = smul.addr %s226, 4
      %s228 = scalar_lea.vmem %s0, %s227
      %s229 = smul.u32 6, %s16
      %s230 = smul.u32 96, %s16
      %p231 = scmp.lt.s32.totalorder %s230, 287
      %s232 = scalar_select %p231, %s230, 287
      %s233 = smul.addr %s232, 4
      %s234 = smul.addr %s233, 4
      %s235 = scalar_lea.vmem %s1, %s234
      %s236 = smul.u32 96, %s16
      %p238 = scmp.eq.s32.totalorder %s16, 0
      // Predicated region
      $region41: #{_lambda_.7} parent=39 // pred_check
        %p239 = pneg %p238
      $region42: #{_lambda_.7} parent=39 // pred_check_branch
        %241 = sbr.rel (%p239) target = $region44
      $region43: #{_lambda_.7} parent=39 // pred_region
        %242 = vst [vmem:[#allocation2] sm:$0xff] 0.0
        %243 = vst [vmem:[#allocation2 + $0x8] sm:$0xff] 0.0
        %244 = vst [vmem:[#allocation2 + $0x10] sm:$0xff] 0.0
        %245 = vst [vmem:[#allocation2 + $0x18] sm:$0xff] 0.0
      $region44: #{_lambda_.7} parent=39 // pred_fallthru
        _
      %v246 = vld [vmem:[#allocation2] sm:$0xff]
      %v247 = vld [vmem:[#allocation2 + $0x8] sm:$0xff]
      %v248 = vld [vmem:[#allocation2 + $0x10] sm:$0xff]
      %v249 = vld [vmem:[#allocation2 + $0x18] sm:$0xff]
      %v250 = vld [vmem:[%s228] sm:$0xff]
      %v251 = vld [vmem:[%s228 + $0x8] sm:$0xff]
      %v252 = vld [vmem:[%s228 + $0x10] sm:$0xff]
      %v253 = vld [vmem:[%s235] sm:$0xff]
      %v254 = vld [vmem:[%s235 + $0x8] sm:$0xff]
      %v255 = vld [vmem:[%s235 + $0x10] sm:$0xff]
      %v256 = vld [vmem:[%s235 + $0x18] sm:$0xff]
      %v257 = vld [vmem:[%s235 + $0x20] sm:$0xff]
      %v258 = vld [vmem:[%s235 + $0x28] sm:$0xff]
      %v259 = vld [vmem:[%s235 + $0x30] sm:$0xff]
      %v260 = vld [vmem:[%s235 + $0x38] sm:$0xff]
      %v261 = vld [vmem:[%s235 + $0x40] sm:$0xff]
      %v262 = vld [vmem:[%s235 + $0x48] sm:$0xff]
      %v263 = vld [vmem:[%s235 + $0x50] sm:$0xff]
      %v264 = vld [vmem:[%s235 + $0x58] sm:$0xff]
      %v265 = vld [vmem:[%s235 + $0x60] sm:$0xff]
      %v266 = vld [vmem:[%s235 + $0x68] sm:$0xff]
      %v267 = vld [vmem:[%s235 + $0x70] sm:$0xff]
      %v268 = vld [vmem:[%s235 + $0x78] sm:$0xff]
      %v269 = vld [vmem:[%s235 + $0x80] sm:$0xff]
      %v270 = vld [vmem:[%s235 + $0x88] sm:$0xff]
      %v271 = vld [vmem:[%s235 + $0x90] sm:$0xff]
      %v272 = vld [vmem:[%s235 + $0x98] sm:$0xff]
      %v273 = vld [vmem:[%s235 + $0xa0] sm:$0xff]
      %v274 = vld [vmem:[%s235 + $0xa8] sm:$0xff]
      %v275 = vld [vmem:[%s235 + $0xb0] sm:$0xff]
      %v276 = vld [vmem:[%s235 + $0xb8] sm:$0xff]
      %v277 = vld [vmem:[%s235 + $0xc0] sm:$0xff]
      %v278 = vld [vmem:[%s235 + $0xc8] sm:$0xff]
      %v279 = vld [vmem:[%s235 + $0xd0] sm:$0xff]
      %v280 = vld [vmem:[%s235 + $0xd8] sm:$0xff]
      %v281 = vld [vmem:[%s235 + $0xe0] sm:$0xff]
      %v282 = vld [vmem:[%s235 + $0xe8] sm:$0xff]
      %v283 = vld [vmem:[%s235 + $0xf0] sm:$0xff]
      %v284 = vld [vmem:[%s235 + $0xf8] sm:$0xff]
      %v285 = vld [vmem:[%s235 + $0x100] sm:$0xff]
      %v286 = vld [vmem:[%s235 + $0x108] sm:$0xff]
      %v287 = vld [vmem:[%s235 + $0x110] sm:$0xff]
      %v288 = vld [vmem:[%s235 + $0x118] sm:$0xff]
      %v289 = vld [vmem:[%s235 + $0x120] sm:$0xff]
      %v290 = vld [vmem:[%s235 + $0x128] sm:$0xff]
      %v291 = vld [vmem:[%s235 + $0x130] sm:$0xff]
      %v292 = vld [vmem:[%s235 + $0x138] sm:$0xff]
      %v293 = vld [vmem:[%s235 + $0x140] sm:$0xff]
      %v294 = vld [vmem:[%s235 + $0x148] sm:$0xff]
      %v295 = vld [vmem:[%s235 + $0x150] sm:$0xff]
      %v296 = vld [vmem:[%s235 + $0x158] sm:$0xff]
      %v297 = vld [vmem:[%s235 + $0x160] sm:$0xff]
      %v298 = vld [vmem:[%s235 + $0x168] sm:$0xff]
      %v299 = vld [vmem:[%s235 + $0x170] sm:$0xff]
      %v300 = vld [vmem:[%s235 + $0x178] sm:$0xff]
      %v301 = vld [vmem:[%s235 + $0x180] sm:$0xff]
      %v302 = vld [vmem:[%s235 + $0x188] sm:$0xff]
      %v303 = vld [vmem:[%s235 + $0x190] sm:$0xff]
      %v304 = vld [vmem:[%s235 + $0x198] sm:$0xff]
      %v305 = vld [vmem:[%s235 + $0x1a0] sm:$0xff]
      %v306 = vld [vmem:[%s235 + $0x1a8] sm:$0xff]
      %v307 = vld [vmem:[%s235 + $0x1b0] sm:$0xff]
      %v308 = vld [vmem:[%s235 + $0x1b8] sm:$0xff]
      %v309 = vld [vmem:[%s235 + $0x1c0] sm:$0xff]
      %v310 = vld [vmem:[%s235 + $0x1c8] sm:$0xff]
      %v311 = vld [vmem:[%s235 + $0x1d0] sm:$0xff]
      %v312 = vld [vmem:[%s235 + $0x1d8] sm:$0xff]
      %v313 = vld [vmem:[%s235 + $0x1e0] sm:$0xff]
      %v314 = vld [vmem:[%s235 + $0x1e8] sm:$0xff]
      %v315 = vld [vmem:[%s235 + $0x1f0] sm:$0xff]
      %v316 = vld [vmem:[%s235 + $0x1f8] sm:$0xff]
      %v317 = vld [vmem:[%s235 + $0x200] sm:$0xff]
      %v318 = vld [vmem:[%s235 + $0x208] sm:$0xff]
      %v319 = vld [vmem:[%s235 + $0x210] sm:$0xff]
      %v320 = vld [vmem:[%s235 + $0x218] sm:$0xff]
      %v321 = vld [vmem:[%s235 + $0x220] sm:$0xff]
      %v322 = vld [vmem:[%s235 + $0x228] sm:$0xff]
      %v323 = vld [vmem:[%s235 + $0x230] sm:$0xff]
      %v324 = vld [vmem:[%s235 + $0x238] sm:$0xff]
      %v325 = vld [vmem:[%s235 + $0x240] sm:$0xff]
      %v326 = vld [vmem:[%s235 + $0x248] sm:$0xff]
      %v327 = vld [vmem:[%s235 + $0x250] sm:$0xff]
      %v328 = vld [vmem:[%s235 + $0x258] sm:$0xff]
      %v329 = vld [vmem:[%s235 + $0x260] sm:$0xff]
      %v330 = vld [vmem:[%s235 + $0x268] sm:$0xff]
      %v331 = vld [vmem:[%s235 + $0x270] sm:$0xff]
      %v332 = vld [vmem:[%s235 + $0x278] sm:$0xff]
      %v333 = vld [vmem:[%s235 + $0x280] sm:$0xff]
      %v334 = vld [vmem:[%s235 + $0x288] sm:$0xff]
      %v335 = vld [vmem:[%s235 + $0x290] sm:$0xff]
      %v336 = vld [vmem:[%s235 + $0x298] sm:$0xff]
      %v337 = vld [vmem:[%s235 + $0x2a0] sm:$0xff]
      %v338 = vld [vmem:[%s235 + $0x2a8] sm:$0xff]
      %v339 = vld [vmem:[%s235 + $0x2b0] sm:$0xff]
      %v340 = vld [vmem:[%s235 + $0x2b8] sm:$0xff]
      %v341 = vld [vmem:[%s235 + $0x2c0] sm:$0xff]
      %v342 = vld [vmem:[%s235 + $0x2c8] sm:$0xff]
      %v343 = vld [vmem:[%s235 + $0x2d0] sm:$0xff]
      %v344 = vld [vmem:[%s235 + $0x2d8] sm:$0xff]
      %v345 = vld [vmem:[%s235 + $0x2e0] sm:$0xff]
      %v346 = vld [vmem:[%s235 + $0x2e8] sm:$0xff]
      %v347 = vld [vmem:[%s235 + $0x2f0] sm:$0xff]
      %v348 = vld [vmem:[%s235 + $0x2f8] sm:$0xff]
      %v349 = vld [vmem:[%s235 + $0x300] sm:$0xff]
      %v350 = vld [vmem:[%s235 + $0x308] sm:$0xff]
      %v351 = vld [vmem:[%s235 + $0x310] sm:$0xff]
      %v352 = vld [vmem:[%s235 + $0x318] sm:$0xff]
      %v353 = vld [vmem:[%s235 + $0x320] sm:$0xff]
      %v354 = vld [vmem:[%s235 + $0x328] sm:$0xff]
      %v355 = vld [vmem:[%s235 + $0x330] sm:$0xff]
      %v356 = vld [vmem:[%s235 + $0x338] sm:$0xff]
      %v357 = vld [vmem:[%s235 + $0x340] sm:$0xff]
      %v358 = vld [vmem:[%s235 + $0x348] sm:$0xff]
      %v359 = vld [vmem:[%s235 + $0x350] sm:$0xff]
      %v360 = vld [vmem:[%s235 + $0x358] sm:$0xff]
      %v361 = vld [vmem:[%s235 + $0x360] sm:$0xff]
      %v362 = vld [vmem:[%s235 + $0x368] sm:$0xff]
      %v363 = vld [vmem:[%s235 + $0x370] sm:$0xff]
      %v364 = vld [vmem:[%s235 + $0x378] sm:$0xff]
      %v365 = vld [vmem:[%s235 + $0x380] sm:$0xff]
      %v366 = vld [vmem:[%s235 + $0x388] sm:$0xff]
      %v367 = vld [vmem:[%s235 + $0x390] sm:$0xff]
      %v368 = vld [vmem:[%s235 + $0x398] sm:$0xff]
      %v369 = vld [vmem:[%s235 + $0x3a0] sm:$0xff]
      %v370 = vld [vmem:[%s235 + $0x3a8] sm:$0xff]
      %v371 = vld [vmem:[%s235 + $0x3b0] sm:$0xff]
      %v372 = vld [vmem:[%s235 + $0x3b8] sm:$0xff]
      %v373 = vld [vmem:[%s235 + $0x3c0] sm:$0xff]
      %v374 = vld [vmem:[%s235 + $0x3c8] sm:$0xff]
      %v375 = vld [vmem:[%s235 + $0x3d0] sm:$0xff]
      %v376 = vld [vmem:[%s235 + $0x3d8] sm:$0xff]
      %v377 = vld [vmem:[%s235 + $0x3e0] sm:$0xff]
      %v378 = vld [vmem:[%s235 + $0x3e8] sm:$0xff]
      %v379 = vld [vmem:[%s235 + $0x3f0] sm:$0xff]
      %v380 = vld [vmem:[%s235 + $0x3f8] sm:$0xff]
      %v381 = vld [vmem:[%s235 + $0x400] sm:$0xff]
      %v382 = vld [vmem:[%s235 + $0x408] sm:$0xff]
      %v383 = vld [vmem:[%s235 + $0x410] sm:$0xff]
      %v384 = vld [vmem:[%s235 + $0x418] sm:$0xff]
      %v385 = vld [vmem:[%s235 + $0x420] sm:$0xff]
      %v386 = vld [vmem:[%s235 + $0x428] sm:$0xff]
      %v387 = vld [vmem:[%s235 + $0x430] sm:$0xff]
      %v388 = vld [vmem:[%s235 + $0x438] sm:$0xff]
      %v389 = vld [vmem:[%s235 + $0x440] sm:$0xff]
      %v390 = vld [vmem:[%s235 + $0x448] sm:$0xff]
      %v391 = vld [vmem:[%s235 + $0x450] sm:$0xff]
      %v392 = vld [vmem:[%s235 + $0x458] sm:$0xff]
      %v393 = vld [vmem:[%s235 + $0x460] sm:$0xff]
      %v394 = vld [vmem:[%s235 + $0x468] sm:$0xff]
      %v395 = vld [vmem:[%s235 + $0x470] sm:$0xff]
      %v396 = vld [vmem:[%s235 + $0x478] sm:$0xff]
      %v397 = vld [vmem:[%s235 + $0x480] sm:$0xff]
      %v398 = vld [vmem:[%s235 + $0x488] sm:$0xff]
      %v399 = vld [vmem:[%s235 + $0x490] sm:$0xff]
      %v400 = vld [vmem:[%s235 + $0x498] sm:$0xff]
      %v401 = vld [vmem:[%s235 + $0x4a0] sm:$0xff]
      %v402 = vld [vmem:[%s235 + $0x4a8] sm:$0xff]
      %v403 = vld [vmem:[%s235 + $0x4b0] sm:$0xff]
      %v404 = vld [vmem:[%s235 + $0x4b8] sm:$0xff]
      %v405 = vld [vmem:[%s235 + $0x4c0] sm:$0xff]
      %v406 = vld [vmem:[%s235 + $0x4c8] sm:$0xff]
      %v407 = vld [vmem:[%s235 + $0x4d0] sm:$0xff]
      %v408 = vld [vmem:[%s235 + $0x4d8] sm:$0xff]
      %v409 = vld [vmem:[%s235 + $0x4e0] sm:$0xff]
      %v410 = vld [vmem:[%s235 + $0x4e8] sm:$0xff]
      %v411 = vld [vmem:[%s235 + $0x4f0] sm:$0xff]
      %v412 = vld [vmem:[%s235 + $0x4f8] sm:$0xff]
      %v413 = vld [vmem:[%s235 + $0x500] sm:$0xff]
      %v414 = vld [vmem:[%s235 + $0x508] sm:$0xff]
      %v415 = vld [vmem:[%s235 + $0x510] sm:$0xff]
      %v416 = vld [vmem:[%s235 + $0x518] sm:$0xff]
      %v417 = vld [vmem:[%s235 + $0x520] sm:$0xff]
      %v418 = vld [vmem:[%s235 + $0x528] sm:$0xff]
      %v419 = vld [vmem:[%s235 + $0x530] sm:$0xff]
      %v420 = vld [vmem:[%s235 + $0x538] sm:$0xff]
      %v421 = vld [vmem:[%s235 + $0x540] sm:$0xff]
      %v422 = vld [vmem:[%s235 + $0x548] sm:$0xff]
      %v423 = vld [vmem:[%s235 + $0x550] sm:$0xff]
      %v424 = vld [vmem:[%s235 + $0x558] sm:$0xff]
      %v425 = vld [vmem:[%s235 + $0x560] sm:$0xff]
      %v426 = vld [vmem:[%s235 + $0x568] sm:$0xff]
      %v427 = vld [vmem:[%s235 + $0x570] sm:$0xff]
      %v428 = vld [vmem:[%s235 + $0x578] sm:$0xff]
      %v429 = vld [vmem:[%s235 + $0x580] sm:$0xff]
      %v430 = vld [vmem:[%s235 + $0x588] sm:$0xff]
      %v431 = vld [vmem:[%s235 + $0x590] sm:$0xff]
      %v432 = vld [vmem:[%s235 + $0x598] sm:$0xff]
      %v433 = vld [vmem:[%s235 + $0x5a0] sm:$0xff]
      %v434 = vld [vmem:[%s235 + $0x5a8] sm:$0xff]
      %v435 = vld [vmem:[%s235 + $0x5b0] sm:$0xff]
      %v436 = vld [vmem:[%s235 + $0x5b8] sm:$0xff]
      %v437 = vld [vmem:[%s235 + $0x5c0] sm:$0xff]
      %v438 = vld [vmem:[%s235 + $0x5c8] sm:$0xff]
      %v439 = vld [vmem:[%s235 + $0x5d0] sm:$0xff]
      %v440 = vld [vmem:[%s235 + $0x5d8] sm:$0xff]
      %v441 = vld [vmem:[%s235 + $0x5e0] sm:$0xff]
      %v442 = vld [vmem:[%s235 + $0x5e8] sm:$0xff]
      %v443 = vld [vmem:[%s235 + $0x5f0] sm:$0xff]
      %v444 = vld [vmem:[%s235 + $0x5f8] sm:$0xff]
      %v448 = vunpack.c.l.b16 %v250
      %v449 = vunpack.c.h.b16 %v250
      %v450 = vunpack.c.l.b16 %v251
      %v451 = vunpack.c.h.b16 %v251
      %v452 = vunpack.c.l.b16 %v252
      %v453 = vunpack.c.h.b16 %v252
      %v454 = vpack.c.b16 %v448, %v448
      %v455 = vpack.c.b16 %v449, %v449
      %v456 = vpack.c.b16 %v450, %v450
      %v457 = vpack.c.b16 %v451, %v451
      %v458 = vpack.c.b16 %v452, %v452
      %v459 = vpack.c.b16 %v453, %v453
      %v658 = vunpack.c.l.b16 %v253
      %v659 = vunpack.c.h.b16 %v253
      %v660 = vunpack.c.l.b16 %v254
      %v661 = vunpack.c.h.b16 %v254
      %v662 = vunpack.c.l.b16 %v255
      %v663 = vunpack.c.h.b16 %v255
      %v664 = vunpack.c.l.b16 %v256
      %v665 = vunpack.c.h.b16 %v256
      %v666 = vunpack.c.l.b16 %v257
      %v667 = vunpack.c.h.b16 %v257
      %v668 = vunpack.c.l.b16 %v258
      %v669 = vunpack.c.h.b16 %v258
      %v670 = vunpack.c.l.b16 %v259
      %v671 = vunpack.c.h.b16 %v259
      %v672 = vunpack.c.l.b16 %v260
      %v673 = vunpack.c.h.b16 %v260
      %v674 = vunpack.c.l.b16 %v261
      %v675 = vunpack.c.h.b16 %v261
      %v676 = vunpack.c.l.b16 %v262
      %v677 = vunpack.c.h.b16 %v262
      %v678 = vunpack.c.l.b16 %v263
      %v679 = vunpack.c.h.b16 %v263
      %v680 = vunpack.c.l.b16 %v264
      %v681 = vunpack.c.h.b16 %v264
      %v682 = vunpack.c.l.b16 %v265
      %v683 = vunpack.c.h.b16 %v265
      %v684 = vunpack.c.l.b16 %v266
      %v685 = vunpack.c.h.b16 %v266
      %v686 = vunpack.c.l.b16 %v267
      %v687 = vunpack.c.h.b16 %v267
      %v688 = vunpack.c.l.b16 %v268
      %v689 = vunpack.c.h.b16 %v268
      %v690 = vunpack.c.l.b16 %v269
      %v691 = vunpack.c.h.b16 %v269
      %v692 = vunpack.c.l.b16 %v270
      %v693 = vunpack.c.h.b16 %v270
      %v694 = vunpack.c.l.b16 %v271
      %v695 = vunpack.c.h.b16 %v271
      %v696 = vunpack.c.l.b16 %v272
      %v697 = vunpack.c.h.b16 %v272
      %v698 = vunpack.c.l.b16 %v273
      %v699 = vunpack.c.h.b16 %v273
      %v700 = vunpack.c.l.b16 %v274
      %v701 = vunpack.c.h.b16 %v274
      %v702 = vunpack.c.l.b16 %v275
      %v703 = vunpack.c.h.b16 %v275
      %v704 = vunpack.c.l.b16 %v276
      %v705 = vunpack.c.h.b16 %v276
      %v706 = vunpack.c.l.b16 %v277
      %v707 = vunpack.c.h.b16 %v277
      %v708 = vunpack.c.l.b16 %v278
      %v709 = vunpack.c.h.b16 %v278
      %v710 = vunpack.c.l.b16 %v279
      %v711 = vunpack.c.h.b16 %v279
      %v712 = vunpack.c.l.b16 %v280
      %v713 = vunpack.c.h.b16 %v280
      %v714 = vunpack.c.l.b16 %v281
      %v715 = vunpack.c.h.b16 %v281
      %v716 = vunpack.c.l.b16 %v282
      %v717 = vunpack.c.h.b16 %v282
      %v718 = vunpack.c.l.b16 %v283
      %v719 = vunpack.c.h.b16 %v283
      %v720 = vunpack.c.l.b16 %v284
      %v721 = vunpack.c.h.b16 %v284
      %v722 = vunpack.c.l.b16 %v285
      %v723 = vunpack.c.h.b16 %v285
      %v724 = vunpack.c.l.b16 %v286
      %v725 = vunpack.c.h.b16 %v286
      %v726 = vunpack.c.l.b16 %v287
      %v727 = vunpack.c.h.b16 %v287
      %v728 = vunpack.c.l.b16 %v288
      %v729 = vunpack.c.h.b16 %v288
      %v730 = vunpack.c.l.b16 %v289
      %v731 = vunpack.c.h.b16 %v289
      %v732 = vunpack.c.l.b16 %v290
      %v733 = vunpack.c.h.b16 %v290
      %v734 = vunpack.c.l.b16 %v291
      %v735 = vunpack.c.h.b16 %v291
      %v736 = vunpack.c.l.b16 %v292
      %v737 = vunpack.c.h.b16 %v292
      %v738 = vunpack.c.l.b16 %v293
      %v739 = vunpack.c.h.b16 %v293
      %v740 = vunpack.c.l.b16 %v294
      %v741 = vunpack.c.h.b16 %v294
      %v742 = vunpack.c.l.b16 %v295
      %v743 = vunpack.c.h.b16 %v295
      %v744 = vunpack.c.l.b16 %v296
      %v745 = vunpack.c.h.b16 %v296
      %v746 = vunpack.c.l.b16 %v297
      %v747 = vunpack.c.h.b16 %v297
      %v748 = vunpack.c.l.b16 %v298
      %v749 = vunpack.c.h.b16 %v298
      %v750 = vunpack.c.l.b16 %v299
      %v751 = vunpack.c.h.b16 %v299
      %v752 = vunpack.c.l.b16 %v300
      %v753 = vunpack.c.h.b16 %v300
      %v754 = vunpack.c.l.b16 %v301
      %v755 = vunpack.c.h.b16 %v301
      %v756 = vunpack.c.l.b16 %v302
      %v757 = vunpack.c.h.b16 %v302
      %v758 = vunpack.c.l.b16 %v303
      %v759 = vunpack.c.h.b16 %v303
      %v760 = vunpack.c.l.b16 %v304
      %v761 = vunpack.c.h.b16 %v304
      %v762 = vunpack.c.l.b16 %v305
      %v763 = vunpack.c.h.b16 %v305
      %v764 = vunpack.c.l.b16 %v306
      %v765 = vunpack.c.h.b16 %v306
      %v766 = vunpack.c.l.b16 %v307
      %v767 = vunpack.c.h.b16 %v307
      %v768 = vunpack.c.l.b16 %v308
      %v769 = vunpack.c.h.b16 %v308
      %v770 = vunpack.c.l.b16 %v309
      %v771 = vunpack.c.h.b16 %v309
      %v772 = vunpack.c.l.b16 %v310
      %v773 = vunpack.c.h.b16 %v310
      %v774 = vunpack.c.l.b16 %v311
      %v775 = vunpack.c.h.b16 %v311
      %v776 = vunpack.c.l.b16 %v312
      %v777 = vunpack.c.h.b16 %v312
      %v778 = vunpack.c.l.b16 %v313
      %v779 = vunpack.c.h.b16 %v313
      %v780 = vunpack.c.l.b16 %v314
      %v781 = vunpack.c.h.b16 %v314
      %v782 = vunpack.c.l.b16 %v315
      %v783 = vunpack.c.h.b16 %v315
      %v784 = vunpack.c.l.b16 %v316
      %v785 = vunpack.c.h.b16 %v316
      %v786 = vunpack.c.l.b16 %v317
      %v787 = vunpack.c.h.b16 %v317
      %v788 = vunpack.c.l.b16 %v318
      %v789 = vunpack.c.h.b16 %v318
      %v790 = vunpack.c.l.b16 %v319
      %v791 = vunpack.c.h.b16 %v319
      %v792 = vunpack.c.l.b16 %v320
      %v793 = vunpack.c.h.b16 %v320
      %v794 = vunpack.c.l.b16 %v321
      %v795 = vunpack.c.h.b16 %v321
      %v796 = vunpack.c.l.b16 %v322
      %v797 = vunpack.c.h.b16 %v322
      %v798 = vunpack.c.l.b16 %v323
      %v799 = vunpack.c.h.b16 %v323
      %v800 = vunpack.c.l.b16 %v324
      %v801 = vunpack.c.h.b16 %v324
      %v802 = vunpack.c.l.b16 %v325
      %v803 = vunpack.c.h.b16 %v325
      %v804 = vunpack.c.l.b16 %v326
      %v805 = vunpack.c.h.b16 %v326
      %v806 = vunpack.c.l.b16 %v327
      %v807 = vunpack.c.h.b16 %v327
      %v808 = vunpack.c.l.b16 %v328
      %v809 = vunpack.c.h.b16 %v328
      %v810 = vunpack.c.l.b16 %v329
      %v811 = vunpack.c.h.b16 %v329
      %v812 = vunpack.c.l.b16 %v330
      %v813 = vunpack.c.h.b16 %v330
      %v814 = vunpack.c.l.b16 %v331
      %v815 = vunpack.c.h.b16 %v331
      %v816 = vunpack.c.l.b16 %v332
      %v817 = vunpack.c.h.b16 %v332
      %v818 = vunpack.c.l.b16 %v333
      %v819 = vunpack.c.h.b16 %v333
      %v820 = vunpack.c.l.b16 %v334
      %v821 = vunpack.c.h.b16 %v334
      %v822 = vunpack.c.l.b16 %v335
      %v823 = vunpack.c.h.b16 %v335
      %v824 = vunpack.c.l.b16 %v336
      %v825 = vunpack.c.h.b16 %v336
      %v826 = vunpack.c.l.b16 %v337
      %v827 = vunpack.c.h.b16 %v337
      %v828 = vunpack.c.l.b16 %v338
      %v829 = vunpack.c.h.b16 %v338
      %v830 = vunpack.c.l.b16 %v339
      %v831 = vunpack.c.h.b16 %v339
      %v832 = vunpack.c.l.b16 %v340
      %v833 = vunpack.c.h.b16 %v340
      %v834 = vunpack.c.l.b16 %v341
      %v835 = vunpack.c.h.b16 %v341
      %v836 = vunpack.c.l.b16 %v342
      %v837 = vunpack.c.h.b16 %v342
      %v838 = vunpack.c.l.b16 %v343
      %v839 = vunpack.c.h.b16 %v343
      %v840 = vunpack.c.l.b16 %v344
      %v841 = vunpack.c.h.b16 %v344
      %v842 = vunpack.c.l.b16 %v345
      %v843 = vunpack.c.h.b16 %v345
      %v844 = vunpack.c.l.b16 %v346
      %v845 = vunpack.c.h.b16 %v346
      %v846 = vunpack.c.l.b16 %v347
      %v847 = vunpack.c.h.b16 %v347
      %v848 = vunpack.c.l.b16 %v348
      %v849 = vunpack.c.h.b16 %v348
      %v850 = vunpack.c.l.b16 %v349
      %v851 = vunpack.c.h.b16 %v349
      %v852 = vunpack.c.l.b16 %v350
      %v853 = vunpack.c.h.b16 %v350
      %v854 = vunpack.c.l.b16 %v351
      %v855 = vunpack.c.h.b16 %v351
      %v856 = vunpack.c.l.b16 %v352
      %v857 = vunpack.c.h.b16 %v352
      %v858 = vunpack.c.l.b16 %v353
      %v859 = vunpack.c.h.b16 %v353
      %v860 = vunpack.c.l.b16 %v354
      %v861 = vunpack.c.h.b16 %v354
      %v862 = vunpack.c.l.b16 %v355
      %v863 = vunpack.c.h.b16 %v355
      %v864 = vunpack.c.l.b16 %v356
      %v865 = vunpack.c.h.b16 %v356
      %v866 = vunpack.c.l.b16 %v357
      %v867 = vunpack.c.h.b16 %v357
      %v868 = vunpack.c.l.b16 %v358
      %v869 = vunpack.c.h.b16 %v358
      %v870 = vunpack.c.l.b16 %v359
      %v871 = vunpack.c.h.b16 %v359
      %v872 = vunpack.c.l.b16 %v360
      %v873 = vunpack.c.h.b16 %v360
      %v874 = vunpack.c.l.b16 %v361
      %v875 = vunpack.c.h.b16 %v361
      %v876 = vunpack.c.l.b16 %v362
      %v877 = vunpack.c.h.b16 %v362
      %v878 = vunpack.c.l.b16 %v363
      %v879 = vunpack.c.h.b16 %v363
      %v880 = vunpack.c.l.b16 %v364
      %v881 = vunpack.c.h.b16 %v364
      %v882 = vunpack.c.l.b16 %v365
      %v883 = vunpack.c.h.b16 %v365
      %v884 = vunpack.c.l.b16 %v366
      %v885 = vunpack.c.h.b16 %v366
      %v886 = vunpack.c.l.b16 %v367
      %v887 = vunpack.c.h.b16 %v367
      %v888 = vunpack.c.l.b16 %v368
      %v889 = vunpack.c.h.b16 %v368
      %v890 = vunpack.c.l.b16 %v369
      %v891 = vunpack.c.h.b16 %v369
      %v892 = vunpack.c.l.b16 %v370
      %v893 = vunpack.c.h.b16 %v370
      %v894 = vunpack.c.l.b16 %v371
      %v895 = vunpack.c.h.b16 %v371
      %v896 = vunpack.c.l.b16 %v372
      %v897 = vunpack.c.h.b16 %v372
      %v898 = vunpack.c.l.b16 %v373
      %v899 = vunpack.c.h.b16 %v373
      %v900 = vunpack.c.l.b16 %v374
      %v901 = vunpack.c.h.b16 %v374
      %v902 = vunpack.c.l.b16 %v375
      %v903 = vunpack.c.h.b16 %v375
      %v904 = vunpack.c.l.b16 %v376
      %v905 = vunpack.c.h.b16 %v376
      %v906 = vunpack.c.l.b16 %v377
      %v907 = vunpack.c.h.b16 %v377
      %v908 = vunpack.c.l.b16 %v378
      %v909 = vunpack.c.h.b16 %v378
      %v910 = vunpack.c.l.b16 %v379
      %v911 = vunpack.c.h.b16 %v379
      %v912 = vunpack.c.l.b16 %v380
      %v913 = vunpack.c.h.b16 %v380
      %v914 = vunpack.c.l.b16 %v381
      %v915 = vunpack.c.h.b16 %v381
      %v916 = vunpack.c.l.b16 %v382
      %v917 = vunpack.c.h.b16 %v382
      %v918 = vunpack.c.l.b16 %v383
      %v919 = vunpack.c.h.b16 %v383
      %v920 = vunpack.c.l.b16 %v384
      %v921 = vunpack.c.h.b16 %v384
      %v922 = vunpack.c.l.b16 %v385
      %v923 = vunpack.c.h.b16 %v385
      %v924 = vunpack.c.l.b16 %v386
      %v925 = vunpack.c.h.b16 %v386
      %v926 = vunpack.c.l.b16 %v387
      %v927 = vunpack.c.h.b16 %v387
      %v928 = vunpack.c.l.b16 %v388
      %v929 = vunpack.c.h.b16 %v388
      %v930 = vunpack.c.l.b16 %v389
      %v931 = vunpack.c.h.b16 %v389
      %v932 = vunpack.c.l.b16 %v390
      %v933 = vunpack.c.h.b16 %v390
      %v934 = vunpack.c.l.b16 %v391
      %v935 = vunpack.c.h.b16 %v391
      %v936 = vunpack.c.l.b16 %v392
      %v937 = vunpack.c.h.b16 %v392
      %v938 = vunpack.c.l.b16 %v393
      %v939 = vunpack.c.h.b16 %v393
      %v940 = vunpack.c.l.b16 %v394
      %v941 = vunpack.c.h.b16 %v394
      %v942 = vunpack.c.l.b16 %v395
      %v943 = vunpack.c.h.b16 %v395
      %v944 = vunpack.c.l.b16 %v396
      %v945 = vunpack.c.h.b16 %v396
      %v946 = vunpack.c.l.b16 %v397
      %v947 = vunpack.c.h.b16 %v397
      %v948 = vunpack.c.l.b16 %v398
      %v949 = vunpack.c.h.b16 %v398
      %v950 = vunpack.c.l.b16 %v399
      %v951 = vunpack.c.h.b16 %v399
      %v952 = vunpack.c.l.b16 %v400
      %v953 = vunpack.c.h.b16 %v400
      %v954 = vunpack.c.l.b16 %v401
      %v955 = vunpack.c.h.b16 %v401
      %v956 = vunpack.c.l.b16 %v402
      %v957 = vunpack.c.h.b16 %v402
      %v958 = vunpack.c.l.b16 %v403
      %v959 = vunpack.c.h.b16 %v403
      %v960 = vunpack.c.l.b16 %v404
      %v961 = vunpack.c.h.b16 %v404
      %v962 = vunpack.c.l.b16 %v405
      %v963 = vunpack.c.h.b16 %v405
      %v964 = vunpack.c.l.b16 %v406
      %v965 = vunpack.c.h.b16 %v406
      %v966 = vunpack.c.l.b16 %v407
      %v967 = vunpack.c.h.b16 %v407
      %v968 = vunpack.c.l.b16 %v408
      %v969 = vunpack.c.h.b16 %v408
      %v970 = vunpack.c.l.b16 %v409
      %v971 = vunpack.c.h.b16 %v409
      %v972 = vunpack.c.l.b16 %v410
      %v973 = vunpack.c.h.b16 %v410
      %v974 = vunpack.c.l.b16 %v411
      %v975 = vunpack.c.h.b16 %v411
      %v976 = vunpack.c.l.b16 %v412
      %v977 = vunpack.c.h.b16 %v412
      %v978 = vunpack.c.l.b16 %v413
      %v979 = vunpack.c.h.b16 %v413
      %v980 = vunpack.c.l.b16 %v414
      %v981 = vunpack.c.h.b16 %v414
      %v982 = vunpack.c.l.b16 %v415
      %v983 = vunpack.c.h.b16 %v415
      %v984 = vunpack.c.l.b16 %v416
      %v985 = vunpack.c.h.b16 %v416
      %v986 = vunpack.c.l.b16 %v417
      %v987 = vunpack.c.h.b16 %v417
      %v988 = vunpack.c.l.b16 %v418
      %v989 = vunpack.c.h.b16 %v418
      %v990 = vunpack.c.l.b16 %v419
      %v991 = vunpack.c.h.b16 %v419
      %v992 = vunpack.c.l.b16 %v420
      %v993 = vunpack.c.h.b16 %v420
      %v994 = vunpack.c.l.b16 %v421
      %v995 = vunpack.c.h.b16 %v421
      %v996 = vunpack.c.l.b16 %v422
      %v997 = vunpack.c.h.b16 %v422
      %v998 = vunpack.c.l.b16 %v423
      %v999 = vunpack.c.h.b16 %v423
      %v1000 = vunpack.c.l.b16 %v424
      %v1001 = vunpack.c.h.b16 %v424
      %v1002 = vunpack.c.l.b16 %v425
      %v1003 = vunpack.c.h.b16 %v425
      %v1004 = vunpack.c.l.b16 %v426
      %v1005 = vunpack.c.h.b16 %v426
      %v1006 = vunpack.c.l.b16 %v427
      %v1007 = vunpack.c.h.b16 %v427
      %v1008 = vunpack.c.l.b16 %v428
      %v1009 = vunpack.c.h.b16 %v428
      %v1010 = vunpack.c.l.b16 %v429
      %v1011 = vunpack.c.h.b16 %v429
      %v1012 = vunpack.c.l.b16 %v430
      %v1013 = vunpack.c.h.b16 %v430
      %v1014 = vunpack.c.l.b16 %v431
      %v1015 = vunpack.c.h.b16 %v431
      %v1016 = vunpack.c.l.b16 %v432
      %v1017 = vunpack.c.h.b16 %v432
      %v1018 = vunpack.c.l.b16 %v433
      %v1019 = vunpack.c.h.b16 %v433
      %v1020 = vunpack.c.l.b16 %v434
      %v1021 = vunpack.c.h.b16 %v434
      %v1022 = vunpack.c.l.b16 %v435
      %v1023 = vunpack.c.h.b16 %v435
      %v1024 = vunpack.c.l.b16 %v436
      %v1025 = vunpack.c.h.b16 %v436
      %v1026 = vunpack.c.l.b16 %v437
      %v1027 = vunpack.c.h.b16 %v437
      %v1028 = vunpack.c.l.b16 %v438
      %v1029 = vunpack.c.h.b16 %v438
      %v1030 = vunpack.c.l.b16 %v439
      %v1031 = vunpack.c.h.b16 %v439
      %v1032 = vunpack.c.l.b16 %v440
      %v1033 = vunpack.c.h.b16 %v440
      %v1034 = vunpack.c.l.b16 %v441
      %v1035 = vunpack.c.h.b16 %v441
      %v1036 = vunpack.c.l.b16 %v442
      %v1037 = vunpack.c.h.b16 %v442
      %v1038 = vunpack.c.l.b16 %v443
      %v1039 = vunpack.c.h.b16 %v443
      %v1040 = vunpack.c.l.b16 %v444
      %v1041 = vunpack.c.h.b16 %v444
      %v1042 = vpack.c.b16 %v662, %v658
      %v1043 = vpack.c.b16 %v663, %v659
      %v1044 = vpack.c.b16 %v664, %v660
      %v1045 = vpack.c.b16 %v665, %v661
      %v1046 = vpack.c.b16 %v670, %v666
      %v1047 = vpack.c.b16 %v671, %v667
      %v1048 = vpack.c.b16 %v672, %v668
      %v1049 = vpack.c.b16 %v673, %v669
      %v1050 = vpack.c.b16 %v678, %v674
      %v1051 = vpack.c.b16 %v679, %v675
      %v1052 = vpack.c.b16 %v680, %v676
      %v1053 = vpack.c.b16 %v681, %v677
      %v1054 = vpack.c.b16 %v686, %v682
      %v1055 = vpack.c.b16 %v687, %v683
      %v1056 = vpack.c.b16 %v688, %v684
      %v1057 = vpack.c.b16 %v689, %v685
      %v1058 = vpack.c.b16 %v694, %v690
      %v1059 = vpack.c.b16 %v695, %v691
      %v1060 = vpack.c.b16 %v696, %v692
      %v1061 = vpack.c.b16 %v697, %v693
      %v1062 = vpack.c.b16 %v702, %v698
      %v1063 = vpack.c.b16 %v703, %v699
      %v1064 = vpack.c.b16 %v704, %v700
      %v1065 = vpack.c.b16 %v705, %v701
      %v1066 = vpack.c.b16 %v710, %v706
      %v1067 = vpack.c.b16 %v711, %v707
      %v1068 = vpack.c.b16 %v712, %v708
      %v1069 = vpack.c.b16 %v713, %v709
      %v1070 = vpack.c.b16 %v718, %v714
      %v1071 = vpack.c.b16 %v719, %v715
      %v1072 = vpack.c.b16 %v720, %v716
      %v1073 = vpack.c.b16 %v721, %v717
      %v1074 = vpack.c.b16 %v726, %v722
      %v1075 = vpack.c.b16 %v727, %v723
      %v1076 = vpack.c.b16 %v728, %v724
      %v1077 = vpack.c.b16 %v729, %v725
      %v1078 = vpack.c.b16 %v734, %v730
      %v1079 = vpack.c.b16 %v735, %v731
      %v1080 = vpack.c.b16 %v736, %v732
      %v1081 = vpack.c.b16 %v737, %v733
      %v1082 = vpack.c.b16 %v742, %v738
      %v1083 = vpack.c.b16 %v743, %v739
      %v1084 = vpack.c.b16 %v744, %v740
      %v1085 = vpack.c.b16 %v745, %v741
      %v1086 = vpack.c.b16 %v750, %v746
      %v1087 = vpack.c.b16 %v751, %v747
      %v1088 = vpack.c.b16 %v752, %v748
      %v1089 = vpack.c.b16 %v753, %v749
      %v1090 = vpack.c.b16 %v758, %v754
      %v1091 = vpack.c.b16 %v759, %v755
      %v1092 = vpack.c.b16 %v760, %v756
      %v1093 = vpack.c.b16 %v761, %v757
      %v1094 = vpack.c.b16 %v766, %v762
      %v1095 = vpack.c.b16 %v767, %v763
      %v1096 = vpack.c.b16 %v768, %v764
      %v1097 = vpack.c.b16 %v769, %v765
      %v1098 = vpack.c.b16 %v774, %v770
      %v1099 = vpack.c.b16 %v775, %v771
      %v1100 = vpack.c.b16 %v776, %v772
      %v1101 = vpack.c.b16 %v777, %v773
      %v1102 = vpack.c.b16 %v782, %v778
      %v1103 = vpack.c.b16 %v783, %v779
      %v1104 = vpack.c.b16 %v784, %v780
      %v1105 = vpack.c.b16 %v785, %v781
      %v1106 = vpack.c.b16 %v790, %v786
      %v1107 = vpack.c.b16 %v791, %v787
      %v1108 = vpack.c.b16 %v792, %v788
      %v1109 = vpack.c.b16 %v793, %v789
      %v1110 = vpack.c.b16 %v798, %v794
      %v1111 = vpack.c.b16 %v799, %v795
      %v1112 = vpack.c.b16 %v800, %v796
      %v1113 = vpack.c.b16 %v801, %v797
      %v1114 = vpack.c.b16 %v806, %v802
      %v1115 = vpack.c.b16 %v807, %v803
      %v1116 = vpack.c.b16 %v808, %v804
      %v1117 = vpack.c.b16 %v809, %v805
      %v1118 = vpack.c.b16 %v814, %v810
      %v1119 = vpack.c.b16 %v815, %v811
      %v1120 = vpack.c.b16 %v816, %v812
      %v1121 = vpack.c.b16 %v817, %v813
      %v1122 = vpack.c.b16 %v822, %v818
      %v1123 = vpack.c.b16 %v823, %v819
      %v1124 = vpack.c.b16 %v824, %v820
      %v1125 = vpack.c.b16 %v825, %v821
      %v1126 = vpack.c.b16 %v830, %v826
      %v1127 = vpack.c.b16 %v831, %v827
      %v1128 = vpack.c.b16 %v832, %v828
      %v1129 = vpack.c.b16 %v833, %v829
      %v1130 = vpack.c.b16 %v838, %v834
      %v1131 = vpack.c.b16 %v839, %v835
      %v1132 = vpack.c.b16 %v840, %v836
      %v1133 = vpack.c.b16 %v841, %v837
      %v1134 = vpack.c.b16 %v846, %v842
      %v1135 = vpack.c.b16 %v847, %v843
      %v1136 = vpack.c.b16 %v848, %v844
      %v1137 = vpack.c.b16 %v849, %v845
      %v1138 = vpack.c.b16 %v854, %v850
      %v1139 = vpack.c.b16 %v855, %v851
      %v1140 = vpack.c.b16 %v856, %v852
      %v1141 = vpack.c.b16 %v857, %v853
      %v1142 = vpack.c.b16 %v862, %v858
      %v1143 = vpack.c.b16 %v863, %v859
      %v1144 = vpack.c.b16 %v864, %v860
      %v1145 = vpack.c.b16 %v865, %v861
      %v1146 = vpack.c.b16 %v870, %v866
      %v1147 = vpack.c.b16 %v871, %v867
      %v1148 = vpack.c.b16 %v872, %v868
      %v1149 = vpack.c.b16 %v873, %v869
      %v1150 = vpack.c.b16 %v878, %v874
      %v1151 = vpack.c.b16 %v879, %v875
      %v1152 = vpack.c.b16 %v880, %v876
      %v1153 = vpack.c.b16 %v881, %v877
      %v1154 = vpack.c.b16 %v886, %v882
      %v1155 = vpack.c.b16 %v887, %v883
      %v1156 = vpack.c.b16 %v888, %v884
      %v1157 = vpack.c.b16 %v889, %v885
      %v1158 = vpack.c.b16 %v894, %v890
      %v1159 = vpack.c.b16 %v895, %v891
      %v1160 = vpack.c.b16 %v896, %v892
      %v1161 = vpack.c.b16 %v897, %v893
      %v1162 = vpack.c.b16 %v902, %v898
      %v1163 = vpack.c.b16 %v903, %v899
      %v1164 = vpack.c.b16 %v904, %v900
      %v1165 = vpack.c.b16 %v905, %v901
      %v1166 = vpack.c.b16 %v910, %v906
      %v1167 = vpack.c.b16 %v911, %v907
      %v1168 = vpack.c.b16 %v912, %v908
      %v1169 = vpack.c.b16 %v913, %v909
      %v1170 = vpack.c.b16 %v918, %v914
      %v1171 = vpack.c.b16 %v919, %v915
      %v1172 = vpack.c.b16 %v920, %v916
      %v1173 = vpack.c.b16 %v921, %v917
      %v1174 = vpack.c.b16 %v926, %v922
      %v1175 = vpack.c.b16 %v927, %v923
      %v1176 = vpack.c.b16 %v928, %v924
      %v1177 = vpack.c.b16 %v929, %v925
      %v1178 = vpack.c.b16 %v934, %v930
      %v1179 = vpack.c.b16 %v935, %v931
      %v1180 = vpack.c.b16 %v936, %v932
      %v1181 = vpack.c.b16 %v937, %v933
      %v1182 = vpack.c.b16 %v942, %v938
      %v1183 = vpack.c.b16 %v943, %v939
      %v1184 = vpack.c.b16 %v944, %v940
      %v1185 = vpack.c.b16 %v945, %v941
      %v1186 = vpack.c.b16 %v950, %v946
      %v1187 = vpack.c.b16 %v951, %v947
      %v1188 = vpack.c.b16 %v952, %v948
      %v1189 = vpack.c.b16 %v953, %v949
      %v1190 = vpack.c.b16 %v958, %v954
      %v1191 = vpack.c.b16 %v959, %v955
      %v1192 = vpack.c.b16 %v960, %v956
      %v1193 = vpack.c.b16 %v961, %v957
      %v1194 = vpack.c.b16 %v966, %v962
      %v1195 = vpack.c.b16 %v967, %v963
      %v1196 = vpack.c.b16 %v968, %v964
      %v1197 = vpack.c.b16 %v969, %v965
      %v1198 = vpack.c.b16 %v974, %v970
      %v1199 = vpack.c.b16 %v975, %v971
      %v1200 = vpack.c.b16 %v976, %v972
      %v1201 = vpack.c.b16 %v977, %v973
      %v1202 = vpack.c.b16 %v982, %v978
      %v1203 = vpack.c.b16 %v983, %v979
      %v1204 = vpack.c.b16 %v984, %v980
      %v1205 = vpack.c.b16 %v985, %v981
      %v1206 = vpack.c.b16 %v990, %v986
      %v1207 = vpack.c.b16 %v991, %v987
      %v1208 = vpack.c.b16 %v992, %v988
      %v1209 = vpack.c.b16 %v993, %v989
      %v1210 = vpack.c.b16 %v998, %v994
      %v1211 = vpack.c.b16 %v999, %v995
      %v1212 = vpack.c.b16 %v1000, %v996
      %v1213 = vpack.c.b16 %v1001, %v997
      %v1214 = vpack.c.b16 %v1006, %v1002
      %v1215 = vpack.c.b16 %v1007, %v1003
      %v1216 = vpack.c.b16 %v1008, %v1004
      %v1217 = vpack.c.b16 %v1009, %v1005
      %v1218 = vpack.c.b16 %v1014, %v1010
      %v1219 = vpack.c.b16 %v1015, %v1011
      %v1220 = vpack.c.b16 %v1016, %v1012
      %v1221 = vpack.c.b16 %v1017, %v1013
      %v1222 = vpack.c.b16 %v1022, %v1018
      %v1223 = vpack.c.b16 %v1023, %v1019
      %v1224 = vpack.c.b16 %v1024, %v1020
      %v1225 = vpack.c.b16 %v1025, %v1021
      %v1226 = vpack.c.b16 %v1030, %v1026
      %v1227 = vpack.c.b16 %v1031, %v1027
      %v1228 = vpack.c.b16 %v1032, %v1028
      %v1229 = vpack.c.b16 %v1033, %v1029
      %v1230 = vpack.c.b16 %v1038, %v1034
      %v1231 = vpack.c.b16 %v1039, %v1035
      %v1232 = vpack.c.b16 %v1040, %v1036
      %v1233 = vpack.c.b16 %v1041, %v1037
      %1426 = vmatprep.subr.bf16.mxu0 %v1043
      %1427 = vmatpush1.bf16.msra.mxu0 %v1042
      %1428 = vmatprep.subr.bf16.mxu0 %v1047
      %1429 = vmatpush1.bf16.msra.mxu0 %v1046
      %1430 = vmatprep.subr.bf16.mxu0 %v1051
      %1431 = vmatpush1.bf16.msra.mxu0 %v1050
      %1432 = vmatprep.subr.bf16.mxu0 %v1055
      %1433 = vmatpush1.bf16.msra.mxu0 %v1054
      %1434 = vmatprep.subr.bf16.mxu0 %v1059
      %1435 = vmatpush1.bf16.msra.mxu0 %v1058
      %1436 = vmatprep.subr.bf16.mxu0 %v1063
      %1437 = vmatpush1.bf16.msra.mxu0 %v1062
      %1438 = vmatprep.subr.bf16.mxu0 %v1067
      %1439 = vmatpush1.bf16.msra.mxu0 %v1066
      %1440 = vmatprep.subr.bf16.mxu0 %v1071
      %1441 = vmatpush1.bf16.msra.mxu0 %v1070
      %1442 = vmatprep.subr.bf16.mxu0 %v1075
      %1443 = vmatpush1.bf16.msra.mxu0 %v1074
      %1444 = vmatprep.subr.bf16.mxu0 %v1079
      %1445 = vmatpush1.bf16.msra.mxu0 %v1078
      %1446 = vmatprep.subr.bf16.mxu0 %v1083
      %1447 = vmatpush1.bf16.msra.mxu0 %v1082
      %1448 = vmatprep.subr.bf16.mxu0 %v1087
      %1449 = vmatpush1.bf16.msra.mxu0 %v1086
      %1450 = vmatprep.subr.bf16.mxu0 %v1091
      %1451 = vmatpush1.bf16.msra.mxu0 %v1090
      %1452 = vmatprep.subr.bf16.mxu0 %v1095
      %1453 = vmatpush1.bf16.msra.mxu0 %v1094
      %1454 = vmatprep.subr.bf16.mxu0 %v1099
      %1455 = vmatpush1.bf16.msra.mxu0 %v1098
      %1456 = vmatprep.subr.bf16.mxu0 %v1103
      %1457 = vmatpush1.bf16.msra.mxu0 %v1102
      %1458 = vmatprep.mubr.bf16.mxu0 %v455
      %1459 = vmatmul.mubr.bf16.gmra.mrb[0].mxu0 %v454
      %v1460 = vpop.f32.mrb[0].mxu0
      %v1461 = vadd.f32 0.0, %v1460
      %v1462 = vpop.f32.mrb[0].mxu0
      %v1463 = vadd.f32 0.0, %v1462
      %v1464 = vpop.f32.mrb[0].mxu0
      %v1465 = vpop.f32.mrb[0].mxu0
      %1466 = vdwg.mxu0
      %1467 = vmatprep.subr.bf16.mxu0 %v1107
      %1468 = vmatpush1.bf16.msra.mxu0 %v1106
      %1469 = vmatprep.subr.bf16.mxu0 %v1111
      %1470 = vmatpush1.bf16.msra.mxu0 %v1110
      %1471 = vmatprep.subr.bf16.mxu0 %v1115
      %1472 = vmatpush1.bf16.msra.mxu0 %v1114
      %1473 = vmatprep.subr.bf16.mxu0 %v1119
      %1474 = vmatpush1.bf16.msra.mxu0 %v1118
      %1475 = vmatprep.subr.bf16.mxu0 %v1123
      %1476 = vmatpush1.bf16.msra.mxu0 %v1122
      %1477 = vmatprep.subr.bf16.mxu0 %v1127
      %1478 = vmatpush1.bf16.msra.mxu0 %v1126
      %1479 = vmatprep.subr.bf16.mxu0 %v1131
      %1480 = vmatpush1.bf16.msra.mxu0 %v1130
      %1481 = vmatprep.subr.bf16.mxu0 %v1135
      %1482 = vmatpush1.bf16.msra.mxu0 %v1134
      %1483 = vmatprep.subr.bf16.mxu0 %v1139
      %1484 = vmatpush1.bf16.msra.mxu0 %v1138
      %1485 = vmatprep.subr.bf16.mxu0 %v1143
      %1486 = vmatpush1.bf16.msra.mxu0 %v1142
      %1487 = vmatprep.subr.bf16.mxu0 %v1147
      %1488 = vmatpush1.bf16.msra.mxu0 %v1146
      %1489 = vmatprep.subr.bf16.mxu0 %v1151
      %1490 = vmatpush1.bf16.msra.mxu0 %v1150
      %1491 = vmatprep.subr.bf16.mxu0 %v1155
      %1492 = vmatpush1.bf16.msra.mxu0 %v1154
      %1493 = vmatprep.subr.bf16.mxu0 %v1159
      %1494 = vmatpush1.bf16.msra.mxu0 %v1158
      %1495 = vmatprep.subr.bf16.mxu0 %v1163
      %1496 = vmatpush1.bf16.msra.mxu0 %v1162
      %1497 = vmatprep.subr.bf16.mxu0 %v1167
      %1498 = vmatpush1.bf16.msra.mxu0 %v1166
      %1499 = vmatprep.mubr.bf16.mxu0 %v457
      %1500 = vmatmul.mubr.bf16.gmra.mrb[0].mxu0 %v456
      %v1501 = vpop.f32.mrb[0].mxu0
      %v1502 = vadd.f32 %v1461, %v1501
      %v1503 = vpop.f32.mrb[0].mxu0
      %v1504 = vadd.f32 %v1463, %v1503
      %v1505 = vpop.f32.mrb[0].mxu0
      %v1506 = vpop.f32.mrb[0].mxu0
      %1507 = vdwg.mxu0
      %1508 = vmatprep.subr.bf16.mxu0 %v1171
      %1509 = vmatpush1.bf16.msra.mxu0 %v1170
      %1510 = vmatprep.subr.bf16.mxu0 %v1175
      %1511 = vmatpush1.bf16.msra.mxu0 %v1174
      %1512 = vmatprep.subr.bf16.mxu0 %v1179
      %1513 = vmatpush1.bf16.msra.mxu0 %v1178
      %1514 = vmatprep.subr.bf16.mxu0 %v1183
      %1515 = vmatpush1.bf16.msra.mxu0 %v1182
      %1516 = vmatprep.subr.bf16.mxu0 %v1187
      %1517 = vmatpush1.bf16.msra.mxu0 %v1186
      %1518 = vmatprep.subr.bf16.mxu0 %v1191
      %1519 = vmatpush1.bf16.msra.mxu0 %v1190
      %1520 = vmatprep.subr.bf16.mxu0 %v1195
      %1521 = vmatpush1.bf16.msra.mxu0 %v1194
      %1522 = vmatprep.subr.bf16.mxu0 %v1199
      %1523 = vmatpush1.bf16.msra.mxu0 %v1198
      %1524 = vmatprep.subr.bf16.mxu0 %v1203
      %1525 = vmatpush1.bf16.msra.mxu0 %v1202
      %1526 = vmatprep.subr.bf16.mxu0 %v1207
      %1527 = vmatpush1.bf16.msra.mxu0 %v1206
      %1528 = vmatprep.subr.bf16.mxu0 %v1211
      %1529 = vmatpush1.bf16.msra.mxu0 %v1210
      %1530 = vmatprep.subr.bf16.mxu0 %v1215
      %1531 = vmatpush1.bf16.msra.mxu0 %v1214
      %1532 = vmatprep.subr.bf16.mxu0 %v1219
      %1533 = vmatpush1.bf16.msra.mxu0 %v1218
      %1534 = vmatprep.subr.bf16.mxu0 %v1223
      %1535 = vmatpush1.bf16.msra.mxu0 %v1222
      %1536 = vmatprep.subr.bf16.mxu0 %v1227
      %1537 = vmatpush1.bf16.msra.mxu0 %v1226
      %1538 = vmatprep.subr.bf16.mxu0 %v1231
      %1539 = vmatpush1.bf16.msra.mxu0 %v1230
      %1540 = vmatprep.mubr.bf16.mxu0 %v459
      %1541 = vmatmul.mubr.bf16.gmra.mrb[0].mxu0 %v458
      %v1542 = vpop.f32.mrb[0].mxu0
      %v1543 = vadd.f32 %v1502, %v1542
      %v1544 = vpop.f32.mrb[0].mxu0
      %v1545 = vadd.f32 %v1504, %v1544
      %v1546 = vpop.f32.mrb[0].mxu0
      %v1547 = vpop.f32.mrb[0].mxu0
      %1548 = vdwg.mxu0
      %1549 = vmatprep.subr.bf16.mxu0 %v1045
      %1550 = vmatpush1.bf16.msra.mxu0 %v1044
      %1551 = vmatprep.subr.bf16.mxu0 %v1049
      %1552 = vmatpush1.bf16.msra.mxu0 %v1048
      %1553 = vmatprep.subr.bf16.mxu0 %v1053
      %1554 = vmatpush1.bf16.msra.mxu0 %v1052
      %1555 = vmatprep.subr.bf16.mxu0 %v1057
      %1556 = vmatpush1.bf16.msra.mxu0 %v1056
      %1557 = vmatprep.subr.bf16.mxu0 %v1061
      %1558 = vmatpush1.bf16.msra.mxu0 %v1060
      %1559 = vmatprep.subr.bf16.mxu0 %v1065
      %1560 = vmatpush1.bf16.msra.mxu0 %v1064
      %1561 = vmatprep.subr.bf16.mxu0 %v1069
      %1562 = vmatpush1.bf16.msra.mxu0 %v1068
      %1563 = vmatprep.subr.bf16.mxu0 %v1073
      %1564 = vmatpush1.bf16.msra.mxu0 %v1072
      %1565 = vmatprep.subr.bf16.mxu0 %v1077
      %1566 = vmatpush1.bf16.msra.mxu0 %v1076
      %1567 = vmatprep.subr.bf16.mxu0 %v1081
      %1568 = vmatpush1.bf16.msra.mxu0 %v1080
      %1569 = vmatprep.subr.bf16.mxu0 %v1085
      %1570 = vmatpush1.bf16.msra.mxu0 %v1084
      %1571 = vmatprep.subr.bf16.mxu0 %v1089
      %1572 = vmatpush1.bf16.msra.mxu0 %v1088
      %1573 = vmatprep.subr.bf16.mxu0 %v1093
      %1574 = vmatpush1.bf16.msra.mxu0 %v1092
      %1575 = vmatprep.subr.bf16.mxu0 %v1097
      %1576 = vmatpush1.bf16.msra.mxu0 %v1096
      %1577 = vmatprep.subr.bf16.mxu0 %v1101
      %1578 = vmatpush1.bf16.msra.mxu0 %v1100
      %1579 = vmatprep.subr.bf16.mxu0 %v1105
      %1580 = vmatpush1.bf16.msra.mxu0 %v1104
      %1581 = vmatprep.mubr.bf16.mxu0 %v455
      %1582 = vmatmul.mubr.bf16.gmra.mrb[0].mxu0 %v454
      %v1583 = vpop.f32.mrb[0].mxu0
      %v1584 = vadd.f32 0.0, %v1583
      %v1585 = vpop.f32.mrb[0].mxu0
      %v1586 = vadd.f32 0.0, %v1585
      %v1587 = vpop.f32.mrb[0].mxu0
      %v1588 = vpop.f32.mrb[0].mxu0
      %1589 = vdwg.mxu0
      %1590 = vmatprep.subr.bf16.mxu0 %v1109
      %1591 = vmatpush1.bf16.msra.mxu0 %v1108
      %1592 = vmatprep.subr.bf16.mxu0 %v1113
      %1593 = vmatpush1.bf16.msra.mxu0 %v1112
      %1594 = vmatprep.subr.bf16.mxu0 %v1117
      %1595 = vmatpush1.bf16.msra.mxu0 %v1116
      %1596 = vmatprep.subr.bf16.mxu0 %v1121
      %1597 = vmatpush1.bf16.msra.mxu0 %v1120
      %1598 = vmatprep.subr.bf16.mxu0 %v1125
      %1599 = vmatpush1.bf16.msra.mxu0 %v1124
      %1600 = vmatprep.subr.bf16.mxu0 %v1129
      %1601 = vmatpush1.bf16.msra.mxu0 %v1128
      %1602 = vmatprep.subr.bf16.mxu0 %v1133
      %1603 = vmatpush1.bf16.msra.mxu0 %v1132
      %1604 = vmatprep.subr.bf16.mxu0 %v1137
      %1605 = vmatpush1.bf16.msra.mxu0 %v1136
      %1606 = vmatprep.subr.bf16.mxu0 %v1141
      %1607 = vmatpush1.bf16.msra.mxu0 %v1140
      %1608 = vmatprep.subr.bf16.mxu0 %v1145
      %1609 = vmatpush1.bf16.msra.mxu0 %v1144
      %1610 = vmatprep.subr.bf16.mxu0 %v1149
      %1611 = vmatpush1.bf16.msra.mxu0 %v1148
      %1612 = vmatprep.subr.bf16.mxu0 %v1153
      %1613 = vmatpush1.bf16.msra.mxu0 %v1152
      %1614 = vmatprep.subr.bf16.mxu0 %v1157
      %1615 = vmatpush1.bf16.msra.mxu0 %v1156
      %1616 = vmatprep.subr.bf16.mxu0 %v1161
      %1617 = vmatpush1.bf16.msra.mxu0 %v1160
      %1618 = vmatprep.subr.bf16.mxu0 %v1165
      %1619 = vmatpush1.bf16.msra.mxu0 %v1164
      %1620 = vmatprep.subr.bf16.mxu0 %v1169
      %1621 = vmatpush1.bf16.msra.mxu0 %v1168
      %1622 = vmatprep.mubr.bf16.mxu0 %v457
      %1623 = vmatmul.mubr.bf16.gmra.mrb[0].mxu0 %v456
      %v1624 = vpop.f32.mrb[0].mxu0
      %v1625 = vadd.f32 %v1584, %v1624
      %v1626 = vpop.f32.mrb[0].mxu0
      %v1627 = vadd.f32 %v1586, %v1626
      %v1628 = vpop.f32.mrb[0].mxu0
      %v1629 = vpop.f32.mrb[0].mxu0
      %1630 = vdwg.mxu0
      %1631 = vmatprep.subr.bf16.mxu0 %v1173
      %1632 = vmatpush1.bf16.msra.mxu0 %v1172
      %1633 = vmatprep.subr.bf16.mxu0 %v1177
      %1634 = vmatpush1.bf16.msra.mxu0 %v1176
      %1635 = vmatprep.subr.bf16.mxu0 %v1181
      %1636 = vmatpush1.bf16.msra.mxu0 %v1180
      %1637 = vmatprep.subr.bf16.mxu0 %v1185
      %1638 = vmatpush1.bf16.msra.mxu0 %v1184
      %1639 = vmatprep.subr.bf16.mxu0 %v1189
      %1640 = vmatpush1.bf16.msra.mxu0 %v1188
      %1641 = vmatprep.subr.bf16.mxu0 %v1193
      %1642 = vmatpush1.bf16.msra.mxu0 %v1192
      %1643 = vmatprep.subr.bf16.mxu0 %v1197
      %1644 = vmatpush1.bf16.msra.mxu0 %v1196
      %1645 = vmatprep.subr.bf16.mxu0 %v1201
      %1646 = vmatpush1.bf16.msra.mxu0 %v1200
      %1647 = vmatprep.subr.bf16.mxu0 %v1205
      %1648 = vmatpush1.bf16.msra.mxu0 %v1204
      %1649 = vmatprep.subr.bf16.mxu0 %v1209
      %1650 = vmatpush1.bf16.msra.mxu0 %v1208
      %1651 = vmatprep.subr.bf16.mxu0 %v1213
      %1652 = vmatpush1.bf16.msra.mxu0 %v1212
      %1653 = vmatprep.subr.bf16.mxu0 %v1217
      %1654 = vmatpush1.bf16.msra.mxu0 %v1216
      %1655 = vmatprep.subr.bf16.mxu0 %v1221
      %1656 = vmatpush1.bf16.msra.mxu0 %v1220
      %1657 = vmatprep.subr.bf16.mxu0 %v1225
      %1658 = vmatpush1.bf16.msra.mxu0 %v1224
      %1659 = vmatprep.subr.bf16.mxu0 %v1229
      %1660 = vmatpush1.bf16.msra.mxu0 %v1228
      %1661 = vmatprep.subr.bf16.mxu0 %v1233
      %1662 = vmatpush1.bf16.msra.mxu0 %v1232
      %1663 = vmatprep.mubr.bf16.mxu0 %v459
      %1664 = vmatmul.mubr.bf16.gmra.mrb[0].mxu0 %v458
      %v1665 = vpop.f32.mrb[0].mxu0
      %v1666 = vadd.f32 %v1625, %v1665
      %v1667 = vpop.f32.mrb[0].mxu0
      %v1668 = vadd.f32 %v1627, %v1667
      %v1669 = vpop.f32.mrb[0].mxu0
      %v1670 = vpop.f32.mrb[0].mxu0
      %1671 = vdwg.mxu0
      %v1672 = vadd.f32 %v246, %v1543
      %v1673 = vadd.f32 %v247, %v1545
      %v1674 = vadd.f32 %v248, %v1666
      %v1675 = vadd.f32 %v249, %v1668
      %1676 = vst [vmem:[#allocation2] sm:$0xff] %v1672
      %1677 = vst [vmem:[#allocation2 + $0x8] sm:$0xff] %v1673
      %1678 = vst [vmem:[#allocation2 + $0x10] sm:$0xff] %v1674
      %1679 = vst [vmem:[#allocation2 + $0x18] sm:$0xff] %v1675
      %p1680 = scmp.eq.s32.totalorder %s16, 2
      // Predicated region
      $region45: #{_lambda_.7} parent=39 // pred_check
        %p1681 = pneg %p1680
      $region46: #{_lambda_.7} parent=39 // pred_check_branch
        %1683 = sbr.rel (%p1681) target = $region48
      $region47: #{_lambda_.7} parent=39 // pred_region
        %v1684 = vld [vmem:[#allocation2] sm:$0xff]
        %v1685 = vld [vmem:[#allocation2 + $0x8] sm:$0xff]
        %v1686 = vld [vmem:[#allocation2 + $0x10] sm:$0xff]
        %v1687 = vld [vmem:[#allocation2 + $0x18] sm:$0xff]
        %v1688 = vld [vmem:[%s2] sm:$0xf]
        %v1690 = vlaneseq
        %v1691 = vshrl.u32 %v1690, 7
        %v1692 = vsub.s32 0, %v1691
        %v1693 = vrot.slane %v1688, %v1692
        %v1694 = vlaneseq
        %v1695 = vshrl.u32 %v1694, 7
        %v1696 = vsub.s32 1, %v1695
        %v1697 = vrot.slane %v1688, %v1696
        %v1698 = vlaneseq
        %v1699 = vshrl.u32 %v1698, 7
        %v1700 = vsub.s32 2, %v1699
        %v1701 = vrot.slane %v1688, %v1700
        %v1702 = vlaneseq
        %v1703 = vshrl.u32 %v1702, 7
        %v1704 = vsub.s32 3, %v1703
        %v1705 = vrot.slane %v1688, %v1704
        %v1710 = vadd.f32 %v1684, %v1693
        %v1711 = vadd.f32 %v1685, %v1697
        %v1712 = vadd.f32 %v1686, %v1701
        %v1713 = vadd.f32 %v1687, %v1705
        %v1714 = vmax.f32 %v1710, 0.0
        %v1715 = vmax.f32 %v1711, 0.0
        %v1716 = vmax.f32 %v1712, 0.0
        %v1717 = vmax.f32 %v1713, 0.0
        %v1718 = vpack.c.bf16 %v1714, %v1714
        %v1719 = vpack.c.bf16 %v1715, %v1715
        %v1720 = vpack.c.bf16 %v1716, %v1716
        %v1721 = vpack.c.bf16 %v1717, %v1717
        %v1722 = vld [vmem:[%s3] sm:$0xf]
        %v1723 = vld [vmem:[%s3 + $0x4] sm:$0xf]
        %v1724 = vld [vmem:[%s3 + $0x8] sm:$0xf]
        %v1725 = vld [vmem:[%s3 + $0xc] sm:$0xf]
        %v1726 = vld [vmem:[%s3 + $0x10] sm:$0xf]
        %v1727 = vld [vmem:[%s3 + $0x14] sm:$0xf]
        %v1728 = vld [vmem:[%s3 + $0x18] sm:$0xf]
        %v1729 = vld [vmem:[%s3 + $0x1c] sm:$0xf]
        %v1730 = vld [vmem:[%s3 + $0x20] sm:$0xf]
        %v1731 = vld [vmem:[%s3 + $0x24] sm:$0xf]
        %v1732 = vld [vmem:[%s3 + $0x28] sm:$0xf]
        %v1733 = vld [vmem:[%s3 + $0x2c] sm:$0xf]
        %v1734 = vld [vmem:[%s3 + $0x30] sm:$0xf]
        %v1735 = vld [vmem:[%s3 + $0x34] sm:$0xf]
        %v1736 = vld [vmem:[%s3 + $0x38] sm:$0xf]
        %v1737 = vld [vmem:[%s3 + $0x3c] sm:$0xf]
        %v1738 = vld [vmem:[%s3 + $0x40] sm:$0xf]
        %v1739 = vld [vmem:[%s3 + $0x44] sm:$0xf]
        %v1740 = vld [vmem:[%s3 + $0x48] sm:$0xf]
        %v1741 = vld [vmem:[%s3 + $0x4c] sm:$0xf]
        %v1742 = vld [vmem:[%s3 + $0x50] sm:$0xf]
        %v1743 = vld [vmem:[%s3 + $0x54] sm:$0xf]
        %v1744 = vld [vmem:[%s3 + $0x58] sm:$0xf]
        %v1745 = vld [vmem:[%s3 + $0x5c] sm:$0xf]
        %v1746 = vld [vmem:[%s3 + $0x60] sm:$0xf]
        %v1747 = vld [vmem:[%s3 + $0x64] sm:$0xf]
        %v1748 = vld [vmem:[%s3 + $0x68] sm:$0xf]
        %v1749 = vld [vmem:[%s3 + $0x6c] sm:$0xf]
        %v1750 = vld [vmem:[%s3 + $0x70] sm:$0xf]
        %v1751 = vld [vmem:[%s3 + $0x74] sm:$0xf]
        %v1752 = vld [vmem:[%s3 + $0x78] sm:$0xf]
        %v1753 = vld [vmem:[%s3 + $0x7c] sm:$0xf]
        %v1754 = vld [vmem:[%s3 + $0x80] sm:$0xf]
        %v1755 = vld [vmem:[%s3 + $0x84] sm:$0xf]
        %v1756 = vld [vmem:[%s3 + $0x88] sm:$0xf]
        %v1757 = vld [vmem:[%s3 + $0x8c] sm:$0xf]
        %v1758 = vld [vmem:[%s3 + $0x90] sm:$0xf]
        %v1759 = vld [vmem:[%s3 + $0x94] sm:$0xf]
        %v1760 = vld [vmem:[%s3 + $0x98] sm:$0xf]
        %v1761 = vld [vmem:[%s3 + $0x9c] sm:$0xf]
        %v1762 = vld [vmem:[%s3 + $0xa0] sm:$0xf]
        %v1763 = vld [vmem:[%s3 + $0xa4] sm:$0xf]
        %v1764 = vld [vmem:[%s3 + $0xa8] sm:$0xf]
        %v1765 = vld [vmem:[%s3 + $0xac] sm:$0xf]
        %v1766 = vld [vmem:[%s3 + $0xb0] sm:$0xf]
        %v1767 = vld [vmem:[%s3 + $0xb4] sm:$0xf]
        %v1768 = vld [vmem:[%s3 + $0xb8] sm:$0xf]
        %v1769 = vld [vmem:[%s3 + $0xbc] sm:$0xf]
        %v1770 = vld [vmem:[%s3 + $0xc0] sm:$0xf]
        %v1771 = vld [vmem:[%s3 + $0xc4] sm:$0xf]
        %v1772 = vld [vmem:[%s3 + $0xc8] sm:$0xf]
        %v1773 = vld [vmem:[%s3 + $0xcc] sm:$0xf]
        %v1774 = vld [vmem:[%s3 + $0xd0] sm:$0xf]
        %v1775 = vld [vmem:[%s3 + $0xd4] sm:$0xf]
        %v1776 = vld [vmem:[%s3 + $0xd8] sm:$0xf]
        %v1777 = vld [vmem:[%s3 + $0xdc] sm:$0xf]
        %v1778 = vld [vmem:[%s3 + $0xe0] sm:$0xf]
        %v1779 = vld [vmem:[%s3 + $0xe4] sm:$0xf]
        %v1780 = vld [vmem:[%s3 + $0xe8] sm:$0xf]
        %v1781 = vld [vmem:[%s3 + $0xec] sm:$0xf]
        %v1782 = vld [vmem:[%s3 + $0xf0] sm:$0xf]
        %v1783 = vld [vmem:[%s3 + $0xf4] sm:$0xf]
        %v1784 = vld [vmem:[%s3 + $0xf8] sm:$0xf]
        %v1785 = vld [vmem:[%s3 + $0xfc] sm:$0xf]
        %v1786 = vld [vmem:[%s4] sm:$0x1]
        %v1788 = vlaneseq
        %v1789 = vshrl.u32 %v1788, 7
        %v1790 = vsub.s32 0, %v1789
        %v1791 = vrot.slane %v1786, %v1790
        %v1857 = vunpack.c.l.b16 %v1722
        %v1858 = vunpack.c.l.b16 %v1723
        %v1859 = vunpack.c.l.b16 %v1724
        %v1860 = vunpack.c.l.b16 %v1725
        %v1861 = vunpack.c.l.b16 %v1726
        %v1862 = vunpack.c.l.b16 %v1727
        %v1863 = vunpack.c.l.b16 %v1728
        %v1864 = vunpack.c.l.b16 %v1729
        %v1865 = vunpack.c.l.b16 %v1730
        %v1866 = vunpack.c.l.b16 %v1731
        %v1867 = vunpack.c.l.b16 %v1732
        %v1868 = vunpack.c.l.b16 %v1733
        %v1869 = vunpack.c.l.b16 %v1734
        %v1870 = vunpack.c.l.b16 %v1735
        %v1871 = vunpack.c.l.b16 %v1736
        %v1872 = vunpack.c.l.b16 %v1737
        %v1873 = vunpack.c.l.b16 %v1738
        %v1874 = vunpack.c.l.b16 %v1739
        %v1875 = vunpack.c.l.b16 %v1740
        %v1876 = vunpack.c.l.b16 %v1741
        %v1877 = vunpack.c.l.b16 %v1742
        %v1878 = vunpack.c.l.b16 %v1743
        %v1879 = vunpack.c.l.b16 %v1744
        %v1880 = vunpack.c.l.b16 %v1745
        %v1881 = vunpack.c.l.b16 %v1746
        %v1882 = vunpack.c.l.b16 %v1747
        %v1883 = vunpack.c.l.b16 %v1748
        %v1884 = vunpack.c.l.b16 %v1749
        %v1885 = vunpack.c.l.b16 %v1750
        %v1886 = vunpack.c.l.b16 %v1751
        %v1887 = vunpack.c.l.b16 %v1752
        %v1888 = vunpack.c.l.b16 %v1753
        %v1889 = vunpack.c.l.b16 %v1754
        %v1890 = vunpack.c.l.b16 %v1755
        %v1891 = vunpack.c.l.b16 %v1756
        %v1892 = vunpack.c.l.b16 %v1757
        %v1893 = vunpack.c.l.b16 %v1758
        %v1894 = vunpack.c.l.b16 %v1759
        %v1895 = vunpack.c.l.b16 %v1760
        %v1896 = vunpack.c.l.b16 %v1761
        %v1897 = vunpack.c.l.b16 %v1762
        %v1898 = vunpack.c.l.b16 %v1763
        %v1899 = vunpack.c.l.b16 %v1764
        %v1900 = vunpack.c.l.b16 %v1765
        %v1901 = vunpack.c.l.b16 %v1766
        %v1902 = vunpack.c.l.b16 %v1767
        %v1903 = vunpack.c.l.b16 %v1768
        %v1904 = vunpack.c.l.b16 %v1769
        %v1905 = vunpack.c.l.b16 %v1770
        %v1906 = vunpack.c.l.b16 %v1771
        %v1907 = vunpack.c.l.b16 %v1772
        %v1908 = vunpack.c.l.b16 %v1773
        %v1909 = vunpack.c.l.b16 %v1774
        %v1910 = vunpack.c.l.b16 %v1775
        %v1911 = vunpack.c.l.b16 %v1776
        %v1912 = vunpack.c.l.b16 %v1777
        %v1913 = vunpack.c.l.b16 %v1778
        %v1914 = vunpack.c.l.b16 %v1779
        %v1915 = vunpack.c.l.b16 %v1780
        %v1916 = vunpack.c.l.b16 %v1781
        %v1917 = vunpack.c.l.b16 %v1782
        %v1918 = vunpack.c.l.b16 %v1783
        %v1919 = vunpack.c.l.b16 %v1784
        %v1920 = vunpack.c.l.b16 %v1785
        %v1921 = vpack.c.b16 %v1858, %v1857
        %v1922 = vpack.c.b16 %v1860, %v1859
        %v1923 = vpack.c.b16 %v1862, %v1861
        %v1924 = vpack.c.b16 %v1864, %v1863
        %v1925 = vpack.c.b16 %v1866, %v1865
        %v1926 = vpack.c.b16 %v1868, %v1867
        %v1927 = vpack.c.b16 %v1870, %v1869
        %v1928 = vpack.c.b16 %v1872, %v1871
        %v1929 = vpack.c.b16 %v1874, %v1873
        %v1930 = vpack.c.b16 %v1876, %v1875
        %v1931 = vpack.c.b16 %v1878, %v1877
        %v1932 = vpack.c.b16 %v1880, %v1879
        %v1933 = vpack.c.b16 %v1882, %v1881
        %v1934 = vpack.c.b16 %v1884, %v1883
        %v1935 = vpack.c.b16 %v1886, %v1885
        %v1936 = vpack.c.b16 %v1888, %v1887
        %v1937 = vpack.c.b16 %v1890, %v1889
        %v1938 = vpack.c.b16 %v1892, %v1891
        %v1939 = vpack.c.b16 %v1894, %v1893
        %v1940 = vpack.c.b16 %v1896, %v1895
        %v1941 = vpack.c.b16 %v1898, %v1897
        %v1942 = vpack.c.b16 %v1900, %v1899
        %v1943 = vpack.c.b16 %v1902, %v1901
        %v1944 = vpack.c.b16 %v1904, %v1903
        %v1945 = vpack.c.b16 %v1906, %v1905
        %v1946 = vpack.c.b16 %v1908, %v1907
        %v1947 = vpack.c.b16 %v1910, %v1909
        %v1948 = vpack.c.b16 %v1912, %v1911
        %v1949 = vpack.c.b16 %v1914, %v1913
        %v1950 = vpack.c.b16 %v1916, %v1915
        %v1951 = vpack.c.b16 %v1918, %v1917
        %v1952 = vpack.c.b16 %v1920, %v1919
        %1985 = vmatprep.subr.bf16.mxu0 0
        %1986 = vmatpush1.bf16.msra.mxu0 %v1921
        %1987 = vmatprep.subr.bf16.mxu0 0
        %1988 = vmatpush1.bf16.msra.mxu0 %v1922
        %1989 = vmatprep.subr.bf16.mxu0 0
        %1990 = vmatpush1.bf16.msra.mxu0 %v1923
        %1991 = vmatprep.subr.bf16.mxu0 0
        %1992 = vmatpush1.bf16.msra.mxu0 %v1924
        %1993 = vmatprep.subr.bf16.mxu0 0
        %1994 = vmatpush1.bf16.msra.mxu0 %v1925
        %1995 = vmatprep.subr.bf16.mxu0 0
        %1996 = vmatpush1.bf16.msra.mxu0 %v1926
        %1997 = vmatprep.subr.bf16.mxu0 0
        %1998 = vmatpush1.bf16.msra.mxu0 %v1927
        %1999 = vmatprep.subr.bf16.mxu0 0
        %2000 = vmatpush1.bf16.msra.mxu0 %v1928
        %2001 = vmatprep.subr.bf16.mxu0 0
        %2002 = vmatpush1.bf16.msra.mxu0 %v1929
        %2003 = vmatprep.subr.bf16.mxu0 0
        %2004 = vmatpush1.bf16.msra.mxu0 %v1930
        %2005 = vmatprep.subr.bf16.mxu0 0
        %2006 = vmatpush1.bf16.msra.mxu0 %v1931
        %2007 = vmatprep.subr.bf16.mxu0 0
        %2008 = vmatpush1.bf16.msra.mxu0 %v1932
        %2009 = vmatprep.subr.bf16.mxu0 0
        %2010 = vmatpush1.bf16.msra.mxu0 %v1933
        %2011 = vmatprep.subr.bf16.mxu0 0
        %2012 = vmatpush1.bf16.msra.mxu0 %v1934
        %2013 = vmatprep.subr.bf16.mxu0 0
        %2014 = vmatpush1.bf16.msra.mxu0 %v1935
        %2015 = vmatprep.subr.bf16.mxu0 0
        %2016 = vmatpush1.bf16.msra.mxu0 %v1936
        %2017 = vmatprep.mubr.bf16.mxu0 %v1719
        %2018 = vmatmul.mubr.bf16.gmra.mrb[0].mxu0 %v1718
        %v2019 = vpop.f32.mrb[0].mxu0
        %v2020 = vadd.f32 %v1791, %v2019
        %v2021 = vpop.f32.mrb[0].mxu0
        %v2022 = vpop.f32.mrb[0].mxu0
        %v2023 = vpop.f32.mrb[0].mxu0
        %2024 = vdwg.mxu0
        %2025 = vmatprep.subr.bf16.mxu0 0
        %2026 = vmatpush1.bf16.msra.mxu0 %v1937
        %2027 = vmatprep.subr.bf16.mxu0 0
        %2028 = vmatpush1.bf16.msra.mxu0 %v1938
        %2029 = vmatprep.subr.bf16.mxu0 0
        %2030 = vmatpush1.bf16.msra.mxu0 %v1939
        %2031 = vmatprep.subr.bf16.mxu0 0
        %2032 = vmatpush1.bf16.msra.mxu0 %v1940
        %2033 = vmatprep.subr.bf16.mxu0 0
        %2034 = vmatpush1.bf16.msra.mxu0 %v1941
        %2035 = vmatprep.subr.bf16.mxu0 0
        %2036 = vmatpush1.bf16.msra.mxu0 %v1942
        %2037 = vmatprep.subr.bf16.mxu0 0
        %2038 = vmatpush1.bf16.msra.mxu0 %v1943
        %2039 = vmatprep.subr.bf16.mxu0 0
        %2040 = vmatpush1.bf16.msra.mxu0 %v1944
        %2041 = vmatprep.subr.bf16.mxu0 0
        %2042 = vmatpush1.bf16.msra.mxu0 %v1945
        %2043 = vmatprep.subr.bf16.mxu0 0
        %2044 = vmatpush1.bf16.msra.mxu0 %v1946
        %2045 = vmatprep.subr.bf16.mxu0 0
        %2046 = vmatpush1.bf16.msra.mxu0 %v1947
        %2047 = vmatprep.subr.bf16.mxu0 0
        %2048 = vmatpush1.bf16.msra.mxu0 %v1948
        %2049 = vmatprep.subr.bf16.mxu0 0
        %2050 = vmatpush1.bf16.msra.mxu0 %v1949
        %2051 = vmatprep.subr.bf16.mxu0 0
        %2052 = vmatpush1.bf16.msra.mxu0 %v1950
        %2053 = vmatprep.subr.bf16.mxu0 0
        %2054 = vmatpush1.bf16.msra.mxu0 %v1951
        %2055 = vmatprep.subr.bf16.mxu0 0
        %2056 = vmatpush1.bf16.msra.mxu0 %v1952
        %2057 = vmatprep.mubr.bf16.mxu0 %v1721
        %2058 = vmatmul.mubr.bf16.gmra.mrb[0].mxu0 %v1720
        %v2059 = vpop.f32.mrb[0].mxu0
        %v2060 = vadd.f32 %v2020, %v2059
        %v2061 = vpop.f32.mrb[0].mxu0
        %v2062 = vpop.f32.mrb[0].mxu0
        %v2063 = vpop.f32.mrb[0].mxu0
        %2064 = vdwg.mxu0
        %2065 = vst [vmem:[%s5] sm:$0xff] %v2060
      $region48: #{_lambda_.7} parent=39 // pred_fallthru
        _
      // Predicated region
      $region49: #{_lambda_.7} parent=39 // pred_check
        %p2066 = pneg %p144
      $region50: #{_lambda_.7} parent=39 // pred_check_branch
        %2068 = sbr.rel (%p2066) target = $region52
      $region51: #{_lambda_.7} parent=39 // pred_region
        _
      $region52: #{_lambda_.7} parent=39 // pred_fallthru
        _
      // Predicated region
      $region53: #{_lambda_.7} parent=39 // pred_check
        %p2069 = pneg %p144
      $region54: #{_lambda_.7} parent=39 // pred_check_branch
        %2071 = sbr.rel (%p2069) target = $region56
      $region55: #{_lambda_.7} parent=39 // pred_region
        _
      $region56: #{_lambda_.7} parent=39 // pred_fallthru
        _
    $region40: #{_lambda_.7} parent=5 // pred_fallthru
      _
    %p2072 = scmp.le.s32.totalorder 2, %s11
    // Predicated region
    $region57: #{_lambda_.7} parent=5 // pred_check
      %p2073 = pneg %p2072
    $region58: #{_lambda_.7} parent=5 // pred_check_branch
      %2075 = sbr.rel (%p2073) target = $region60
    $region59: #{_lambda_.7} parent=5 // pred_region
      %s2076 = ssub.s32 %s11, 2
    $region60: #{_lambda_.7} parent=5 // pred_fallthru
      _
  $region6: #{_lambda_.7} parent=0 // loop_footer
    %s15 = sadd.s32 1, %s11
  $region7: #{_lambda_.7} parent=0 // loop_footer_branch
    %10 = sbr.rel target = $region3
  $region8: #{_lambda_.7} parent=0 // loop_exit
    _

</llo_original>
